<compile_context>
chip_gen: v5e
topology: v5e:2x2
jax: 0.10.0
libtpu: 0.0.40
codegen_flags: <defaults>
</compile_context>

<pallas_src>
from functools import reduce

import jax
import jax.numpy as jnp
from jax.experimental import pallas as pl
from jax.experimental.pallas import tpu as pltpu


_LANE = 128        # output padded to a multiple of the TPU lane width
_SUBLANE_U8 = 32   # uint8 sublane packing (rows/vreg); also covers bf16/f32
_TM_MAX = 512      # max rows per tile

_SINGLE_BUF_WEIGHTS = None   # cached: does this runtime accept pl.Buffered(1)?


def _round_up(x, m):
    return ((x + m - 1) // m) * m


# ----------------------------------------------------------------------------
# Pallas kernel: fused two-layer MLP head  q = relu(x @ W1 + b1) @ W2 + b2
# ----------------------------------------------------------------------------
def _mlp_head_kernel(x_ref, w1_ref, b1_ref, w2_ref, b2_ref, o_ref):
    # x_ref : [TM, K]  uint8 (or bf16)  -- streamed activation tile
    # w1_ref: [K,  H]  bf16             -- VMEM-resident across the grid
    # b1_ref: [1,  H]  f32
    # w2_ref: [H,  Np] bf16             -- VMEM-resident, N padded to 128 lanes
    # b2_ref: [1,  Np] f32
    # o_ref : [TM, Np] f32
    # uint8 [0,255] -> f32 -> bf16 is exact; casting in-kernel keeps the x
    # HBM stream at 1 B/elem and removes a separate XLA cast dispatch.
    x = x_ref[...].astype(jnp.float32).astype(jnp.bfloat16)
    h = jnp.dot(x, w1_ref[...], preferred_element_type=jnp.float32)
    h = jnp.maximum(h + b1_ref[...], 0.0)                       # bias + ReLU (f32)
    q = jnp.dot(h.astype(jnp.bfloat16), w2_ref[...],
                preferred_element_type=jnp.float32)
    o_ref[...] = q + b2_ref[...]


def mlp_head_pallas(x, w1, b1, w2, b2, n_out):
    """x: [M, K] uint8 (or bf16) -> q: [M, n_out] f32, one fused Pallas kernel."""
    global _SINGLE_BUF_WEIGHTS
    M, K = x.shape
    Kw, Hd = w1.shape
    Hw, Np = w2.shape
    assert K == Kw and Hd == Hw and M >= 1
    assert b1.shape == (1, Hd) and b2.shape == (1, Np)
    assert Np % _LANE == 0 and n_out <= Np

    # Balanced row tiling (multiple of 32 for uint8 sublane packing): e.g.
    # M=260 -> one 288-row tile instead of 256 + a 98%-padding tile.
    n_tiles = max(1, pl.cdiv(M, _TM_MAX))
    tm = _round_up(pl.cdiv(M, n_tiles), _SUBLANE_U8)
    grid = (pl.cdiv(M, tm),)          # ragged final block handled by Pallas
    x_bytes = jnp.dtype(x.dtype).itemsize

    def run(single_buffer_weights):
        def const_spec(shape):
            # Grid-invariant inputs: DMA'd once; request a single VMEM buffer.
            if single_buffer_weights:
                return pl.BlockSpec(shape, lambda i: (0, 0),
                                    pipeline_mode=pl.Buffered(1))
            return pl.BlockSpec(shape, lambda i: (0, 0))

        wbuf = 1 if single_buffer_weights else 2
        est = (2 * tm * K * x_bytes                              # x tiles (x2 bufs)
               + 2 * tm * Np * 4                                 # out tiles (x2 bufs)
               + wbuf * (K * Hd * 2 + Hd * Np * 2 + (Hd + Np) * 4)  # weights/biases
               + tm * Hd * 6)                                    # f32 h + bf16 copy
        try:
            vmem_cap = pltpu.get_tpu_info().vmem_capacity_bytes
        except Exception:
            vmem_cap = 64 << 20                                  # conservative (v7x)
        vmem_limit = int(min(max(2 * est, 32 << 20), (vmem_cap * 3) // 4))

        flops = 2 * M * (K * Hd + Hd * Np)
        bytes_accessed = (M * K * x_bytes + K * Hd * 2 + Hd * Np * 2
                          + (Hd + Np) * 4 + M * Np * 4)

        return pl.pallas_call(
            _mlp_head_kernel,
            out_shape=jax.ShapeDtypeStruct((M, Np), jnp.float32),
            grid=grid,
            in_specs=[
                pl.BlockSpec((tm, K), lambda i: (i, 0)),   # x tiles stream
                const_spec((K, Hd)),                       # w1 resident
                const_spec((1, Hd)),                       # b1 resident
                const_spec((Hd, Np)),                      # w2 resident
                const_spec((1, Np)),                       # b2 resident
            ],
            out_specs=pl.BlockSpec((tm, Np), lambda i: (i, 0)),
            compiler_params=pltpu.CompilerParams(
                # On v7x megacore only pays once the x/out stream outweighs the
                # per-TC-duplicated weight DMA (roughly M >~ 1K rows); neutral
                # below that, so keep it on.
                dimension_semantics=("parallel",),
                vmem_limit_bytes=vmem_limit),
            cost_estimate=pl.CostEstimate(flops=flops, transcendentals=0,
                                          bytes_accessed=bytes_accessed),
        )(x, w1, b1, w2, b2)

    if _SINGLE_BUF_WEIGHTS is None:
        try:
            out = run(True)
            out.block_until_ready()           # surface any lowering rejection here
            _SINGLE_BUF_WEIGHTS = True
        except Exception:
            _SINGLE_BUF_WEIGHTS = False       # runtime rejects Buffered(1): fall back
            out = run(False)
    else:
        out = run(_SINGLE_BUF_WEIGHTS)
    return out[:, :n_out]


# ----------------------------------------------------------------------------
# Model wrapper mimicking MlpDqnModel.forward (non-dueling MlpModel head)
# ----------------------------------------------------------------------------
class MlpDqnModelPallas:
    def __init__(self, output_size, input_size=None, input_shape=None,
                 fc_sizes=512, dueling=False, key=None):
        assert input_shape or input_size
        assert not dueling, "dueling head not implemented in Pallas port"
        if input_shape:
            input_size = reduce(lambda a, b: a * b, tuple(input_shape))
        self.input_size = int(input_size)
        self.fc_sizes = int(fc_sizes)
        self.output_size = int(output_size)
        self.n_pad = _round_up(self.output_size, _LANE)   # lane-dense output

        key = jax.random.PRNGKey(0) if key is None else key
        k1, k2, k3, k4 = jax.random.split(key, 4)
        # PyTorch Linear default init: U(-1/sqrt(fan_in), 1/sqrt(fan_in)).
        lim1 = 1.0 / (self.input_size ** 0.5)
        lim2 = 1.0 / (self.fc_sizes ** 0.5)
        w1 = jax.random.uniform(k1, (self.input_size, self.fc_sizes),
                                jnp.float32, -lim1, lim1)
        b1 = jax.random.uniform(k2, (1, self.fc_sizes), jnp.float32, -lim1, lim1)
        w2 = jax.random.uniform(k3, (self.fc_sizes, self.output_size),
                                jnp.float32, -lim2, lim2)
        b2 = jax.random.uniform(k4, (1, self.output_size),
                                jnp.float32, -lim2, lim2)
        pad_n = self.n_pad - self.output_size
        # bf16 weights halve HBM->VMEM bytes; accumulation is f32 in-kernel.
        self.w1 = w1.astype(jnp.bfloat16)
        self.b1 = b1
        self.w2 = jnp.pad(w2, ((0, 0), (0, pad_n))).astype(jnp.bfloat16)
        self.b2 = jnp.pad(b2, ((0, 0), (0, pad_n)))

    def _head(self, view):
        return mlp_head_pallas(view, self.w1, self.b1, self.w2, self.b2,
                               self.output_size)

    def __call__(self, observation, prev_action=None, prev_reward=None):
        obs = jnp.asarray(observation)
        if obs.dtype != jnp.uint8:
            # Non-uint8 path: original module casts to float; bf16 keeps the
            # HBM stream narrow (exact for image-valued integers in [0,255]).
            obs = obs.astype(jnp.bfloat16)
        # uint8 path feeds the kernel directly; the cast happens in-kernel.

        ndim = obs.ndim
        if ndim < 3:
            if ndim == 2:
                return self._head(obs.reshape(obs.shape[0], -1))
            return self._head(obs.reshape(1, -1)).reshape(-1)

        # infer_leading_dims(obs, 3): trailing 3 dims are the image (C, H, W).
        lead_dim = ndim - 3
        assert lead_dim in (0, 1, 2)
        if lead_dim == 2:
            T, B = obs.shape[0], obs.shape[1]
        elif lead_dim == 1:
            T, B = 1, obs.shape[0]
        else:
            T, B = 1, 1

        q = self._head(obs.reshape(T * B, -1))

        # restore_leading_dims
        if lead_dim == 2:
            return q.reshape(T, B, self.output_size)
        if lead_dim == 1:
            return q.reshape(B, self.output_size)
        return q.reshape(self.output_size)


# ----------------------------------------------------------------------------
# Reference (pure JAX) mirroring the kernel's bf16-weight / f32-accum math
# ----------------------------------------------------------------------------
def _ref_forward(model, observation):
    x = jnp.asarray(observation).astype(jnp.float32)
    x = x.reshape(-1, model.input_size)
    h = jnp.maximum(x @ model.w1.astype(jnp.float32) + model.b1, 0.0)
    h = h.astype(jnp.bfloat16).astype(jnp.float32)   # mirror in-kernel cast
    q = h @ model.w2.astype(jnp.float32) + model.b2
    return q[:, :model.output_size]


if __name__ == "__main__":
    key = jax.random.PRNGKey(0)
    k_obs1, k_obs2 = jax.random.split(key)
    B, C, Himg, W = 2, 4, 16, 16
    output_size, fc_sizes = 8, 512

    model = MlpDqnModelPallas(output_size=output_size,
                              input_shape=(C, Himg, W),
                              fc_sizes=fc_sizes,
                              key=jax.random.PRNGKey(0))

    # uint8 image observations in [0, 255], [B, C, H, W]
    obs = jax.random.randint(k_obs1, (B, C, Himg, W), 0, 256,
                             dtype=jnp.int32).astype(jnp.uint8)
    q = jax.block_until_ready(model(obs))
    q_ref = _ref_forward(model, obs)
    assert q.shape == (B, output_size)
    assert jnp.allclose(q, q_ref, rtol=2e-3, atol=5e-2), "mismatch vs reference"

    # [T, B, C, H, W] path (lead_dim == 2)
    T = 3
    obs_tb = jax.random.randint(k_obs2, (T, B, C, Himg, W), 0, 256,
                                dtype=jnp.int32).astype(jnp.uint8)
    q_tb = jax.block_until_ready(model(obs_tb))
    q_tb_ref = _ref_forward(model, obs_tb).reshape(T, B, output_size)
    assert q_tb.shape == (T, B, output_size)
    assert jnp.allclose(q_tb, q_tb_ref, rtol=2e-3, atol=5e-2), "T,B mismatch"

    print("KERNEL_OK")
</pallas_src>

<mosaic_0001>
module attributes {stable_mosaic.version = 11 : i64} {
  func.func @_mlp_head_kernel(%arg0: i32, %arg1: memref<32x1024xi8, #tpu.memory_space<vmem>>, %arg2: memref<1024x512xbf16, #tpu.memory_space<vmem>>, %arg3: memref<1x512xf32, #tpu.memory_space<vmem>>, %arg4: memref<512x128xbf16, #tpu.memory_space<vmem>>, %arg5: memref<1x128xf32, #tpu.memory_space<vmem>>, %arg6: memref<32x128xf32, #tpu.memory_space<vmem>>) attributes {dimension_semantics = [#tpu.dimension_semantics<parallel>], iteration_bounds = array<i64: 1>, scalar_prefetch = 0 : i64, scratch_operands = 0 : i64, tpu.core_type = #tpu.core_type<tc>, window_params = [{transform_indices = @transform_0, window_bounds = array<i64: 32, 1024>}, {pipeline_mode = #tpu.pipeline_mode<synchronous>, transform_indices = @transform_1, window_bounds = array<i64: 1024, 512>}, {pipeline_mode = #tpu.pipeline_mode<synchronous>, transform_indices = @transform_2, window_bounds = array<i64: 1, 512>}, {pipeline_mode = #tpu.pipeline_mode<synchronous>, transform_indices = @transform_3, window_bounds = array<i64: 512, 128>}, {pipeline_mode = #tpu.pipeline_mode<synchronous>, transform_indices = @transform_4, window_bounds = array<i64: 1, 128>}, {transform_indices = @transform_5, window_bounds = array<i64: 32, 128>}]} {
    %c0 = arith.constant 0 : index
    %c0_0 = arith.constant 0 : index
    %0 = vector.load %arg1[%c0, %c0_0] : memref<32x1024xi8, #tpu.memory_space<vmem>>, vector<32x1024xi8>
    %1 = arith.uitofp %0 : vector<32x1024xi8> to vector<32x1024xf32>
    %2 = arith.truncf %1 : vector<32x1024xf32> to vector<32x1024xbf16>
    %c0_1 = arith.constant 0 : index
    %c0_2 = arith.constant 0 : index
    %3 = vector.load %arg2[%c0_1, %c0_2] : memref<1024x512xbf16, #tpu.memory_space<vmem>>, vector<1024x512xbf16>
    %cst = arith.constant dense<0.000000e+00> : vector<32x512xf32>
    %4 = tpu.matmul %2, %3, %cst {dimension_numbers = #tpu.dot_dimension_numbers<[1], [0], [0], [1], [0, 0, 1, 1], [], []>} : vector<32x1024xbf16>, vector<1024x512xbf16>, vector<32x512xf32> -> vector<32x512xf32>
    %c0_3 = arith.constant 0 : index
    %c0_4 = arith.constant 0 : index
    %5 = vector.load %arg3[%c0_3, %c0_4] : memref<1x512xf32, #tpu.memory_space<vmem>>, vector<1x512xf32>
    %6 = vector.broadcast %5 : vector<1x512xf32> to vector<32x512xf32>
    %7 = arith.addf %4, %6 : vector<32x512xf32>
    %cst_5 = arith.constant 0.000000e+00 : f32
    %8 = vector.broadcast %cst_5 : f32 to vector<32x512xf32>
    %9 = arith.maximumf %7, %8 : vector<32x512xf32>
    %10 = arith.truncf %9 : vector<32x512xf32> to vector<32x512xbf16>
    %c0_6 = arith.constant 0 : index
    %c0_7 = arith.constant 0 : index
    %11 = vector.load %arg4[%c0_6, %c0_7] : memref<512x128xbf16, #tpu.memory_space<vmem>>, vector<512x128xbf16>
    %cst_8 = arith.constant dense<0.000000e+00> : vector<32x128xf32>
    %12 = tpu.matmul %10, %11, %cst_8 {dimension_numbers = #tpu.dot_dimension_numbers<[1], [0], [0], [1], [0, 0, 1, 1], [], []>} : vector<32x512xbf16>, vector<512x128xbf16>, vector<32x128xf32> -> vector<32x128xf32>
    %c0_9 = arith.constant 0 : index
    %c0_10 = arith.constant 0 : index
    %13 = vector.load %arg5[%c0_9, %c0_10] : memref<1x128xf32, #tpu.memory_space<vmem>>, vector<1x128xf32>
    %14 = vector.broadcast %13 : vector<1x128xf32> to vector<32x128xf32>
    %15 = arith.addf %12, %14 : vector<32x128xf32>
    %c0_11 = arith.constant 0 : index
    %c0_12 = arith.constant 0 : index
    %16 = vector.load %arg6[%c0_11, %c0_12] : memref<32x128xf32, #tpu.memory_space<vmem>>, vector<32x128xf32>
    tpu.vector_store %arg6[%c0_11, %c0_12], %15 {strides = array<i32>} : memref<32x128xf32, #tpu.memory_space<vmem>>, vector<32x128xf32>,
    return
  }
  func.func @transform_0(%arg0: i32) -> (i32, i32) {
    %c0_i32 = arith.constant 0 : i32
    %c0_i32_0 = arith.constant 0 : i32
    return %arg0, %c0_i32 : i32, i32
  }
  func.func @transform_1(%arg0: i32) -> (i32, i32) {
    %c0_i32 = arith.constant 0 : i32
    %c0_i32_0 = arith.constant 0 : i32
    %c0_i32_1 = arith.constant 0 : i32
    return %c0_i32, %c0_i32_0 : i32, i32
  }
  func.func @transform_2(%arg0: i32) -> (i32, i32) {
    %c0_i32 = arith.constant 0 : i32
    %c0_i32_0 = arith.constant 0 : i32
    %c0_i32_1 = arith.constant 0 : i32
    return %c0_i32, %c0_i32_0 : i32, i32
  }
  func.func @transform_3(%arg0: i32) -> (i32, i32) {
    %c0_i32 = arith.constant 0 : i32
    %c0_i32_0 = arith.constant 0 : i32
    %c0_i32_1 = arith.constant 0 : i32
    return %c0_i32, %c0_i32_0 : i32, i32
  }
  func.func @transform_4(%arg0: i32) -> (i32, i32) {
    %c0_i32 = arith.constant 0 : i32
    %c0_i32_0 = arith.constant 0 : i32
    %c0_i32_1 = arith.constant 0 : i32
    return %c0_i32, %c0_i32_0 : i32, i32
  }
  func.func @transform_5(%arg0: i32) -> (i32, i32) {
    %c0_i32 = arith.constant 0 : i32
    %c0_i32_0 = arith.constant 0 : i32
    return %arg0, %c0_i32 : i32, i32
  }
}

module attributes {stable_mosaic.version = 11 : i64} {
  func.func @_mlp_head_kernel(%arg0: i32, %arg1: memref<32x1024xi8, #tpu.memory_space<vmem>>, %arg2: memref<1024x512xbf16, #tpu.memory_space<vmem>>, %arg3: memref<1x512xf32, #tpu.memory_space<vmem>>, %arg4: memref<512x128xbf16, #tpu.memory_space<vmem>>, %arg5: memref<1x128xf32, #tpu.memory_space<vmem>>, %arg6: memref<32x128xf32, #tpu.memory_space<vmem>>) attributes {dimension_semantics = [#tpu.dimension_semantics<parallel>], iteration_bounds = array<i64: 1>, scalar_prefetch = 0 : i64, scratch_operands = 0 : i64, tpu.core_type = #tpu.core_type<tc>, window_params = [{transform_indices = @transform_0, window_bounds = array<i64: 32, 1024>}, {pipeline_mode = #tpu.pipeline_mode<synchronous>, transform_indices = @transform_1, window_bounds = array<i64: 1024, 512>}, {pipeline_mode = #tpu.pipeline_mode<synchronous>, transform_indices = @transform_2, window_bounds = array<i64: 1, 512>}, {pipeline_mode = #tpu.pipeline_mode<synchronous>, transform_indices = @transform_3, window_bounds = array<i64: 512, 128>}, {pipeline_mode = #tpu.pipeline_mode<synchronous>, transform_indices = @transform_4, window_bounds = array<i64: 1, 128>}, {transform_indices = @transform_5, window_bounds = array<i64: 32, 128>}]} {
    %c0 = arith.constant 0 : index
    %c0_0 = arith.constant 0 : index
    %0 = vector.load %arg1[%c0, %c0_0] : memref<32x1024xi8, #tpu.memory_space<vmem>>, vector<32x1024xi8>
    %1 = arith.uitofp %0 : vector<32x1024xi8> to vector<32x1024xf32>
    %2 = arith.truncf %1 : vector<32x1024xf32> to vector<32x1024xbf16>
    %c0_1 = arith.constant 0 : index
    %c0_2 = arith.constant 0 : index
    %3 = vector.load %arg2[%c0_1, %c0_2] : memref<1024x512xbf16, #tpu.memory_space<vmem>>, vector<1024x512xbf16>
    %cst = arith.constant dense<0.000000e+00> : vector<32x512xf32>
    %4 = tpu.matmul %2, %3, %cst {dimension_numbers = #tpu.dot_dimension_numbers<[1], [0], [0], [1], [0, 0, 1, 1], [], []>} : vector<32x1024xbf16>, vector<1024x512xbf16>, vector<32x512xf32> -> vector<32x512xf32>
    %c0_3 = arith.constant 0 : index
    %c0_4 = arith.constant 0 : index
    %5 = vector.load %arg3[%c0_3, %c0_4] : memref<1x512xf32, #tpu.memory_space<vmem>>, vector<1x512xf32>
    %6 = vector.broadcast %5 : vector<1x512xf32> to vector<32x512xf32>
    %7 = arith.addf %4, %6 : vector<32x512xf32>
    %cst_5 = arith.constant 0.000000e+00 : f32
    %8 = vector.broadcast %cst_5 : f32 to vector<32x512xf32>
    %9 = arith.maximumf %7, %8 : vector<32x512xf32>
    %10 = arith.truncf %9 : vector<32x512xf32> to vector<32x512xbf16>
    %c0_6 = arith.constant 0 : index
    %c0_7 = arith.constant 0 : index
    %11 = vector.load %arg4[%c0_6, %c0_7] : memref<512x128xbf16, #tpu.memory_space<vmem>>, vector<512x128xbf16>
    %cst_8 = arith.constant dense<0.000000e+00> : vector<32x128xf32>
    %12 = tpu.matmul %10, %11, %cst_8 {dimension_numbers = #tpu.dot_dimension_numbers<[1], [0], [0], [1], [0, 0, 1, 1], [], []>} : vector<32x512xbf16>, vector<512x128xbf16>, vector<32x128xf32> -> vector<32x128xf32>
    %c0_9 = arith.constant 0 : index
    %c0_10 = arith.constant 0 : index
    %13 = vector.load %arg5[%c0_9, %c0_10] : memref<1x128xf32, #tpu.memory_space<vmem>>, vector<1x128xf32>
    %14 = vector.broadcast %13 : vector<1x128xf32> to vector<32x128xf32>
    %15 = arith.addf %12, %14 : vector<32x128xf32>
    %c0_11 = arith.constant 0 : index
    %c0_12 = arith.constant 0 : index
    %16 = vector.load %arg6[%c0_11, %c0_12] : memref<32x128xf32, #tpu.memory_space<vmem>>, vector<32x128xf32>
    tpu.vector_store %arg6[%c0_11, %c0_12], %15 {strides = array<i32>} : memref<32x128xf32, #tpu.memory_space<vmem>>, vector<32x128xf32>,
    return
  }
  func.func @transform_0(%arg0: i32) -> (i32, i32) {
    %c0_i32 = arith.constant 0 : i32
    %c0_i32_0 = arith.constant 0 : i32
    return %arg0, %c0_i32 : i32, i32
  }
  func.func @transform_1(%arg0: i32) -> (i32, i32) {
    %c0_i32 = arith.constant 0 : i32
    %c0_i32_0 = arith.constant 0 : i32
    %c0_i32_1 = arith.constant 0 : i32
    return %c0_i32, %c0_i32_0 : i32, i32
  }
  func.func @transform_2(%arg0: i32) -> (i32, i32) {
    %c0_i32 = arith.constant 0 : i32
    %c0_i32_0 = arith.constant 0 : i32
    %c0_i32_1 = arith.constant 0 : i32
    return %c0_i32, %c0_i32_0 : i32, i32
  }
  func.func @transform_3(%arg0: i32) -> (i32, i32) {
    %c0_i32 = arith.constant 0 : i32
    %c0_i32_0 = arith.constant 0 : i32
    %c0_i32_1 = arith.constant 0 : i32
    return %c0_i32, %c0_i32_0 : i32, i32
  }
  func.func @transform_4(%arg0: i32) -> (i32, i32) {
    %c0_i32 = arith.constant 0 : i32
    %c0_i32_0 = arith.constant 0 : i32
    %c0_i32_1 = arith.constant 0 : i32
    return %c0_i32, %c0_i32_0 : i32, i32
  }
  func.func @transform_5(%arg0: i32) -> (i32, i32) {
    %c0_i32 = arith.constant 0 : i32
    %c0_i32_0 = arith.constant 0 : i32
    return %arg0, %c0_i32 : i32, i32
  }
}

</mosaic_0001>

<llo_original>
// kernel: tpu_custom_call.1
$region0: #{tpu_custom_call.1}
  #allocation0 [shape = 'u32[]', space=smem, size = 0x4, offset = 0x4, fixed_abs, tag = 'smem constant byte address 0x4 - core index']
  #allocation1 [shape = 'u32[72,128]{1,0:T(1,128)}', space=vmem, size = 0x9000, scoped, tag = 'internal scratch']
  %s0 = inlined_call_operand.hbm [shape: u8[2,1024], index: 0, kind: input, shape index: {}]
  %s1 = inlined_call_operand.hbm [shape: bf16[1024,512], index: 1, kind: input, shape index: {}]
  %s2 = inlined_call_operand.hbm [shape: f32[1,512], index: 2, kind: input, shape index: {}]
  %s3 = inlined_call_operand.hbm [shape: bf16[512,128], index: 3, kind: input, shape index: {}]
  %s4 = inlined_call_operand.vmem [shape: f32[1,128], index: 4, kind: input, shape index: {}]
  %s5 = inlined_call_operand.hbm [shape: f32[2,128], index: 5, kind: output, shape index: {}]
  %s6 = sld [smem:[#allocation0]]
  $region46: #{tpu_custom_call.1} parent=0
    _
  %s8 = ssub.s32 1, %s6
  %s9 = scalar_select 0, %s8, %s6
  $region1: #{tpu_custom_call.1} parent=0
    #allocation2 [shape = 'u8[32768]{0}', space=vmem, size = 0x8000, scoped, tag = 'input window, operand 0, single buffered']
    #allocation3 [shape = 's32[1]{0}', space=sflag, size = 0x4, scoped, tag = 'scoped memory for tpu_custom_call.1']
    #allocation4 [shape = 's32[1]{0}', space=sflag, size = 0x4, scoped, tag = 'scoped memory for tpu_custom_call.1']
    #allocation5 [shape = 'u8[1048576]{0}', space=vmem, size = 0x100000, scoped, tag = 'input window, operand 1, single buffered']
    #allocation6 [shape = 's32[1]{0}', space=sflag, size = 0x4, scoped, tag = 'scoped memory for tpu_custom_call.1']
    #allocation7 [shape = 'u8[2048]{0}', space=vmem, size = 0x800, scoped, tag = 'input window, operand 2, single buffered']
    #allocation8 [shape = 'u8[131072]{0}', space=vmem, size = 0x20000, scoped, tag = 'input window, operand 3, single buffered']
    #allocation9 [shape = 's32[1]{0}', space=sflag, size = 0x4, scoped, tag = 'scoped memory for tpu_custom_call.1']
    #allocation10 [shape = 'u8[16384]{0}', space=vmem, size = 0x4000, scoped, tag = 'output window, operand 0, single buffered']
    %10 = vsyncpa [#allocation3], 0
    %11 = vsyncpa [#allocation6], 0
    %12 = vsyncpa [#allocation9], 0
    %13 = vsyncpa [#allocation4], 0
    // Predicated region
    $region2: #{tpu_custom_call.1} parent=1 // pred_check
      _
    $region3: #{tpu_custom_call.1} parent=1 // pred_check_branch
      %15 = sbr.rel (0) target = $region5
    $region4: #{tpu_custom_call.1} parent=1 // pred_region
      %17 = vsyncadd [#allocation3], 896
      %s18 = sshll.u32 %s0, 4
      %s19 = int_to_ptr.hbm [resolvable:$true] %s18
      %s20 = sshll.u32 [#allocation2], 4
      %s21 = int_to_ptr.vmem [resolvable:$true] %s20
      %26 = dma.hbm_to_vmem [thread:$0]  %s19, 128, %s21, [#allocation3], 128, 128, 8
    $region5: #{tpu_custom_call.1} parent=1 // pred_fallthru
      _
    // Predicated region
    $region6: #{tpu_custom_call.1} parent=1 // pred_check
      _
    $region7: #{tpu_custom_call.1} parent=1 // pred_check_branch
      %28 = sbr.rel (0) target = $region9
    $region8: #{tpu_custom_call.1} parent=1 // pred_region
      %30 = vsyncadd [#allocation6], 0
      %s31 = sshll.u32 %s1, 4
      %s32 = int_to_ptr.hbm [resolvable:$true] %s31
      %s33 = sshll.u32 [#allocation5], 4
      %s34 = int_to_ptr.vmem [resolvable:$true] %s33
      %39 = dma.hbm_to_vmem [thread:$0]  %s32, 32768, %s34, [#allocation6], 256, 256, 16
    $region9: #{tpu_custom_call.1} parent=1 // pred_fallthru
      _
    // Predicated region
    $region10: #{tpu_custom_call.1} parent=1 // pred_check
      _
    $region11: #{tpu_custom_call.1} parent=1 // pred_check_branch
      %41 = sbr.rel (0) target = $region13
    $region12: #{tpu_custom_call.1} parent=1 // pred_region
      %43 = vsyncadd [#allocation6], 0
      %s45 = sshll.u32 %s2, 4
      %s46 = int_to_ptr.hbm [resolvable:$true] %s45
      %s47 = sshll.u32 [#allocation7], 4
      %s48 = int_to_ptr.vmem [resolvable:$true] %s47
      %50 = dma.hbm_to_vmem [thread:$0]  %s46, 64, %s48, [#allocation6]
    $region13: #{tpu_custom_call.1} parent=1 // pred_fallthru
      _
    // Predicated region
    $region14: #{tpu_custom_call.1} parent=1 // pred_check
      _
    $region15: #{tpu_custom_call.1} parent=1 // pred_check_branch
      %52 = sbr.rel (0) target = $region17
    $region16: #{tpu_custom_call.1} parent=1 // pred_region
      %54 = vsyncadd [#allocation9], 0
      %s55 = sshll.u32 %s3, 4
      %s56 = int_to_ptr.hbm [resolvable:$true] %s55
      %s57 = sshll.u32 [#allocation8], 4
      %s58 = int_to_ptr.vmem [resolvable:$true] %s57
      %63 = dma.hbm_to_vmem [thread:$0]  %s56, 4096, %s58, [#allocation9], 64, 64, 4
    $region17: #{tpu_custom_call.1} parent=1 // pred_fallthru
      _
    // Predicated region
    $region18: #{tpu_custom_call.1} parent=1 // pred_check
      _
    $region19: #{tpu_custom_call.1} parent=1 // pred_check_branch
      %65 = sbr.rel (0) target = $region21
    $region20: #{tpu_custom_call.1} parent=1 // pred_region
      _
    $region21: #{tpu_custom_call.1} parent=1 // pred_fallthru
      _
    // Predicated region
    $region22: #{tpu_custom_call.1} parent=1 // pred_check
      _
    $region23: #{tpu_custom_call.1} parent=1 // pred_check_branch
      %67 = sbr.rel (0) target = $region25
    $region24: #{tpu_custom_call.1} parent=1 // pred_region
      %69 = dma.done [#allocation3], 1024
    $region25: #{tpu_custom_call.1} parent=1 // pred_fallthru
      _
    // Predicated region
    $region26: #{tpu_custom_call.1} parent=1 // pred_check
      _
    $region27: #{tpu_custom_call.1} parent=1 // pred_check_branch
      %71 = sbr.rel (0) target = $region29
    $region28: #{tpu_custom_call.1} parent=1 // pred_region
      %73 = dma.done [#allocation6], 32768
    $region29: #{tpu_custom_call.1} parent=1 // pred_fallthru
      _
    // Predicated region
    $region30: #{tpu_custom_call.1} parent=1 // pred_check
      _
    $region31: #{tpu_custom_call.1} parent=1 // pred_check_branch
      %75 = sbr.rel (0) target = $region33
    $region32: #{tpu_custom_call.1} parent=1 // pred_region
      %77 = dma.done [#allocation6], 64
    $region33: #{tpu_custom_call.1} parent=1 // pred_fallthru
      _
    // Predicated region
    $region34: #{tpu_custom_call.1} parent=1 // pred_check
      _
    $region35: #{tpu_custom_call.1} parent=1 // pred_check_branch
      %79 = sbr.rel (0) target = $region37
    $region36: #{tpu_custom_call.1} parent=1 // pred_region
      %81 = dma.done [#allocation9], 4096
    $region37: #{tpu_custom_call.1} parent=1 // pred_fallthru
      _
    %v82 = vld [vmem:[#allocation2] sm:$0xff]
    %v83 = vld [vmem:[#allocation2 + $0x8] sm:$0xff]
    %v84 = vld [vmem:[#allocation2 + $0x10] sm:$0xff]
    %v85 = vld [vmem:[#allocation2 + $0x18] sm:$0xff]
    %v86 = vld [vmem:[#allocation2 + $0x20] sm:$0xff]
    %v87 = vld [vmem:[#allocation2 + $0x28] sm:$0xff]
    %v88 = vld [vmem:[#allocation2 + $0x30] sm:$0xff]
    %v89 = vld [vmem:[#allocation2 + $0x38] sm:$0xff]
    %v90 = vunpack.c.0.s8 %v82
    %v91 = vunpack.c.1.s8 %v82
    %v92 = vunpack.c.2.s8 %v82
    %v93 = vunpack.c.3.s8 %v82
    %v94 = vunpack.c.0.s8 %v83
    %v95 = vunpack.c.1.s8 %v83
    %v96 = vunpack.c.2.s8 %v83
    %v97 = vunpack.c.3.s8 %v83
    %v98 = vunpack.c.0.s8 %v84
    %v99 = vunpack.c.1.s8 %v84
    %v100 = vunpack.c.2.s8 %v84
    %v101 = vunpack.c.3.s8 %v84
    %v102 = vunpack.c.0.s8 %v85
    %v103 = vunpack.c.1.s8 %v85
    %v104 = vunpack.c.2.s8 %v85
    %v105 = vunpack.c.3.s8 %v85
    %v106 = vunpack.c.0.s8 %v86
    %v107 = vunpack.c.1.s8 %v86
    %v108 = vunpack.c.2.s8 %v86
    %v109 = vunpack.c.3.s8 %v86
    %v110 = vunpack.c.0.s8 %v87
    %v111 = vunpack.c.1.s8 %v87
    %v112 = vunpack.c.2.s8 %v87
    %v113 = vunpack.c.3.s8 %v87
    %v114 = vunpack.c.0.s8 %v88
    %v115 = vunpack.c.1.s8 %v88
    %v116 = vunpack.c.2.s8 %v88
    %v117 = vunpack.c.3.s8 %v88
    %v118 = vunpack.c.0.s8 %v89
    %v119 = vunpack.c.1.s8 %v89
    %v120 = vunpack.c.2.s8 %v89
    %v121 = vunpack.c.3.s8 %v89
    %v122 = vand.u32 %v90, 255
    %v123 = vand.u32 %v91, 255
    %v124 = vand.u32 %v92, 255
    %v125 = vand.u32 %v93, 255
    %v126 = vand.u32 %v94, 255
    %v127 = vand.u32 %v95, 255
    %v128 = vand.u32 %v96, 255
    %v129 = vand.u32 %v97, 255
    %v130 = vand.u32 %v98, 255
    %v131 = vand.u32 %v99, 255
    %v132 = vand.u32 %v100, 255
    %v133 = vand.u32 %v101, 255
    %v134 = vand.u32 %v102, 255
    %v135 = vand.u32 %v103, 255
    %v136 = vand.u32 %v104, 255
    %v137 = vand.u32 %v105, 255
    %v138 = vand.u32 %v106, 255
    %v139 = vand.u32 %v107, 255
    %v140 = vand.u32 %v108, 255
    %v141 = vand.u32 %v109, 255
    %v142 = vand.u32 %v110, 255
    %v143 = vand.u32 %v111, 255
    %v144 = vand.u32 %v112, 255
    %v145 = vand.u32 %v113, 255
    %v146 = vand.u32 %v114, 255
    %v147 = vand.u32 %v115, 255
    %v148 = vand.u32 %v116, 255
    %v149 = vand.u32 %v117, 255
    %v150 = vand.u32 %v118, 255
    %v151 = vand.u32 %v119, 255
    %v152 = vand.u32 %v120, 255
    %v153 = vand.u32 %v121, 255
    %v154 = vcvt.s32.f32 %v122
    %v155 = vcvt.s32.f32 %v123
    %v156 = vcvt.s32.f32 %v124
    %v157 = vcvt.s32.f32 %v125
    %v158 = vcvt.s32.f32 %v126
    %v159 = vcvt.s32.f32 %v127
    %v160 = vcvt.s32.f32 %v128
    %v161 = vcvt.s32.f32 %v129
    %v162 = vcvt.s32.f32 %v130
    %v163 = vcvt.s32.f32 %v131
    %v164 = vcvt.s32.f32 %v132
    %v165 = vcvt.s32.f32 %v133
    %v166 = vcvt.s32.f32 %v134
    %v167 = vcvt.s32.f32 %v135
    %v168 = vcvt.s32.f32 %v136
    %v169 = vcvt.s32.f32 %v137
    %v170 = vcvt.s32.f32 %v138
    %v171 = vcvt.s32.f32 %v139
    %v172 = vcvt.s32.f32 %v140
    %v173 = vcvt.s32.f32 %v141
    %v174 = vcvt.s32.f32 %v142
    %v175 = vcvt.s32.f32 %v143
    %v176 = vcvt.s32.f32 %v144
    %v177 = vcvt.s32.f32 %v145
    %v178 = vcvt.s32.f32 %v146
    %v179 = vcvt.s32.f32 %v147
    %v180 = vcvt.s32.f32 %v148
    %v181 = vcvt.s32.f32 %v149
    %v182 = vcvt.s32.f32 %v150
    %v183 = vcvt.s32.f32 %v151
    %v184 = vcvt.s32.f32 %v152
    %v185 = vcvt.s32.f32 %v153
    %218 = vst [vmem:[#allocation1] ss:$2 sm:$0xff] %v154
    %s219 = scalar_lea.vmem [#allocation1], 1
    %220 = vst [vmem:[%s219] ss:$2 sm:$0xff] %v158
    %s221 = scalar_lea.vmem [#allocation1], 16
    %222 = vst [vmem:[%s221] ss:$2 sm:$0xff] %v155
    %s223 = scalar_lea.vmem [#allocation1], 17
    %224 = vst [vmem:[%s223] ss:$2 sm:$0xff] %v159
    %s225 = scalar_lea.vmem [#allocation1], 32
    %226 = vst [vmem:[%s225] ss:$2 sm:$0xff] %v156
    %s227 = scalar_lea.vmem [#allocation1], 33
    %228 = vst [vmem:[%s227] ss:$2 sm:$0xff] %v160
    %s229 = scalar_lea.vmem [#allocation1], 48
    %230 = vst [vmem:[%s229] ss:$2 sm:$0xff] %v157
    %s231 = scalar_lea.vmem [#allocation1], 49
    %232 = vst [vmem:[%s231] ss:$2 sm:$0xff] %v161
    %v233 = vld.sshfl [vmem:[#allocation1] sm:$0xff pattern:$0x75316420]
    %v234 = vld.sshfl [vmem:[#allocation1 + $0x8] sm:$0xff pattern:$0x75316420]
    %v235 = vld.sshfl [vmem:[#allocation1 + $0x10] sm:$0xff pattern:$0x75316420]
    %v236 = vld.sshfl [vmem:[#allocation1 + $0x18] sm:$0xff pattern:$0x75316420]
    %v237 = vld.sshfl [vmem:[#allocation1 + $0x20] sm:$0xff pattern:$0x75316420]
    %v238 = vld.sshfl [vmem:[#allocation1 + $0x28] sm:$0xff pattern:$0x75316420]
    %v239 = vld.sshfl [vmem:[#allocation1 + $0x30] sm:$0xff pattern:$0x75316420]
    %v240 = vld.sshfl [vmem:[#allocation1 + $0x38] sm:$0xff pattern:$0x75316420]
    %241 = vst [vmem:[#allocation1] ss:$2 sm:$0xff] %v162
    %242 = vst [vmem:[%s219] ss:$2 sm:$0xff] %v166
    %243 = vst [vmem:[%s221] ss:$2 sm:$0xff] %v163
    %244 = vst [vmem:[%s223] ss:$2 sm:$0xff] %v167
    %245 = vst [vmem:[%s225] ss:$2 sm:$0xff] %v164
    %246 = vst [vmem:[%s227] ss:$2 sm:$0xff] %v168
    %247 = vst [vmem:[%s229] ss:$2 sm:$0xff] %v165
    %248 = vst [vmem:[%s231] ss:$2 sm:$0xff] %v169
    %v249 = vld.sshfl [vmem:[#allocation1] sm:$0xff pattern:$0x75316420]
    %v250 = vld.sshfl [vmem:[#allocation1 + $0x8] sm:$0xff pattern:$0x75316420]
    %v251 = vld.sshfl [vmem:[#allocation1 + $0x10] sm:$0xff pattern:$0x75316420]
    %v252 = vld.sshfl [vmem:[#allocation1 + $0x18] sm:$0xff pattern:$0x75316420]
    %v253 = vld.sshfl [vmem:[#allocation1 + $0x20] sm:$0xff pattern:$0x75316420]
    %v254 = vld.sshfl [vmem:[#allocation1 + $0x28] sm:$0xff pattern:$0x75316420]
    %v255 = vld.sshfl [vmem:[#allocation1 + $0x30] sm:$0xff pattern:$0x75316420]
    %v256 = vld.sshfl [vmem:[#allocation1 + $0x38] sm:$0xff pattern:$0x75316420]
    %257 = vst [vmem:[#allocation1] ss:$2 sm:$0xff] %v170
    %258 = vst [vmem:[%s219] ss:$2 sm:$0xff] %v174
    %259 = vst [vmem:[%s221] ss:$2 sm:$0xff] %v171
    %260 = vst [vmem:[%s223] ss:$2 sm:$0xff] %v175
    %261 = vst [vmem:[%s225] ss:$2 sm:$0xff] %v172
    %262 = vst [vmem:[%s227] ss:$2 sm:$0xff] %v176
    %263 = vst [vmem:[%s229] ss:$2 sm:$0xff] %v173
    %264 = vst [vmem:[%s231] ss:$2 sm:$0xff] %v177
    %v265 = vld.sshfl [vmem:[#allocation1] sm:$0xff pattern:$0x75316420]
    %v266 = vld.sshfl [vmem:[#allocation1 + $0x8] sm:$0xff pattern:$0x75316420]
    %v267 = vld.sshfl [vmem:[#allocation1 + $0x10] sm:$0xff pattern:$0x75316420]
    %v268 = vld.sshfl [vmem:[#allocation1 + $0x18] sm:$0xff pattern:$0x75316420]
    %v269 = vld.sshfl [vmem:[#allocation1 + $0x20] sm:$0xff pattern:$0x75316420]
    %v270 = vld.sshfl [vmem:[#allocation1 + $0x28] sm:$0xff pattern:$0x75316420]
    %v271 = vld.sshfl [vmem:[#allocation1 + $0x30] sm:$0xff pattern:$0x75316420]
    %v272 = vld.sshfl [vmem:[#allocation1 + $0x38] sm:$0xff pattern:$0x75316420]
    %273 = vst [vmem:[#allocation1] ss:$2 sm:$0xff] %v178
    %274 = vst [vmem:[%s219] ss:$2 sm:$0xff] %v182
    %275 = vst [vmem:[%s221] ss:$2 sm:$0xff] %v179
    %276 = vst [vmem:[%s223] ss:$2 sm:$0xff] %v183
    %277 = vst [vmem:[%s225] ss:$2 sm:$0xff] %v180
    %278 = vst [vmem:[%s227] ss:$2 sm:$0xff] %v184
    %279 = vst [vmem:[%s229] ss:$2 sm:$0xff] %v181
    %280 = vst [vmem:[%s231] ss:$2 sm:$0xff] %v185
    %v281 = vld.sshfl [vmem:[#allocation1] sm:$0xff pattern:$0x75316420]
    %v282 = vld.sshfl [vmem:[#allocation1 + $0x8] sm:$0xff pattern:$0x75316420]
    %v283 = vld.sshfl [vmem:[#allocation1 + $0x10] sm:$0xff pattern:$0x75316420]
    %v284 = vld.sshfl [vmem:[#allocation1 + $0x18] sm:$0xff pattern:$0x75316420]
    %v285 = vld.sshfl [vmem:[#allocation1 + $0x20] sm:$0xff pattern:$0x75316420]
    %v286 = vld.sshfl [vmem:[#allocation1 + $0x28] sm:$0xff pattern:$0x75316420]
    %v287 = vld.sshfl [vmem:[#allocation1 + $0x30] sm:$0xff pattern:$0x75316420]
    %v288 = vld.sshfl [vmem:[#allocation1 + $0x38] sm:$0xff pattern:$0x75316420]
    %v321 = vpack.c.bf16 %v249, %v233
    %v322 = vpack.c.bf16 %v250, %v234
    %v323 = vpack.c.bf16 %v251, %v235
    %v324 = vpack.c.bf16 %v252, %v236
    %v325 = vpack.c.bf16 %v253, %v237
    %v326 = vpack.c.bf16 %v254, %v238
    %v327 = vpack.c.bf16 %v255, %v239
    %v328 = vpack.c.bf16 %v256, %v240
    %v329 = vpack.c.bf16 %v281, %v265
    %v330 = vpack.c.bf16 %v282, %v266
    %v331 = vpack.c.bf16 %v283, %v267
    %v332 = vpack.c.bf16 %v284, %v268
    %v333 = vpack.c.bf16 %v285, %v269
    %v334 = vpack.c.bf16 %v286, %v270
    %v335 = vpack.c.bf16 %v287, %v271
    %v336 = vpack.c.bf16 %v288, %v272
    %v337 = vld [vmem:[#allocation5] sm:$0xff]
    %v338 = vld [vmem:[#allocation5 + $0x8] sm:$0xff]
    %v339 = vld [vmem:[#allocation5 + $0x10] sm:$0xff]
    %v340 = vld [vmem:[#allocation5 + $0x18] sm:$0xff]
    %v341 = vld [vmem:[#allocation5 + $0x20] sm:$0xff]
    %v342 = vld [vmem:[#allocation5 + $0x28] sm:$0xff]
    %v343 = vld [vmem:[#allocation5 + $0x30] sm:$0xff]
    %v344 = vld [vmem:[#allocation5 + $0x38] sm:$0xff]
    %v345 = vld [vmem:[#allocation5 + $0x40] sm:$0xff]
    %v346 = vld [vmem:[#allocation5 + $0x48] sm:$0xff]
    %v347 = vld [vmem:[#allocation5 + $0x50] sm:$0xff]
    %v348 = vld [vmem:[#allocation5 + $0x58] sm:$0xff]
    %v349 = vld [vmem:[#allocation5 + $0x60] sm:$0xff]
    %v350 = vld [vmem:[#allocation5 + $0x68] sm:$0xff]
    %v351 = vld [vmem:[#allocation5 + $0x70] sm:$0xff]
    %v352 = vld [vmem:[#allocation5 + $0x78] sm:$0xff]
    %v353 = vld [vmem:[#allocation5 + $0x80] sm:$0xff]
    %v354 = vld [vmem:[#allocation5 + $0x88] sm:$0xff]
    %v355 = vld [vmem:[#allocation5 + $0x90] sm:$0xff]
    %v356 = vld [vmem:[#allocation5 + $0x98] sm:$0xff]
    %v357 = vld [vmem:[#allocation5 + $0xa0] sm:$0xff]
    %v358 = vld [vmem:[#allocation5 + $0xa8] sm:$0xff]
    %v359 = vld [vmem:[#allocation5 + $0xb0] sm:$0xff]
    %v360 = vld [vmem:[#allocation5 + $0xb8] sm:$0xff]
    %v361 = vld [vmem:[#allocation5 + $0xc0] sm:$0xff]
    %v362 = vld [vmem:[#allocation5 + $0xc8] sm:$0xff]
    %v363 = vld [vmem:[#allocation5 + $0xd0] sm:$0xff]
    %v364 = vld [vmem:[#allocation5 + $0xd8] sm:$0xff]
    %v365 = vld [vmem:[#allocation5 + $0xe0] sm:$0xff]
    %v366 = vld [vmem:[#allocation5 + $0xe8] sm:$0xff]
    %v367 = vld [vmem:[#allocation5 + $0xf0] sm:$0xff]
    %v368 = vld [vmem:[#allocation5 + $0xf8] sm:$0xff]
    %v369 = vld [vmem:[#allocation5 + $0x100] sm:$0xff]
    %v370 = vld [vmem:[#allocation5 + $0x108] sm:$0xff]
    %v371 = vld [vmem:[#allocation5 + $0x110] sm:$0xff]
    %v372 = vld [vmem:[#allocation5 + $0x118] sm:$0xff]
    %v373 = vld [vmem:[#allocation5 + $0x120] sm:$0xff]
    %v374 = vld [vmem:[#allocation5 + $0x128] sm:$0xff]
    %v375 = vld [vmem:[#allocation5 + $0x130] sm:$0xff]
    %v376 = vld [vmem:[#allocation5 + $0x138] sm:$0xff]
    %v377 = vld [vmem:[#allocation5 + $0x140] sm:$0xff]
    %v378 = vld [vmem:[#allocation5 + $0x148] sm:$0xff]
    %v379 = vld [vmem:[#allocation5 + $0x150] sm:$0xff]
    %v380 = vld [vmem:[#allocation5 + $0x158] sm:$0xff]
    %v381 = vld [vmem:[#allocation5 + $0x160] sm:$0xff]
    %v382 = vld [vmem:[#allocation5 + $0x168] sm:$0xff]
    %v383 = vld [vmem:[#allocation5 + $0x170] sm:$0xff]
    %v384 = vld [vmem:[#allocation5 + $0x178] sm:$0xff]
    %v385 = vld [vmem:[#allocation5 + $0x180] sm:$0xff]
    %v386 = vld [vmem:[#allocation5 + $0x188] sm:$0xff]
    %v387 = vld [vmem:[#allocation5 + $0x190] sm:$0xff]
    %v388 = vld [vmem:[#allocation5 + $0x198] sm:$0xff]
    %v389 = vld [vmem:[#allocation5 + $0x1a0] sm:$0xff]
    %v390 = vld [vmem:[#allocation5 + $0x1a8] sm:$0xff]
    %v391 = vld [vmem:[#allocation5 + $0x1b0] sm:$0xff]
    %v392 = vld [vmem:[#allocation5 + $0x1b8] sm:$0xff]
    %v393 = vld [vmem:[#allocation5 + $0x1c0] sm:$0xff]
    %v394 = vld [vmem:[#allocation5 + $0x1c8] sm:$0xff]
    %v395 = vld [vmem:[#allocation5 + $0x1d0] sm:$0xff]
    %v396 = vld [vmem:[#allocation5 + $0x1d8] sm:$0xff]
    %v397 = vld [vmem:[#allocation5 + $0x1e0] sm:$0xff]
    %v398 = vld [vmem:[#allocation5 + $0x1e8] sm:$0xff]
    %v399 = vld [vmem:[#allocation5 + $0x1f0] sm:$0xff]
    %v400 = vld [vmem:[#allocation5 + $0x1f8] sm:$0xff]
    %v401 = vld [vmem:[#allocation5 + $0x200] sm:$0xff]
    %v402 = vld [vmem:[#allocation5 + $0x208] sm:$0xff]
    %v403 = vld [vmem:[#allocation5 + $0x210] sm:$0xff]
    %v404 = vld [vmem:[#allocation5 + $0x218] sm:$0xff]
    %v405 = vld [vmem:[#allocation5 + $0x220] sm:$0xff]
    %v406 = vld [vmem:[#allocation5 + $0x228] sm:$0xff]
    %v407 = vld [vmem:[#allocation5 + $0x230] sm:$0xff]
    %v408 = vld [vmem:[#allocation5 + $0x238] sm:$0xff]
    %v409 = vld [vmem:[#allocation5 + $0x240] sm:$0xff]
    %v410 = vld [vmem:[#allocation5 + $0x248] sm:$0xff]
    %v411 = vld [vmem:[#allocation5 + $0x250] sm:$0xff]
    %v412 = vld [vmem:[#allocation5 + $0x258] sm:$0xff]
    %v413 = vld [vmem:[#allocation5 + $0x260] sm:$0xff]
    %v414 = vld [vmem:[#allocation5 + $0x268] sm:$0xff]
    %v415 = vld [vmem:[#allocation5 + $0x270] sm:$0xff]
    %v416 = vld [vmem:[#allocation5 + $0x278] sm:$0xff]
    %v417 = vld [vmem:[#allocation5 + $0x280] sm:$0xff]
    %v418 = vld [vmem:[#allocation5 + $0x288] sm:$0xff]
    %v419 = vld [vmem:[#allocation5 + $0x290] sm:$0xff]
    %v420 = vld [vmem:[#allocation5 + $0x298] sm:$0xff]
    %v421 = vld [vmem:[#allocation5 + $0x2a0] sm:$0xff]
    %v422 = vld [vmem:[#allocation5 + $0x2a8] sm:$0xff]
    %v423 = vld [vmem:[#allocation5 + $0x2b0] sm:$0xff]
    %v424 = vld [vmem:[#allocation5 + $0x2b8] sm:$0xff]
    %v425 = vld [vmem:[#allocation5 + $0x2c0] sm:$0xff]
    %v426 = vld [vmem:[#allocation5 + $0x2c8] sm:$0xff]
    %v427 = vld [vmem:[#allocation5 + $0x2d0] sm:$0xff]
    %v428 = vld [vmem:[#allocation5 + $0x2d8] sm:$0xff]
    %v429 = vld [vmem:[#allocation5 + $0x2e0] sm:$0xff]
    %v430 = vld [vmem:[#allocation5 + $0x2e8] sm:$0xff]
    %v431 = vld [vmem:[#allocation5 + $0x2f0] sm:$0xff]
    %v432 = vld [vmem:[#allocation5 + $0x2f8] sm:$0xff]
    %v433 = vld [vmem:[#allocation5 + $0x300] sm:$0xff]
    %v434 = vld [vmem:[#allocation5 + $0x308] sm:$0xff]
    %v435 = vld [vmem:[#allocation5 + $0x310] sm:$0xff]
    %v436 = vld [vmem:[#allocation5 + $0x318] sm:$0xff]
    %v437 = vld [vmem:[#allocation5 + $0x320] sm:$0xff]
    %v438 = vld [vmem:[#allocation5 + $0x328] sm:$0xff]
    %v439 = vld [vmem:[#allocation5 + $0x330] sm:$0xff]
    %v440 = vld [vmem:[#allocation5 + $0x338] sm:$0xff]
    %v441 = vld [vmem:[#allocation5 + $0x340] sm:$0xff]
    %v442 = vld [vmem:[#allocation5 + $0x348] sm:$0xff]
    %v443 = vld [vmem:[#allocation5 + $0x350] sm:$0xff]
    %v444 = vld [vmem:[#allocation5 + $0x358] sm:$0xff]
    %v445 = vld [vmem:[#allocation5 + $0x360] sm:$0xff]
    %v446 = vld [vmem:[#allocation5 + $0x368] sm:$0xff]
    %v447 = vld [vmem:[#allocation5 + $0x370] sm:$0xff]
    %v448 = vld [vmem:[#allocation5 + $0x378] sm:$0xff]
    %v449 = vld [vmem:[#allocation5 + $0x380] sm:$0xff]
    %v450 = vld [vmem:[#allocation5 + $0x388] sm:$0xff]
    %v451 = vld [vmem:[#allocation5 + $0x390] sm:$0xff]
    %v452 = vld [vmem:[#allocation5 + $0x398] sm:$0xff]
    %v453 = vld [vmem:[#allocation5 + $0x3a0] sm:$0xff]
    %v454 = vld [vmem:[#allocation5 + $0x3a8] sm:$0xff]
    %v455 = vld [vmem:[#allocation5 + $0x3b0] sm:$0xff]
    %v456 = vld [vmem:[#allocation5 + $0x3b8] sm:$0xff]
    %v457 = vld [vmem:[#allocation5 + $0x3c0] sm:$0xff]
    %v458 = vld [vmem:[#allocation5 + $0x3c8] sm:$0xff]
    %v459 = vld [vmem:[#allocation5 + $0x3d0] sm:$0xff]
    %v460 = vld [vmem:[#allocation5 + $0x3d8] sm:$0xff]
    %v461 = vld [vmem:[#allocation5 + $0x3e0] sm:$0xff]
    %v462 = vld [vmem:[#allocation5 + $0x3e8] sm:$0xff]
    %v463 = vld [vmem:[#allocation5 + $0x3f0] sm:$0xff]
    %v464 = vld [vmem:[#allocation5 + $0x3f8] sm:$0xff]
    %v465 = vld [vmem:[#allocation5 + $0x400] sm:$0xff]
    %v466 = vld [vmem:[#allocation5 + $0x408] sm:$0xff]
    %v467 = vld [vmem:[#allocation5 + $0x410] sm:$0xff]
    %v468 = vld [vmem:[#allocation5 + $0x418] sm:$0xff]
    %v469 = vld [vmem:[#allocation5 + $0x420] sm:$0xff]
    %v470 = vld [vmem:[#allocation5 + $0x428] sm:$0xff]
    %v471 = vld [vmem:[#allocation5 + $0x430] sm:$0xff]
    %v472 = vld [vmem:[#allocation5 + $0x438] sm:$0xff]
    %v473 = vld [vmem:[#allocation5 + $0x440] sm:$0xff]
    %v474 = vld [vmem:[#allocation5 + $0x448] sm:$0xff]
    %v475 = vld [vmem:[#allocation5 + $0x450] sm:$0xff]
    %v476 = vld [vmem:[#allocation5 + $0x458] sm:$0xff]
    %v477 = vld [vmem:[#allocation5 + $0x460] sm:$0xff]
    %v478 = vld [vmem:[#allocation5 + $0x468] sm:$0xff]
    %v479 = vld [vmem:[#allocation5 + $0x470] sm:$0xff]
    %v480 = vld [vmem:[#allocation5 + $0x478] sm:$0xff]
    %v481 = vld [vmem:[#allocation5 + $0x480] sm:$0xff]
    %v482 = vld [vmem:[#allocation5 + $0x488] sm:$0xff]
    %v483 = vld [vmem:[#allocation5 + $0x490] sm:$0xff]
    %v484 = vld [vmem:[#allocation5 + $0x498] sm:$0xff]
    %v485 = vld [vmem:[#allocation5 + $0x4a0] sm:$0xff]
    %v486 = vld [vmem:[#allocation5 + $0x4a8] sm:$0xff]
    %v487 = vld [vmem:[#allocation5 + $0x4b0] sm:$0xff]
    %v488 = vld [vmem:[#allocation5 + $0x4b8] sm:$0xff]
    %v489 = vld [vmem:[#allocation5 + $0x4c0] sm:$0xff]
    %v490 = vld [vmem:[#allocation5 + $0x4c8] sm:$0xff]
    %v491 = vld [vmem:[#allocation5 + $0x4d0] sm:$0xff]
    %v492 = vld [vmem:[#allocation5 + $0x4d8] sm:$0xff]
    %v493 = vld [vmem:[#allocation5 + $0x4e0] sm:$0xff]
    %v494 = vld [vmem:[#allocation5 + $0x4e8] sm:$0xff]
    %v495 = vld [vmem:[#allocation5 + $0x4f0] sm:$0xff]
    %v496 = vld [vmem:[#allocation5 + $0x4f8] sm:$0xff]
    %v497 = vld [vmem:[#allocation5 + $0x500] sm:$0xff]
    %v498 = vld [vmem:[#allocation5 + $0x508] sm:$0xff]
    %v499 = vld [vmem:[#allocation5 + $0x510] sm:$0xff]
    %v500 = vld [vmem:[#allocation5 + $0x518] sm:$0xff]
    %v501 = vld [vmem:[#allocation5 + $0x520] sm:$0xff]
    %v502 = vld [vmem:[#allocation5 + $0x528] sm:$0xff]
    %v503 = vld [vmem:[#allocation5 + $0x530] sm:$0xff]
    %v504 = vld [vmem:[#allocation5 + $0x538] sm:$0xff]
    %v505 = vld [vmem:[#allocation5 + $0x540] sm:$0xff]
    %v506 = vld [vmem:[#allocation5 + $0x548] sm:$0xff]
    %v507 = vld [vmem:[#allocation5 + $0x550] sm:$0xff]
    %v508 = vld [vmem:[#allocation5 + $0x558] sm:$0xff]
    %v509 = vld [vmem:[#allocation5 + $0x560] sm:$0xff]
    %v510 = vld [vmem:[#allocation5 + $0x568] sm:$0xff]
    %v511 = vld [vmem:[#allocation5 + $0x570] sm:$0xff]
    %v512 = vld [vmem:[#allocation5 + $0x578] sm:$0xff]
    %v513 = vld [vmem:[#allocation5 + $0x580] sm:$0xff]
    %v514 = vld [vmem:[#allocation5 + $0x588] sm:$0xff]
    %v515 = vld [vmem:[#allocation5 + $0x590] sm:$0xff]
    %v516 = vld [vmem:[#allocation5 + $0x598] sm:$0xff]
    %v517 = vld [vmem:[#allocation5 + $0x5a0] sm:$0xff]
    %v518 = vld [vmem:[#allocation5 + $0x5a8] sm:$0xff]
    %v519 = vld [vmem:[#allocation5 + $0x5b0] sm:$0xff]
    %v520 = vld [vmem:[#allocation5 + $0x5b8] sm:$0xff]
    %v521 = vld [vmem:[#allocation5 + $0x5c0] sm:$0xff]
    %v522 = vld [vmem:[#allocation5 + $0x5c8] sm:$0xff]
    %v523 = vld [vmem:[#allocation5 + $0x5d0] sm:$0xff]
    %v524 = vld [vmem:[#allocation5 + $0x5d8] sm:$0xff]
    %v525 = vld [vmem:[#allocation5 + $0x5e0] sm:$0xff]
    %v526 = vld [vmem:[#allocation5 + $0x5e8] sm:$0xff]
    %v527 = vld [vmem:[#allocation5 + $0x5f0] sm:$0xff]
    %v528 = vld [vmem:[#allocation5 + $0x5f8] sm:$0xff]
    %v529 = vld [vmem:[#allocation5 + $0x600] sm:$0xff]
    %v530 = vld [vmem:[#allocation5 + $0x608] sm:$0xff]
    %v531 = vld [vmem:[#allocation5 + $0x610] sm:$0xff]
    %v532 = vld [vmem:[#allocation5 + $0x618] sm:$0xff]
    %v533 = vld [vmem:[#allocation5 + $0x620] sm:$0xff]
    %v534 = vld [vmem:[#allocation5 + $0x628] sm:$0xff]
    %v535 = vld [vmem:[#allocation5 + $0x630] sm:$0xff]
    %v536 = vld [vmem:[#allocation5 + $0x638] sm:$0xff]
    %v537 = vld [vmem:[#allocation5 + $0x640] sm:$0xff]
    %v538 = vld [vmem:[#allocation5 + $0x648] sm:$0xff]
    %v539 = vld [vmem:[#allocation5 + $0x650] sm:$0xff]
    %v540 = vld [vmem:[#allocation5 + $0x658] sm:$0xff]
    %v541 = vld [vmem:[#allocation5 + $0x660] sm:$0xff]
    %v542 = vld [vmem:[#allocation5 + $0x668] sm:$0xff]
    %v543 = vld [vmem:[#allocation5 + $0x670] sm:$0xff]
    %v544 = vld [vmem:[#allocation5 + $0x678] sm:$0xff]
    %v545 = vld [vmem:[#allocation5 + $0x680] sm:$0xff]
    %v546 = vld [vmem:[#allocation5 + $0x688] sm:$0xff]
    %v547 = vld [vmem:[#allocation5 + $0x690] sm:$0xff]
    %v548 = vld [vmem:[#allocation5 + $0x698] sm:$0xff]
    %v549 = vld [vmem:[#allocation5 + $0x6a0] sm:$0xff]
    %v550 = vld [vmem:[#allocation5 + $0x6a8] sm:$0xff]
    %v551 = vld [vmem:[#allocation5 + $0x6b0] sm:$0xff]
    %v552 = vld [vmem:[#allocation5 + $0x6b8] sm:$0xff]
    %v553 = vld [vmem:[#allocation5 + $0x6c0] sm:$0xff]
    %v554 = vld [vmem:[#allocation5 + $0x6c8] sm:$0xff]
    %v555 = vld [vmem:[#allocation5 + $0x6d0] sm:$0xff]
    %v556 = vld [vmem:[#allocation5 + $0x6d8] sm:$0xff]
    %v557 = vld [vmem:[#allocation5 + $0x6e0] sm:$0xff]
    %v558 = vld [vmem:[#allocation5 + $0x6e8] sm:$0xff]
    %v559 = vld [vmem:[#allocation5 + $0x6f0] sm:$0xff]
    %v560 = vld [vmem:[#allocation5 + $0x6f8] sm:$0xff]
    %v561 = vld [vmem:[#allocation5 + $0x700] sm:$0xff]
    %v562 = vld [vmem:[#allocation5 + $0x708] sm:$0xff]
    %v563 = vld [vmem:[#allocation5 + $0x710] sm:$0xff]
    %v564 = vld [vmem:[#allocation5 + $0x718] sm:$0xff]
    %v565 = vld [vmem:[#allocation5 + $0x720] sm:$0xff]
    %v566 = vld [vmem:[#allocation5 + $0x728] sm:$0xff]
    %v567 = vld [vmem:[#allocation5 + $0x730] sm:$0xff]
    %v568 = vld [vmem:[#allocation5 + $0x738] sm:$0xff]
    %v569 = vld [vmem:[#allocation5 + $0x740] sm:$0xff]
    %v570 = vld [vmem:[#allocation5 + $0x748] sm:$0xff]
    %v571 = vld [vmem:[#allocation5 + $0x750] sm:$0xff]
    %v572 = vld [vmem:[#allocation5 + $0x758] sm:$0xff]
    %v573 = vld [vmem:[#allocation5 + $0x760] sm:$0xff]
    %v574 = vld [vmem:[#allocation5 + $0x768] sm:$0xff]
    %v575 = vld [vmem:[#allocation5 + $0x770] sm:$0xff]
    %v576 = vld [vmem:[#allocation5 + $0x778] sm:$0xff]
    %v577 = vld [vmem:[#allocation5 + $0x780] sm:$0xff]
    %v578 = vld [vmem:[#allocation5 + $0x788] sm:$0xff]
    %v579 = vld [vmem:[#allocation5 + $0x790] sm:$0xff]
    %v580 = vld [vmem:[#allocation5 + $0x798] sm:$0xff]
    %v581 = vld [vmem:[#allocation5 + $0x7a0] sm:$0xff]
    %v582 = vld [vmem:[#allocation5 + $0x7a8] sm:$0xff]
    %v583 = vld [vmem:[#allocation5 + $0x7b0] sm:$0xff]
    %v584 = vld [vmem:[#allocation5 + $0x7b8] sm:$0xff]
    %v585 = vld [vmem:[#allocation5 + $0x7c0] sm:$0xff]
    %v586 = vld [vmem:[#allocation5 + $0x7c8] sm:$0xff]
    %v587 = vld [vmem:[#allocation5 + $0x7d0] sm:$0xff]
    %v588 = vld [vmem:[#allocation5 + $0x7d8] sm:$0xff]
    %v589 = vld [vmem:[#allocation5 + $0x7e0] sm:$0xff]
    %v590 = vld [vmem:[#allocation5 + $0x7e8] sm:$0xff]
    %v591 = vld [vmem:[#allocation5 + $0x7f0] sm:$0xff]
    %v592 = vld [vmem:[#allocation5 + $0x7f8] sm:$0xff]
    %v593 = vld [vmem:[#allocation7] sm:$0xf]
    %v595 = vperm.slane %v593, 0
    %v596 = vperm.slane %v593, 1
    %v597 = vperm.slane %v593, 2
    %v598 = vperm.slane %v593, 3
    %v859 = vunpack.c.l.b16 %v337
    %v860 = vunpack.c.h.b16 %v337
    %v861 = vunpack.c.l.b16 %v338
    %v862 = vunpack.c.h.b16 %v338
    %v863 = vunpack.c.l.b16 %v339
    %v864 = vunpack.c.h.b16 %v339
    %v865 = vunpack.c.l.b16 %v340
    %v866 = vunpack.c.h.b16 %v340
    %v867 = vunpack.c.l.b16 %v341
    %v868 = vunpack.c.h.b16 %v341
    %v869 = vunpack.c.l.b16 %v342
    %v870 = vunpack.c.h.b16 %v342
    %v871 = vunpack.c.l.b16 %v343
    %v872 = vunpack.c.h.b16 %v343
    %v873 = vunpack.c.l.b16 %v344
    %v874 = vunpack.c.h.b16 %v344
    %v875 = vunpack.c.l.b16 %v345
    %v876 = vunpack.c.h.b16 %v345
    %v877 = vunpack.c.l.b16 %v346
    %v878 = vunpack.c.h.b16 %v346
    %v879 = vunpack.c.l.b16 %v347
    %v880 = vunpack.c.h.b16 %v347
    %v881 = vunpack.c.l.b16 %v348
    %v882 = vunpack.c.h.b16 %v348
    %v883 = vunpack.c.l.b16 %v349
    %v884 = vunpack.c.h.b16 %v349
    %v885 = vunpack.c.l.b16 %v350
    %v886 = vunpack.c.h.b16 %v350
    %v887 = vunpack.c.l.b16 %v351
    %v888 = vunpack.c.h.b16 %v351
    %v889 = vunpack.c.l.b16 %v352
    %v890 = vunpack.c.h.b16 %v352
    %v891 = vunpack.c.l.b16 %v353
    %v892 = vunpack.c.h.b16 %v353
    %v893 = vunpack.c.l.b16 %v354
    %v894 = vunpack.c.h.b16 %v354
    %v895 = vunpack.c.l.b16 %v355
    %v896 = vunpack.c.h.b16 %v355
    %v897 = vunpack.c.l.b16 %v356
    %v898 = vunpack.c.h.b16 %v356
    %v899 = vunpack.c.l.b16 %v357
    %v900 = vunpack.c.h.b16 %v357
    %v901 = vunpack.c.l.b16 %v358
    %v902 = vunpack.c.h.b16 %v358
    %v903 = vunpack.c.l.b16 %v359
    %v904 = vunpack.c.h.b16 %v359
    %v905 = vunpack.c.l.b16 %v360
    %v906 = vunpack.c.h.b16 %v360
    %v907 = vunpack.c.l.b16 %v361
    %v908 = vunpack.c.h.b16 %v361
    %v909 = vunpack.c.l.b16 %v362
    %v910 = vunpack.c.h.b16 %v362
    %v911 = vunpack.c.l.b16 %v363
    %v912 = vunpack.c.h.b16 %v363
    %v913 = vunpack.c.l.b16 %v364
    %v914 = vunpack.c.h.b16 %v364
    %v915 = vunpack.c.l.b16 %v365
    %v916 = vunpack.c.h.b16 %v365
    %v917 = vunpack.c.l.b16 %v366
    %v918 = vunpack.c.h.b16 %v366
    %v919 = vunpack.c.l.b16 %v367
    %v920 = vunpack.c.h.b16 %v367
    %v921 = vunpack.c.l.b16 %v368
    %v922 = vunpack.c.h.b16 %v368
    %v923 = vunpack.c.l.b16 %v369
    %v924 = vunpack.c.h.b16 %v369
    %v925 = vunpack.c.l.b16 %v370
    %v926 = vunpack.c.h.b16 %v370
    %v927 = vunpack.c.l.b16 %v371
    %v928 = vunpack.c.h.b16 %v371
    %v929 = vunpack.c.l.b16 %v372
    %v930 = vunpack.c.h.b16 %v372
    %v931 = vunpack.c.l.b16 %v373
    %v932 = vunpack.c.h.b16 %v373
    %v933 = vunpack.c.l.b16 %v374
    %v934 = vunpack.c.h.b16 %v374
    %v935 = vunpack.c.l.b16 %v375
    %v936 = vunpack.c.h.b16 %v375
    %v937 = vunpack.c.l.b16 %v376
    %v938 = vunpack.c.h.b16 %v376
    %v939 = vunpack.c.l.b16 %v377
    %v940 = vunpack.c.h.b16 %v377
    %v941 = vunpack.c.l.b16 %v378
    %v942 = vunpack.c.h.b16 %v378
    %v943 = vunpack.c.l.b16 %v379
    %v944 = vunpack.c.h.b16 %v379
    %v945 = vunpack.c.l.b16 %v380
    %v946 = vunpack.c.h.b16 %v380
    %v947 = vunpack.c.l.b16 %v381
    %v948 = vunpack.c.h.b16 %v381
    %v949 = vunpack.c.l.b16 %v382
    %v950 = vunpack.c.h.b16 %v382
    %v951 = vunpack.c.l.b16 %v383
    %v952 = vunpack.c.h.b16 %v383
    %v953 = vunpack.c.l.b16 %v384
    %v954 = vunpack.c.h.b16 %v384
    %v955 = vunpack.c.l.b16 %v385
    %v956 = vunpack.c.h.b16 %v385
    %v957 = vunpack.c.l.b16 %v386
    %v958 = vunpack.c.h.b16 %v386
    %v959 = vunpack.c.l.b16 %v387
    %v960 = vunpack.c.h.b16 %v387
    %v961 = vunpack.c.l.b16 %v388
    %v962 = vunpack.c.h.b16 %v388
    %v963 = vunpack.c.l.b16 %v389
    %v964 = vunpack.c.h.b16 %v389
    %v965 = vunpack.c.l.b16 %v390
    %v966 = vunpack.c.h.b16 %v390
    %v967 = vunpack.c.l.b16 %v391
    %v968 = vunpack.c.h.b16 %v391
    %v969 = vunpack.c.l.b16 %v392
    %v970 = vunpack.c.h.b16 %v392
    %v971 = vunpack.c.l.b16 %v393
    %v972 = vunpack.c.h.b16 %v393
    %v973 = vunpack.c.l.b16 %v394
    %v974 = vunpack.c.h.b16 %v394
    %v975 = vunpack.c.l.b16 %v395
    %v976 = vunpack.c.h.b16 %v395
    %v977 = vunpack.c.l.b16 %v396
    %v978 = vunpack.c.h.b16 %v396
    %v979 = vunpack.c.l.b16 %v397
    %v980 = vunpack.c.h.b16 %v397
    %v981 = vunpack.c.l.b16 %v398
    %v982 = vunpack.c.h.b16 %v398
    %v983 = vunpack.c.l.b16 %v399
    %v984 = vunpack.c.h.b16 %v399
    %v985 = vunpack.c.l.b16 %v400
    %v986 = vunpack.c.h.b16 %v400
    %v987 = vunpack.c.l.b16 %v401
    %v988 = vunpack.c.h.b16 %v401
    %v989 = vunpack.c.l.b16 %v402
    %v990 = vunpack.c.h.b16 %v402
    %v991 = vunpack.c.l.b16 %v403
    %v992 = vunpack.c.h.b16 %v403
    %v993 = vunpack.c.l.b16 %v404
    %v994 = vunpack.c.h.b16 %v404
    %v995 = vunpack.c.l.b16 %v405
    %v996 = vunpack.c.h.b16 %v405
    %v997 = vunpack.c.l.b16 %v406
    %v998 = vunpack.c.h.b16 %v406
    %v999 = vunpack.c.l.b16 %v407
    %v1000 = vunpack.c.h.b16 %v407
    %v1001 = vunpack.c.l.b16 %v408
    %v1002 = vunpack.c.h.b16 %v408
    %v1003 = vunpack.c.l.b16 %v409
    %v1004 = vunpack.c.h.b16 %v409
    %v1005 = vunpack.c.l.b16 %v410
    %v1006 = vunpack.c.h.b16 %v410
    %v1007 = vunpack.c.l.b16 %v411
    %v1008 = vunpack.c.h.b16 %v411
    %v1009 = vunpack.c.l.b16 %v412
    %v1010 = vunpack.c.h.b16 %v412
    %v1011 = vunpack.c.l.b16 %v413
    %v1012 = vunpack.c.h.b16 %v413
    %v1013 = vunpack.c.l.b16 %v414
    %v1014 = vunpack.c.h.b16 %v414
    %v1015 = vunpack.c.l.b16 %v415
    %v1016 = vunpack.c.h.b16 %v415
    %v1017 = vunpack.c.l.b16 %v416
    %v1018 = vunpack.c.h.b16 %v416
    %v1019 = vunpack.c.l.b16 %v417
    %v1020 = vunpack.c.h.b16 %v417
    %v1021 = vunpack.c.l.b16 %v418
    %v1022 = vunpack.c.h.b16 %v418
    %v1023 = vunpack.c.l.b16 %v419
    %v1024 = vunpack.c.h.b16 %v419
    %v1025 = vunpack.c.l.b16 %v420
    %v1026 = vunpack.c.h.b16 %v420
    %v1027 = vunpack.c.l.b16 %v421
    %v1028 = vunpack.c.h.b16 %v421
    %v1029 = vunpack.c.l.b16 %v422
    %v1030 = vunpack.c.h.b16 %v422
    %v1031 = vunpack.c.l.b16 %v423
    %v1032 = vunpack.c.h.b16 %v423
    %v1033 = vunpack.c.l.b16 %v424
    %v1034 = vunpack.c.h.b16 %v424
    %v1035 = vunpack.c.l.b16 %v425
    %v1036 = vunpack.c.h.b16 %v425
    %v1037 = vunpack.c.l.b16 %v426
    %v1038 = vunpack.c.h.b16 %v426
    %v1039 = vunpack.c.l.b16 %v427
    %v1040 = vunpack.c.h.b16 %v427
    %v1041 = vunpack.c.l.b16 %v428
    %v1042 = vunpack.c.h.b16 %v428
    %v1043 = vunpack.c.l.b16 %v429
    %v1044 = vunpack.c.h.b16 %v429
    %v1045 = vunpack.c.l.b16 %v430
    %v1046 = vunpack.c.h.b16 %v430
    %v1047 = vunpack.c.l.b16 %v431
    %v1048 = vunpack.c.h.b16 %v431
    %v1049 = vunpack.c.l.b16 %v432
    %v1050 = vunpack.c.h.b16 %v432
    %v1051 = vunpack.c.l.b16 %v433
    %v1052 = vunpack.c.h.b16 %v433
    %v1053 = vunpack.c.l.b16 %v434
    %v1054 = vunpack.c.h.b16 %v434
    %v1055 = vunpack.c.l.b16 %v435
    %v1056 = vunpack.c.h.b16 %v435
    %v1057 = vunpack.c.l.b16 %v436
    %v1058 = vunpack.c.h.b16 %v436
    %v1059 = vunpack.c.l.b16 %v437
    %v1060 = vunpack.c.h.b16 %v437
    %v1061 = vunpack.c.l.b16 %v438
    %v1062 = vunpack.c.h.b16 %v438
    %v1063 = vunpack.c.l.b16 %v439
    %v1064 = vunpack.c.h.b16 %v439
    %v1065 = vunpack.c.l.b16 %v440
    %v1066 = vunpack.c.h.b16 %v440
    %v1067 = vunpack.c.l.b16 %v441
    %v1068 = vunpack.c.h.b16 %v441
    %v1069 = vunpack.c.l.b16 %v442
    %v1070 = vunpack.c.h.b16 %v442
    %v1071 = vunpack.c.l.b16 %v443
    %v1072 = vunpack.c.h.b16 %v443
    %v1073 = vunpack.c.l.b16 %v444
    %v1074 = vunpack.c.h.b16 %v444
    %v1075 = vunpack.c.l.b16 %v445
    %v1076 = vunpack.c.h.b16 %v445
    %v1077 = vunpack.c.l.b16 %v446
    %v1078 = vunpack.c.h.b16 %v446
    %v1079 = vunpack.c.l.b16 %v447
    %v1080 = vunpack.c.h.b16 %v447
    %v1081 = vunpack.c.l.b16 %v448
    %v1082 = vunpack.c.h.b16 %v448
    %v1083 = vunpack.c.l.b16 %v449
    %v1084 = vunpack.c.h.b16 %v449
    %v1085 = vunpack.c.l.b16 %v450
    %v1086 = vunpack.c.h.b16 %v450
    %v1087 = vunpack.c.l.b16 %v451
    %v1088 = vunpack.c.h.b16 %v451
    %v1089 = vunpack.c.l.b16 %v452
    %v1090 = vunpack.c.h.b16 %v452
    %v1091 = vunpack.c.l.b16 %v453
    %v1092 = vunpack.c.h.b16 %v453
    %v1093 = vunpack.c.l.b16 %v454
    %v1094 = vunpack.c.h.b16 %v454
    %v1095 = vunpack.c.l.b16 %v455
    %v1096 = vunpack.c.h.b16 %v455
    %v1097 = vunpack.c.l.b16 %v456
    %v1098 = vunpack.c.h.b16 %v456
    %v1099 = vunpack.c.l.b16 %v457
    %v1100 = vunpack.c.h.b16 %v457
    %v1101 = vunpack.c.l.b16 %v458
    %v1102 = vunpack.c.h.b16 %v458
    %v1103 = vunpack.c.l.b16 %v459
    %v1104 = vunpack.c.h.b16 %v459
    %v1105 = vunpack.c.l.b16 %v460
    %v1106 = vunpack.c.h.b16 %v460
    %v1107 = vunpack.c.l.b16 %v461
    %v1108 = vunpack.c.h.b16 %v461
    %v1109 = vunpack.c.l.b16 %v462
    %v1110 = vunpack.c.h.b16 %v462
    %v1111 = vunpack.c.l.b16 %v463
    %v1112 = vunpack.c.h.b16 %v463
    %v1113 = vunpack.c.l.b16 %v464
    %v1114 = vunpack.c.h.b16 %v464
    %v1115 = vunpack.c.l.b16 %v465
    %v1116 = vunpack.c.h.b16 %v465
    %v1117 = vunpack.c.l.b16 %v466
    %v1118 = vunpack.c.h.b16 %v466
    %v1119 = vunpack.c.l.b16 %v467
    %v1120 = vunpack.c.h.b16 %v467
    %v1121 = vunpack.c.l.b16 %v468
    %v1122 = vunpack.c.h.b16 %v468
    %v1123 = vunpack.c.l.b16 %v469
    %v1124 = vunpack.c.h.b16 %v469
    %v1125 = vunpack.c.l.b16 %v470
    %v1126 = vunpack.c.h.b16 %v470
    %v1127 = vunpack.c.l.b16 %v471
    %v1128 = vunpack.c.h.b16 %v471
    %v1129 = vunpack.c.l.b16 %v472
    %v1130 = vunpack.c.h.b16 %v472
    %v1131 = vunpack.c.l.b16 %v473
    %v1132 = vunpack.c.h.b16 %v473
    %v1133 = vunpack.c.l.b16 %v474
    %v1134 = vunpack.c.h.b16 %v474
    %v1135 = vunpack.c.l.b16 %v475
    %v1136 = vunpack.c.h.b16 %v475
    %v1137 = vunpack.c.l.b16 %v476
    %v1138 = vunpack.c.h.b16 %v476
    %v1139 = vunpack.c.l.b16 %v477
    %v1140 = vunpack.c.h.b16 %v477
    %v1141 = vunpack.c.l.b16 %v478
    %v1142 = vunpack.c.h.b16 %v478
    %v1143 = vunpack.c.l.b16 %v479
    %v1144 = vunpack.c.h.b16 %v479
    %v1145 = vunpack.c.l.b16 %v480
    %v1146 = vunpack.c.h.b16 %v480
    %v1147 = vunpack.c.l.b16 %v481
    %v1148 = vunpack.c.h.b16 %v481
    %v1149 = vunpack.c.l.b16 %v482
    %v1150 = vunpack.c.h.b16 %v482
    %v1151 = vunpack.c.l.b16 %v483
    %v1152 = vunpack.c.h.b16 %v483
    %v1153 = vunpack.c.l.b16 %v484
    %v1154 = vunpack.c.h.b16 %v484
    %v1155 = vunpack.c.l.b16 %v485
    %v1156 = vunpack.c.h.b16 %v485
    %v1157 = vunpack.c.l.b16 %v486
    %v1158 = vunpack.c.h.b16 %v486
    %v1159 = vunpack.c.l.b16 %v487
    %v1160 = vunpack.c.h.b16 %v487
    %v1161 = vunpack.c.l.b16 %v488
    %v1162 = vunpack.c.h.b16 %v488
    %v1163 = vunpack.c.l.b16 %v489
    %v1164 = vunpack.c.h.b16 %v489
    %v1165 = vunpack.c.l.b16 %v490
    %v1166 = vunpack.c.h.b16 %v490
    %v1167 = vunpack.c.l.b16 %v491
    %v1168 = vunpack.c.h.b16 %v491
    %v1169 = vunpack.c.l.b16 %v492
    %v1170 = vunpack.c.h.b16 %v492
    %v1171 = vunpack.c.l.b16 %v493
    %v1172 = vunpack.c.h.b16 %v493
    %v1173 = vunpack.c.l.b16 %v494
    %v1174 = vunpack.c.h.b16 %v494
    %v1175 = vunpack.c.l.b16 %v495
    %v1176 = vunpack.c.h.b16 %v495
    %v1177 = vunpack.c.l.b16 %v496
    %v1178 = vunpack.c.h.b16 %v496
    %v1179 = vunpack.c.l.b16 %v497
    %v1180 = vunpack.c.h.b16 %v497
    %v1181 = vunpack.c.l.b16 %v498
    %v1182 = vunpack.c.h.b16 %v498
    %v1183 = vunpack.c.l.b16 %v499
    %v1184 = vunpack.c.h.b16 %v499
    %v1185 = vunpack.c.l.b16 %v500
    %v1186 = vunpack.c.h.b16 %v500
    %v1187 = vunpack.c.l.b16 %v501
    %v1188 = vunpack.c.h.b16 %v501
    %v1189 = vunpack.c.l.b16 %v502
    %v1190 = vunpack.c.h.b16 %v502
    %v1191 = vunpack.c.l.b16 %v503
    %v1192 = vunpack.c.h.b16 %v503
    %v1193 = vunpack.c.l.b16 %v504
    %v1194 = vunpack.c.h.b16 %v504
    %v1195 = vunpack.c.l.b16 %v505
    %v1196 = vunpack.c.h.b16 %v505
    %v1197 = vunpack.c.l.b16 %v506
    %v1198 = vunpack.c.h.b16 %v506
    %v1199 = vunpack.c.l.b16 %v507
    %v1200 = vunpack.c.h.b16 %v507
    %v1201 = vunpack.c.l.b16 %v508
    %v1202 = vunpack.c.h.b16 %v508
    %v1203 = vunpack.c.l.b16 %v509
    %v1204 = vunpack.c.h.b16 %v509
    %v1205 = vunpack.c.l.b16 %v510
    %v1206 = vunpack.c.h.b16 %v510
    %v1207 = vunpack.c.l.b16 %v511
    %v1208 = vunpack.c.h.b16 %v511
    %v1209 = vunpack.c.l.b16 %v512
    %v1210 = vunpack.c.h.b16 %v512
    %v1211 = vunpack.c.l.b16 %v513
    %v1212 = vunpack.c.h.b16 %v513
    %v1213 = vunpack.c.l.b16 %v514
    %v1214 = vunpack.c.h.b16 %v514
    %v1215 = vunpack.c.l.b16 %v515
    %v1216 = vunpack.c.h.b16 %v515
    %v1217 = vunpack.c.l.b16 %v516
    %v1218 = vunpack.c.h.b16 %v516
    %v1219 = vunpack.c.l.b16 %v517
    %v1220 = vunpack.c.h.b16 %v517
    %v1221 = vunpack.c.l.b16 %v518
    %v1222 = vunpack.c.h.b16 %v518
    %v1223 = vunpack.c.l.b16 %v519
    %v1224 = vunpack.c.h.b16 %v519
    %v1225 = vunpack.c.l.b16 %v520
    %v1226 = vunpack.c.h.b16 %v520
    %v1227 = vunpack.c.l.b16 %v521
    %v1228 = vunpack.c.h.b16 %v521
    %v1229 = vunpack.c.l.b16 %v522
    %v1230 = vunpack.c.h.b16 %v522
    %v1231 = vunpack.c.l.b16 %v523
    %v1232 = vunpack.c.h.b16 %v523
    %v1233 = vunpack.c.l.b16 %v524
    %v1234 = vunpack.c.h.b16 %v524
    %v1235 = vunpack.c.l.b16 %v525
    %v1236 = vunpack.c.h.b16 %v525
    %v1237 = vunpack.c.l.b16 %v526
    %v1238 = vunpack.c.h.b16 %v526
    %v1239 = vunpack.c.l.b16 %v527
    %v1240 = vunpack.c.h.b16 %v527
    %v1241 = vunpack.c.l.b16 %v528
    %v1242 = vunpack.c.h.b16 %v528
    %v1243 = vunpack.c.l.b16 %v529
    %v1244 = vunpack.c.h.b16 %v529
    %v1245 = vunpack.c.l.b16 %v530
    %v1246 = vunpack.c.h.b16 %v530
    %v1247 = vunpack.c.l.b16 %v531
    %v1248 = vunpack.c.h.b16 %v531
    %v1249 = vunpack.c.l.b16 %v532
    %v1250 = vunpack.c.h.b16 %v532
    %v1251 = vunpack.c.l.b16 %v533
    %v1252 = vunpack.c.h.b16 %v533
    %v1253 = vunpack.c.l.b16 %v534
    %v1254 = vunpack.c.h.b16 %v534
    %v1255 = vunpack.c.l.b16 %v535
    %v1256 = vunpack.c.h.b16 %v535
    %v1257 = vunpack.c.l.b16 %v536
    %v1258 = vunpack.c.h.b16 %v536
    %v1259 = vunpack.c.l.b16 %v537
    %v1260 = vunpack.c.h.b16 %v537
    %v1261 = vunpack.c.l.b16 %v538
    %v1262 = vunpack.c.h.b16 %v538
    %v1263 = vunpack.c.l.b16 %v539
    %v1264 = vunpack.c.h.b16 %v539
    %v1265 = vunpack.c.l.b16 %v540
    %v1266 = vunpack.c.h.b16 %v540
    %v1267 = vunpack.c.l.b16 %v541
    %v1268 = vunpack.c.h.b16 %v541
    %v1269 = vunpack.c.l.b16 %v542
    %v1270 = vunpack.c.h.b16 %v542
    %v1271 = vunpack.c.l.b16 %v543
    %v1272 = vunpack.c.h.b16 %v543
    %v1273 = vunpack.c.l.b16 %v544
    %v1274 = vunpack.c.h.b16 %v544
    %v1275 = vunpack.c.l.b16 %v545
    %v1276 = vunpack.c.h.b16 %v545
    %v1277 = vunpack.c.l.b16 %v546
    %v1278 = vunpack.c.h.b16 %v546
    %v1279 = vunpack.c.l.b16 %v547
    %v1280 = vunpack.c.h.b16 %v547
    %v1281 = vunpack.c.l.b16 %v548
    %v1282 = vunpack.c.h.b16 %v548
    %v1283 = vunpack.c.l.b16 %v549
    %v1284 = vunpack.c.h.b16 %v549
    %v1285 = vunpack.c.l.b16 %v550
    %v1286 = vunpack.c.h.b16 %v550
    %v1287 = vunpack.c.l.b16 %v551
    %v1288 = vunpack.c.h.b16 %v551
    %v1289 = vunpack.c.l.b16 %v552
    %v1290 = vunpack.c.h.b16 %v552
    %v1291 = vunpack.c.l.b16 %v553
    %v1292 = vunpack.c.h.b16 %v553
    %v1293 = vunpack.c.l.b16 %v554
    %v1294 = vunpack.c.h.b16 %v554
    %v1295 = vunpack.c.l.b16 %v555
    %v1296 = vunpack.c.h.b16 %v555
    %v1297 = vunpack.c.l.b16 %v556
    %v1298 = vunpack.c.h.b16 %v556
    %v1299 = vunpack.c.l.b16 %v557
    %v1300 = vunpack.c.h.b16 %v557
    %v1301 = vunpack.c.l.b16 %v558
    %v1302 = vunpack.c.h.b16 %v558
    %v1303 = vunpack.c.l.b16 %v559
    %v1304 = vunpack.c.h.b16 %v559
    %v1305 = vunpack.c.l.b16 %v560
    %v1306 = vunpack.c.h.b16 %v560
    %v1307 = vunpack.c.l.b16 %v561
    %v1308 = vunpack.c.h.b16 %v561
    %v1309 = vunpack.c.l.b16 %v562
    %v1310 = vunpack.c.h.b16 %v562
    %v1311 = vunpack.c.l.b16 %v563
    %v1312 = vunpack.c.h.b16 %v563
    %v1313 = vunpack.c.l.b16 %v564
    %v1314 = vunpack.c.h.b16 %v564
    %v1315 = vunpack.c.l.b16 %v565
    %v1316 = vunpack.c.h.b16 %v565
    %v1317 = vunpack.c.l.b16 %v566
    %v1318 = vunpack.c.h.b16 %v566
    %v1319 = vunpack.c.l.b16 %v567
    %v1320 = vunpack.c.h.b16 %v567
    %v1321 = vunpack.c.l.b16 %v568
    %v1322 = vunpack.c.h.b16 %v568
    %v1323 = vunpack.c.l.b16 %v569
    %v1324 = vunpack.c.h.b16 %v569
    %v1325 = vunpack.c.l.b16 %v570
    %v1326 = vunpack.c.h.b16 %v570
    %v1327 = vunpack.c.l.b16 %v571
    %v1328 = vunpack.c.h.b16 %v571
    %v1329 = vunpack.c.l.b16 %v572
    %v1330 = vunpack.c.h.b16 %v572
    %v1331 = vunpack.c.l.b16 %v573
    %v1332 = vunpack.c.h.b16 %v573
    %v1333 = vunpack.c.l.b16 %v574
    %v1334 = vunpack.c.h.b16 %v574
    %v1335 = vunpack.c.l.b16 %v575
    %v1336 = vunpack.c.h.b16 %v575
    %v1337 = vunpack.c.l.b16 %v576
    %v1338 = vunpack.c.h.b16 %v576
    %v1339 = vunpack.c.l.b16 %v577
    %v1340 = vunpack.c.h.b16 %v577
    %v1341 = vunpack.c.l.b16 %v578
    %v1342 = vunpack.c.h.b16 %v578
    %v1343 = vunpack.c.l.b16 %v579
    %v1344 = vunpack.c.h.b16 %v579
    %v1345 = vunpack.c.l.b16 %v580
    %v1346 = vunpack.c.h.b16 %v580
    %v1347 = vunpack.c.l.b16 %v581
    %v1348 = vunpack.c.h.b16 %v581
    %v1349 = vunpack.c.l.b16 %v582
    %v1350 = vunpack.c.h.b16 %v582
    %v1351 = vunpack.c.l.b16 %v583
    %v1352 = vunpack.c.h.b16 %v583
    %v1353 = vunpack.c.l.b16 %v584
    %v1354 = vunpack.c.h.b16 %v584
    %v1355 = vunpack.c.l.b16 %v585
    %v1356 = vunpack.c.h.b16 %v585
    %v1357 = vunpack.c.l.b16 %v586
    %v1358 = vunpack.c.h.b16 %v586
    %v1359 = vunpack.c.l.b16 %v587
    %v1360 = vunpack.c.h.b16 %v587
    %v1361 = vunpack.c.l.b16 %v588
    %v1362 = vunpack.c.h.b16 %v588
    %v1363 = vunpack.c.l.b16 %v589
    %v1364 = vunpack.c.h.b16 %v589
    %v1365 = vunpack.c.l.b16 %v590
    %v1366 = vunpack.c.h.b16 %v590
    %v1367 = vunpack.c.l.b16 %v591
    %v1368 = vunpack.c.h.b16 %v591
    %v1369 = vunpack.c.l.b16 %v592
    %v1370 = vunpack.c.h.b16 %v592
    %v1371 = vpack.c.b16 %v863, %v859
    %v1372 = vpack.c.b16 %v864, %v860
    %v1373 = vpack.c.b16 %v865, %v861
    %v1374 = vpack.c.b16 %v866, %v862
    %v1375 = vpack.c.b16 %v871, %v867
    %v1376 = vpack.c.b16 %v872, %v868
    %v1377 = vpack.c.b16 %v873, %v869
    %v1378 = vpack.c.b16 %v874, %v870
    %v1379 = vpack.c.b16 %v879, %v875
    %v1380 = vpack.c.b16 %v880, %v876
    %v1381 = vpack.c.b16 %v881, %v877
    %v1382 = vpack.c.b16 %v882, %v878
    %v1383 = vpack.c.b16 %v887, %v883
    %v1384 = vpack.c.b16 %v888, %v884
    %v1385 = vpack.c.b16 %v889, %v885
    %v1386 = vpack.c.b16 %v890, %v886
    %v1387 = vpack.c.b16 %v895, %v891
    %v1388 = vpack.c.b16 %v896, %v892
    %v1389 = vpack.c.b16 %v897, %v893
    %v1390 = vpack.c.b16 %v898, %v894
    %v1391 = vpack.c.b16 %v903, %v899
    %v1392 = vpack.c.b16 %v904, %v900
    %v1393 = vpack.c.b16 %v905, %v901
    %v1394 = vpack.c.b16 %v906, %v902
    %v1395 = vpack.c.b16 %v911, %v907
    %v1396 = vpack.c.b16 %v912, %v908
    %v1397 = vpack.c.b16 %v913, %v909
    %v1398 = vpack.c.b16 %v914, %v910
    %v1399 = vpack.c.b16 %v919, %v915
    %v1400 = vpack.c.b16 %v920, %v916
    %v1401 = vpack.c.b16 %v921, %v917
    %v1402 = vpack.c.b16 %v922, %v918
    %v1403 = vpack.c.b16 %v927, %v923
    %v1404 = vpack.c.b16 %v928, %v924
    %v1405 = vpack.c.b16 %v929, %v925
    %v1406 = vpack.c.b16 %v930, %v926
    %v1407 = vpack.c.b16 %v935, %v931
    %v1408 = vpack.c.b16 %v936, %v932
    %v1409 = vpack.c.b16 %v937, %v933
    %v1410 = vpack.c.b16 %v938, %v934
    %v1411 = vpack.c.b16 %v943, %v939
    %v1412 = vpack.c.b16 %v944, %v940
    %v1413 = vpack.c.b16 %v945, %v941
    %v1414 = vpack.c.b16 %v946, %v942
    %v1415 = vpack.c.b16 %v951, %v947
    %v1416 = vpack.c.b16 %v952, %v948
    %v1417 = vpack.c.b16 %v953, %v949
    %v1418 = vpack.c.b16 %v954, %v950
    %v1419 = vpack.c.b16 %v959, %v955
    %v1420 = vpack.c.b16 %v960, %v956
    %v1421 = vpack.c.b16 %v961, %v957
    %v1422 = vpack.c.b16 %v962, %v958
    %v1423 = vpack.c.b16 %v967, %v963
    %v1424 = vpack.c.b16 %v968, %v964
    %v1425 = vpack.c.b16 %v969, %v965
    %v1426 = vpack.c.b16 %v970, %v966
    %v1427 = vpack.c.b16 %v975, %v971
    %v1428 = vpack.c.b16 %v976, %v972
    %v1429 = vpack.c.b16 %v977, %v973
    %v1430 = vpack.c.b16 %v978, %v974
    %v1431 = vpack.c.b16 %v983, %v979
    %v1432 = vpack.c.b16 %v984, %v980
    %v1433 = vpack.c.b16 %v985, %v981
    %v1434 = vpack.c.b16 %v986, %v982
    %v1435 = vpack.c.b16 %v991, %v987
    %v1436 = vpack.c.b16 %v992, %v988
    %v1437 = vpack.c.b16 %v993, %v989
    %v1438 = vpack.c.b16 %v994, %v990
    %v1439 = vpack.c.b16 %v999, %v995
    %v1440 = vpack.c.b16 %v1000, %v996
    %v1441 = vpack.c.b16 %v1001, %v997
    %v1442 = vpack.c.b16 %v1002, %v998
    %v1443 = vpack.c.b16 %v1007, %v1003
    %v1444 = vpack.c.b16 %v1008, %v1004
    %v1445 = vpack.c.b16 %v1009, %v1005
    %v1446 = vpack.c.b16 %v1010, %v1006
    %v1447 = vpack.c.b16 %v1015, %v1011
    %v1448 = vpack.c.b16 %v1016, %v1012
    %v1449 = vpack.c.b16 %v1017, %v1013
    %v1450 = vpack.c.b16 %v1018, %v1014
    %v1451 = vpack.c.b16 %v1023, %v1019
    %v1452 = vpack.c.b16 %v1024, %v1020
    %v1453 = vpack.c.b16 %v1025, %v1021
    %v1454 = vpack.c.b16 %v1026, %v1022
    %v1455 = vpack.c.b16 %v1031, %v1027
    %v1456 = vpack.c.b16 %v1032, %v1028
    %v1457 = vpack.c.b16 %v1033, %v1029
    %v1458 = vpack.c.b16 %v1034, %v1030
    %v1459 = vpack.c.b16 %v1039, %v1035
    %v1460 = vpack.c.b16 %v1040, %v1036
    %v1461 = vpack.c.b16 %v1041, %v1037
    %v1462 = vpack.c.b16 %v1042, %v1038
    %v1463 = vpack.c.b16 %v1047, %v1043
    %v1464 = vpack.c.b16 %v1048, %v1044
    %v1465 = vpack.c.b16 %v1049, %v1045
    %v1466 = vpack.c.b16 %v1050, %v1046
    %v1467 = vpack.c.b16 %v1055, %v1051
    %v1468 = vpack.c.b16 %v1056, %v1052
    %v1469 = vpack.c.b16 %v1057, %v1053
    %v1470 = vpack.c.b16 %v1058, %v1054
    %v1471 = vpack.c.b16 %v1063, %v1059
    %v1472 = vpack.c.b16 %v1064, %v1060
    %v1473 = vpack.c.b16 %v1065, %v1061
    %v1474 = vpack.c.b16 %v1066, %v1062
    %v1475 = vpack.c.b16 %v1071, %v1067
    %v1476 = vpack.c.b16 %v1072, %v1068
    %v1477 = vpack.c.b16 %v1073, %v1069
    %v1478 = vpack.c.b16 %v1074, %v1070
    %v1479 = vpack.c.b16 %v1079, %v1075
    %v1480 = vpack.c.b16 %v1080, %v1076
    %v1481 = vpack.c.b16 %v1081, %v1077
    %v1482 = vpack.c.b16 %v1082, %v1078
    %v1483 = vpack.c.b16 %v1087, %v1083
    %v1484 = vpack.c.b16 %v1088, %v1084
    %v1485 = vpack.c.b16 %v1089, %v1085
    %v1486 = vpack.c.b16 %v1090, %v1086
    %v1487 = vpack.c.b16 %v1095, %v1091
    %v1488 = vpack.c.b16 %v1096, %v1092
    %v1489 = vpack.c.b16 %v1097, %v1093
    %v1490 = vpack.c.b16 %v1098, %v1094
    %v1491 = vpack.c.b16 %v1103, %v1099
    %v1492 = vpack.c.b16 %v1104, %v1100
    %v1493 = vpack.c.b16 %v1105, %v1101
    %v1494 = vpack.c.b16 %v1106, %v1102
    %v1495 = vpack.c.b16 %v1111, %v1107
    %v1496 = vpack.c.b16 %v1112, %v1108
    %v1497 = vpack.c.b16 %v1113, %v1109
    %v1498 = vpack.c.b16 %v1114, %v1110
    %v1499 = vpack.c.b16 %v1119, %v1115
    %v1500 = vpack.c.b16 %v1120, %v1116
    %v1501 = vpack.c.b16 %v1121, %v1117
    %v1502 = vpack.c.b16 %v1122, %v1118
    %v1503 = vpack.c.b16 %v1127, %v1123
    %v1504 = vpack.c.b16 %v1128, %v1124
    %v1505 = vpack.c.b16 %v1129, %v1125
    %v1506 = vpack.c.b16 %v1130, %v1126
    %v1507 = vpack.c.b16 %v1135, %v1131
    %v1508 = vpack.c.b16 %v1136, %v1132
    %v1509 = vpack.c.b16 %v1137, %v1133
    %v1510 = vpack.c.b16 %v1138, %v1134
    %v1511 = vpack.c.b16 %v1143, %v1139
    %v1512 = vpack.c.b16 %v1144, %v1140
    %v1513 = vpack.c.b16 %v1145, %v1141
    %v1514 = vpack.c.b16 %v1146, %v1142
    %v1515 = vpack.c.b16 %v1151, %v1147
    %v1516 = vpack.c.b16 %v1152, %v1148
    %v1517 = vpack.c.b16 %v1153, %v1149
    %v1518 = vpack.c.b16 %v1154, %v1150
    %v1519 = vpack.c.b16 %v1159, %v1155
    %v1520 = vpack.c.b16 %v1160, %v1156
    %v1521 = vpack.c.b16 %v1161, %v1157
    %v1522 = vpack.c.b16 %v1162, %v1158
    %v1523 = vpack.c.b16 %v1167, %v1163
    %v1524 = vpack.c.b16 %v1168, %v1164
    %v1525 = vpack.c.b16 %v1169, %v1165
    %v1526 = vpack.c.b16 %v1170, %v1166
    %v1527 = vpack.c.b16 %v1175, %v1171
    %v1528 = vpack.c.b16 %v1176, %v1172
    %v1529 = vpack.c.b16 %v1177, %v1173
    %v1530 = vpack.c.b16 %v1178, %v1174
    %v1531 = vpack.c.b16 %v1183, %v1179
    %v1532 = vpack.c.b16 %v1184, %v1180
    %v1533 = vpack.c.b16 %v1185, %v1181
    %v1534 = vpack.c.b16 %v1186, %v1182
    %v1535 = vpack.c.b16 %v1191, %v1187
    %v1536 = vpack.c.b16 %v1192, %v1188
    %v1537 = vpack.c.b16 %v1193, %v1189
    %v1538 = vpack.c.b16 %v1194, %v1190
    %v1539 = vpack.c.b16 %v1199, %v1195
    %v1540 = vpack.c.b16 %v1200, %v1196
    %v1541 = vpack.c.b16 %v1201, %v1197
    %v1542 = vpack.c.b16 %v1202, %v1198
    %v1543 = vpack.c.b16 %v1207, %v1203
    %v1544 = vpack.c.b16 %v1208, %v1204
    %v1545 = vpack.c.b16 %v1209, %v1205
    %v1546 = vpack.c.b16 %v1210, %v1206
    %v1547 = vpack.c.b16 %v1215, %v1211
    %v1548 = vpack.c.b16 %v1216, %v1212
    %v1549 = vpack.c.b16 %v1217, %v1213
    %v1550 = vpack.c.b16 %v1218, %v1214
    %v1551 = vpack.c.b16 %v1223, %v1219
    %v1552 = vpack.c.b16 %v1224, %v1220
    %v1553 = vpack.c.b16 %v1225, %v1221
    %v1554 = vpack.c.b16 %v1226, %v1222
    %v1555 = vpack.c.b16 %v1231, %v1227
    %v1556 = vpack.c.b16 %v1232, %v1228
    %v1557 = vpack.c.b16 %v1233, %v1229
    %v1558 = vpack.c.b16 %v1234, %v1230
    %v1559 = vpack.c.b16 %v1239, %v1235
    %v1560 = vpack.c.b16 %v1240, %v1236
    %v1561 = vpack.c.b16 %v1241, %v1237
    %v1562 = vpack.c.b16 %v1242, %v1238
    %v1563 = vpack.c.b16 %v1247, %v1243
    %v1564 = vpack.c.b16 %v1248, %v1244
    %v1565 = vpack.c.b16 %v1249, %v1245
    %v1566 = vpack.c.b16 %v1250, %v1246
    %v1567 = vpack.c.b16 %v1255, %v1251
    %v1568 = vpack.c.b16 %v1256, %v1252
    %v1569 = vpack.c.b16 %v1257, %v1253
    %v1570 = vpack.c.b16 %v1258, %v1254
    %v1571 = vpack.c.b16 %v1263, %v1259
    %v1572 = vpack.c.b16 %v1264, %v1260
    %v1573 = vpack.c.b16 %v1265, %v1261
    %v1574 = vpack.c.b16 %v1266, %v1262
    %v1575 = vpack.c.b16 %v1271, %v1267
    %v1576 = vpack.c.b16 %v1272, %v1268
    %v1577 = vpack.c.b16 %v1273, %v1269
    %v1578 = vpack.c.b16 %v1274, %v1270
    %v1579 = vpack.c.b16 %v1279, %v1275
    %v1580 = vpack.c.b16 %v1280, %v1276
    %v1581 = vpack.c.b16 %v1281, %v1277
    %v1582 = vpack.c.b16 %v1282, %v1278
    %v1583 = vpack.c.b16 %v1287, %v1283
    %v1584 = vpack.c.b16 %v1288, %v1284
    %v1585 = vpack.c.b16 %v1289, %v1285
    %v1586 = vpack.c.b16 %v1290, %v1286
    %v1587 = vpack.c.b16 %v1295, %v1291
    %v1588 = vpack.c.b16 %v1296, %v1292
    %v1589 = vpack.c.b16 %v1297, %v1293
    %v1590 = vpack.c.b16 %v1298, %v1294
    %v1591 = vpack.c.b16 %v1303, %v1299
    %v1592 = vpack.c.b16 %v1304, %v1300
    %v1593 = vpack.c.b16 %v1305, %v1301
    %v1594 = vpack.c.b16 %v1306, %v1302
    %v1595 = vpack.c.b16 %v1311, %v1307
    %v1596 = vpack.c.b16 %v1312, %v1308
    %v1597 = vpack.c.b16 %v1313, %v1309
    %v1598 = vpack.c.b16 %v1314, %v1310
    %v1599 = vpack.c.b16 %v1319, %v1315
    %v1600 = vpack.c.b16 %v1320, %v1316
    %v1601 = vpack.c.b16 %v1321, %v1317
    %v1602 = vpack.c.b16 %v1322, %v1318
    %v1603 = vpack.c.b16 %v1327, %v1323
    %v1604 = vpack.c.b16 %v1328, %v1324
    %v1605 = vpack.c.b16 %v1329, %v1325
    %v1606 = vpack.c.b16 %v1330, %v1326
    %v1607 = vpack.c.b16 %v1335, %v1331
    %v1608 = vpack.c.b16 %v1336, %v1332
    %v1609 = vpack.c.b16 %v1337, %v1333
    %v1610 = vpack.c.b16 %v1338, %v1334
    %v1611 = vpack.c.b16 %v1343, %v1339
    %v1612 = vpack.c.b16 %v1344, %v1340
    %v1613 = vpack.c.b16 %v1345, %v1341
    %v1614 = vpack.c.b16 %v1346, %v1342
    %v1615 = vpack.c.b16 %v1351, %v1347
    %v1616 = vpack.c.b16 %v1352, %v1348
    %v1617 = vpack.c.b16 %v1353, %v1349
    %v1618 = vpack.c.b16 %v1354, %v1350
    %v1619 = vpack.c.b16 %v1359, %v1355
    %v1620 = vpack.c.b16 %v1360, %v1356
    %v1621 = vpack.c.b16 %v1361, %v1357
    %v1622 = vpack.c.b16 %v1362, %v1358
    %v1623 = vpack.c.b16 %v1367, %v1363
    %v1624 = vpack.c.b16 %v1368, %v1364
    %v1625 = vpack.c.b16 %v1369, %v1365
    %v1626 = vpack.c.b16 %v1370, %v1366
    %1883 = vmatpush.bf16.msra.mxu0 %v1399
    %1884 = vmatpush.bf16.msra.mxu0 %v1395
    %1885 = vmatpush.bf16.msra.mxu0 %v1391
    %1886 = vmatpush.bf16.msra.mxu0 %v1387
    %1887 = vmatpush.bf16.msra.mxu0 %v1383
    %1888 = vmatpush.bf16.msra.mxu0 %v1379
    %1889 = vmatpush.bf16.msra.mxu0 %v1375
    %1890 = vmatpush.bf16.msra.mxu0 %v1371
    %1891 = vmatmul.bf16.gmra.mxu0 %v321
    %v1892 = vpop.f32.mrf.mxu0
    %v1893 = vadd.f32 %v595, %v1892
    %v1894 = vpop.f32.mrf.mxu0
    %v1895 = vadd.f32 %v595, %v1894
    %1896 = vmatmul.bf16.gmra.mxu0 %v329
    %v1897 = vpop.f32.mrf.mxu0
    %v1898 = vadd.f32 %v595, %v1897
    %v1899 = vpop.f32.mrf.mxu0
    %v1900 = vadd.f32 %v595, %v1899
    %1901 = vdwg.mxu0
    %1902 = vmatpush.bf16.msra.mxu0 %v1431
    %1903 = vmatpush.bf16.msra.mxu0 %v1427
    %1904 = vmatpush.bf16.msra.mxu0 %v1423
    %1905 = vmatpush.bf16.msra.mxu0 %v1419
    %1906 = vmatpush.bf16.msra.mxu0 %v1415
    %1907 = vmatpush.bf16.msra.mxu0 %v1411
    %1908 = vmatpush.bf16.msra.mxu0 %v1407
    %1909 = vmatpush.bf16.msra.mxu0 %v1403
    %1910 = vmatmul.bf16.gmra.mxu0 %v322
    %v1911 = vpop.f32.mrf.mxu0
    %v1912 = vadd.f32 %v1893, %v1911
    %v1913 = vpop.f32.mrf.mxu0
    %v1914 = vadd.f32 %v1895, %v1913
    %1915 = vmatmul.bf16.gmra.mxu0 %v330
    %v1916 = vpop.f32.mrf.mxu0
    %v1917 = vadd.f32 %v1898, %v1916
    %v1918 = vpop.f32.mrf.mxu0
    %v1919 = vadd.f32 %v1900, %v1918
    %1920 = vdwg.mxu0
    %1921 = vmatpush.bf16.msra.mxu0 %v1463
    %1922 = vmatpush.bf16.msra.mxu0 %v1459
    %1923 = vmatpush.bf16.msra.mxu0 %v1455
    %1924 = vmatpush.bf16.msra.mxu0 %v1451
    %1925 = vmatpush.bf16.msra.mxu0 %v1447
    %1926 = vmatpush.bf16.msra.mxu0 %v1443
    %1927 = vmatpush.bf16.msra.mxu0 %v1439
    %1928 = vmatpush.bf16.msra.mxu0 %v1435
    %1929 = vmatmul.bf16.gmra.mxu0 %v323
    %v1930 = vpop.f32.mrf.mxu0
    %v1931 = vadd.f32 %v1912, %v1930
    %v1932 = vpop.f32.mrf.mxu0
    %v1933 = vadd.f32 %v1914, %v1932
    %1934 = vmatmul.bf16.gmra.mxu0 %v331
    %v1935 = vpop.f32.mrf.mxu0
    %v1936 = vadd.f32 %v1917, %v1935
    %v1937 = vpop.f32.mrf.mxu0
    %v1938 = vadd.f32 %v1919, %v1937
    %1939 = vdwg.mxu0
    %1940 = vmatpush.bf16.msra.mxu0 %v1495
    %1941 = vmatpush.bf16.msra.mxu0 %v1491
    %1942 = vmatpush.bf16.msra.mxu0 %v1487
    %1943 = vmatpush.bf16.msra.mxu0 %v1483
    %1944 = vmatpush.bf16.msra.mxu0 %v1479
    %1945 = vmatpush.bf16.msra.mxu0 %v1475
    %1946 = vmatpush.bf16.msra.mxu0 %v1471
    %1947 = vmatpush.bf16.msra.mxu0 %v1467
    %1948 = vmatmul.bf16.gmra.mxu0 %v324
    %v1949 = vpop.f32.mrf.mxu0
    %v1950 = vadd.f32 %v1931, %v1949
    %v1951 = vpop.f32.mrf.mxu0
    %v1952 = vadd.f32 %v1933, %v1951
    %1953 = vmatmul.bf16.gmra.mxu0 %v332
    %v1954 = vpop.f32.mrf.mxu0
    %v1955 = vadd.f32 %v1936, %v1954
    %v1956 = vpop.f32.mrf.mxu0
    %v1957 = vadd.f32 %v1938, %v1956
    %1958 = vdwg.mxu0
    %1959 = vmatpush.bf16.msra.mxu0 %v1527
    %1960 = vmatpush.bf16.msra.mxu0 %v1523
    %1961 = vmatpush.bf16.msra.mxu0 %v1519
    %1962 = vmatpush.bf16.msra.mxu0 %v1515
    %1963 = vmatpush.bf16.msra.mxu0 %v1511
    %1964 = vmatpush.bf16.msra.mxu0 %v1507
    %1965 = vmatpush.bf16.msra.mxu0 %v1503
    %1966 = vmatpush.bf16.msra.mxu0 %v1499
    %1967 = vmatmul.bf16.gmra.mxu0 %v325
    %v1968 = vpop.f32.mrf.mxu0
    %v1969 = vadd.f32 %v1950, %v1968
    %v1970 = vpop.f32.mrf.mxu0
    %v1971 = vadd.f32 %v1952, %v1970
    %1972 = vmatmul.bf16.gmra.mxu0 %v333
    %v1973 = vpop.f32.mrf.mxu0
    %v1974 = vadd.f32 %v1955, %v1973
    %v1975 = vpop.f32.mrf.mxu0
    %v1976 = vadd.f32 %v1957, %v1975
    %1977 = vdwg.mxu0
    %1978 = vmatpush.bf16.msra.mxu0 %v1559
    %1979 = vmatpush.bf16.msra.mxu0 %v1555
    %1980 = vmatpush.bf16.msra.mxu0 %v1551
    %1981 = vmatpush.bf16.msra.mxu0 %v1547
    %1982 = vmatpush.bf16.msra.mxu0 %v1543
    %1983 = vmatpush.bf16.msra.mxu0 %v1539
    %1984 = vmatpush.bf16.msra.mxu0 %v1535
    %1985 = vmatpush.bf16.msra.mxu0 %v1531
    %1986 = vmatmul.bf16.gmra.mxu0 %v326
    %v1987 = vpop.f32.mrf.mxu0
    %v1988 = vadd.f32 %v1969, %v1987
    %v1989 = vpop.f32.mrf.mxu0
    %v1990 = vadd.f32 %v1971, %v1989
    %1991 = vmatmul.bf16.gmra.mxu0 %v334
    %v1992 = vpop.f32.mrf.mxu0
    %v1993 = vadd.f32 %v1974, %v1992
    %v1994 = vpop.f32.mrf.mxu0
    %v1995 = vadd.f32 %v1976, %v1994
    %1996 = vdwg.mxu0
    %1997 = vmatpush.bf16.msra.mxu0 %v1591
    %1998 = vmatpush.bf16.msra.mxu0 %v1587
    %1999 = vmatpush.bf16.msra.mxu0 %v1583
    %2000 = vmatpush.bf16.msra.mxu0 %v1579
    %2001 = vmatpush.bf16.msra.mxu0 %v1575
    %2002 = vmatpush.bf16.msra.mxu0 %v1571
    %2003 = vmatpush.bf16.msra.mxu0 %v1567
    %2004 = vmatpush.bf16.msra.mxu0 %v1563
    %2005 = vmatmul.bf16.gmra.mxu0 %v327
    %v2006 = vpop.f32.mrf.mxu0
    %v2007 = vadd.f32 %v1988, %v2006
    %v2008 = vpop.f32.mrf.mxu0
    %v2009 = vadd.f32 %v1990, %v2008
    %2010 = vmatmul.bf16.gmra.mxu0 %v335
    %v2011 = vpop.f32.mrf.mxu0
    %v2012 = vadd.f32 %v1993, %v2011
    %v2013 = vpop.f32.mrf.mxu0
    %v2014 = vadd.f32 %v1995, %v2013
    %2015 = vdwg.mxu0
    %2016 = vmatpush.bf16.msra.mxu0 %v1623
    %2017 = vmatpush.bf16.msra.mxu0 %v1619
    %2018 = vmatpush.bf16.msra.mxu0 %v1615
    %2019 = vmatpush.bf16.msra.mxu0 %v1611
    %2020 = vmatpush.bf16.msra.mxu0 %v1607
    %2021 = vmatpush.bf16.msra.mxu0 %v1603
    %2022 = vmatpush.bf16.msra.mxu0 %v1599
    %2023 = vmatpush.bf16.msra.mxu0 %v1595
    %2024 = vmatmul.bf16.gmra.mxu0 %v328
    %v2025 = vpop.f32.mrf.mxu0
    %v2026 = vadd.f32 %v2007, %v2025
    %v2027 = vpop.f32.mrf.mxu0
    %v2028 = vadd.f32 %v2009, %v2027
    %2029 = vmatmul.bf16.gmra.mxu0 %v336
    %v2030 = vpop.f32.mrf.mxu0
    %v2031 = vadd.f32 %v2012, %v2030
    %v2032 = vpop.f32.mrf.mxu0
    %v2033 = vadd.f32 %v2014, %v2032
    %2034 = vdwg.mxu0
    %2035 = vmatpush.bf16.msra.mxu0 %v1400
    %2036 = vmatpush.bf16.msra.mxu0 %v1396
    %2037 = vmatpush.bf16.msra.mxu0 %v1392
    %2038 = vmatpush.bf16.msra.mxu0 %v1388
    %2039 = vmatpush.bf16.msra.mxu0 %v1384
    %2040 = vmatpush.bf16.msra.mxu0 %v1380
    %2041 = vmatpush.bf16.msra.mxu0 %v1376
    %2042 = vmatpush.bf16.msra.mxu0 %v1372
    %2043 = vmatmul.bf16.gmra.mxu0 %v321
    %v2044 = vpop.f32.mrf.mxu0
    %v2045 = vadd.f32 %v596, %v2044
    %v2046 = vpop.f32.mrf.mxu0
    %v2047 = vadd.f32 %v596, %v2046
    %2048 = vmatmul.bf16.gmra.mxu0 %v329
    %v2049 = vpop.f32.mrf.mxu0
    %v2050 = vadd.f32 %v596, %v2049
    %v2051 = vpop.f32.mrf.mxu0
    %v2052 = vadd.f32 %v596, %v2051
    %2053 = vdwg.mxu0
    %2054 = vmatpush.bf16.msra.mxu0 %v1432
    %2055 = vmatpush.bf16.msra.mxu0 %v1428
    %2056 = vmatpush.bf16.msra.mxu0 %v1424
    %2057 = vmatpush.bf16.msra.mxu0 %v1420
    %2058 = vmatpush.bf16.msra.mxu0 %v1416
    %2059 = vmatpush.bf16.msra.mxu0 %v1412
    %2060 = vmatpush.bf16.msra.mxu0 %v1408
    %2061 = vmatpush.bf16.msra.mxu0 %v1404
    %2062 = vmatmul.bf16.gmra.mxu0 %v322
    %v2063 = vpop.f32.mrf.mxu0
    %v2064 = vadd.f32 %v2045, %v2063
    %v2065 = vpop.f32.mrf.mxu0
    %v2066 = vadd.f32 %v2047, %v2065
    %2067 = vmatmul.bf16.gmra.mxu0 %v330
    %v2068 = vpop.f32.mrf.mxu0
    %v2069 = vadd.f32 %v2050, %v2068
    %v2070 = vpop.f32.mrf.mxu0
    %v2071 = vadd.f32 %v2052, %v2070
    %2072 = vdwg.mxu0
    %2073 = vmatpush.bf16.msra.mxu0 %v1464
    %2074 = vmatpush.bf16.msra.mxu0 %v1460
    %2075 = vmatpush.bf16.msra.mxu0 %v1456
    %2076 = vmatpush.bf16.msra.mxu0 %v1452
    %2077 = vmatpush.bf16.msra.mxu0 %v1448
    %2078 = vmatpush.bf16.msra.mxu0 %v1444
    %2079 = vmatpush.bf16.msra.mxu0 %v1440
    %2080 = vmatpush.bf16.msra.mxu0 %v1436
    %2081 = vmatmul.bf16.gmra.mxu0 %v323
    %v2082 = vpop.f32.mrf.mxu0
    %v2083 = vadd.f32 %v2064, %v2082
    %v2084 = vpop.f32.mrf.mxu0
    %v2085 = vadd.f32 %v2066, %v2084
    %2086 = vmatmul.bf16.gmra.mxu0 %v331
    %v2087 = vpop.f32.mrf.mxu0
    %v2088 = vadd.f32 %v2069, %v2087
    %v2089 = vpop.f32.mrf.mxu0
    %v2090 = vadd.f32 %v2071, %v2089
    %2091 = vdwg.mxu0
    %2092 = vmatpush.bf16.msra.mxu0 %v1496
    %2093 = vmatpush.bf16.msra.mxu0 %v1492
    %2094 = vmatpush.bf16.msra.mxu0 %v1488
    %2095 = vmatpush.bf16.msra.mxu0 %v1484
    %2096 = vmatpush.bf16.msra.mxu0 %v1480
    %2097 = vmatpush.bf16.msra.mxu0 %v1476
    %2098 = vmatpush.bf16.msra.mxu0 %v1472
    %2099 = vmatpush.bf16.msra.mxu0 %v1468
    %2100 = vmatmul.bf16.gmra.mxu0 %v324
    %v2101 = vpop.f32.mrf.mxu0
    %v2102 = vadd.f32 %v2083, %v2101
    %v2103 = vpop.f32.mrf.mxu0
    %v2104 = vadd.f32 %v2085, %v2103
    %2105 = vmatmul.bf16.gmra.mxu0 %v332
    %v2106 = vpop.f32.mrf.mxu0
    %v2107 = vadd.f32 %v2088, %v2106
    %v2108 = vpop.f32.mrf.mxu0
    %v2109 = vadd.f32 %v2090, %v2108
    %2110 = vdwg.mxu0
    %2111 = vmatpush.bf16.msra.mxu0 %v1528
    %2112 = vmatpush.bf16.msra.mxu0 %v1524
    %2113 = vmatpush.bf16.msra.mxu0 %v1520
    %2114 = vmatpush.bf16.msra.mxu0 %v1516
    %2115 = vmatpush.bf16.msra.mxu0 %v1512
    %2116 = vmatpush.bf16.msra.mxu0 %v1508
    %2117 = vmatpush.bf16.msra.mxu0 %v1504
    %2118 = vmatpush.bf16.msra.mxu0 %v1500
    %2119 = vmatmul.bf16.gmra.mxu0 %v325
    %v2120 = vpop.f32.mrf.mxu0
    %v2121 = vadd.f32 %v2102, %v2120
    %v2122 = vpop.f32.mrf.mxu0
    %v2123 = vadd.f32 %v2104, %v2122
    %2124 = vmatmul.bf16.gmra.mxu0 %v333
    %v2125 = vpop.f32.mrf.mxu0
    %v2126 = vadd.f32 %v2107, %v2125
    %v2127 = vpop.f32.mrf.mxu0
    %v2128 = vadd.f32 %v2109, %v2127
    %2129 = vdwg.mxu0
    %2130 = vmatpush.bf16.msra.mxu0 %v1560
    %2131 = vmatpush.bf16.msra.mxu0 %v1556
    %2132 = vmatpush.bf16.msra.mxu0 %v1552
    %2133 = vmatpush.bf16.msra.mxu0 %v1548
    %2134 = vmatpush.bf16.msra.mxu0 %v1544
    %2135 = vmatpush.bf16.msra.mxu0 %v1540
    %2136 = vmatpush.bf16.msra.mxu0 %v1536
    %2137 = vmatpush.bf16.msra.mxu0 %v1532
    %2138 = vmatmul.bf16.gmra.mxu0 %v326
    %v2139 = vpop.f32.mrf.mxu0
    %v2140 = vadd.f32 %v2121, %v2139
    %v2141 = vpop.f32.mrf.mxu0
    %v2142 = vadd.f32 %v2123, %v2141
    %2143 = vmatmul.bf16.gmra.mxu0 %v334
    %v2144 = vpop.f32.mrf.mxu0
    %v2145 = vadd.f32 %v2126, %v2144
    %v2146 = vpop.f32.mrf.mxu0
    %v2147 = vadd.f32 %v2128, %v2146
    %2148 = vdwg.mxu0
    %2149 = vmatpush.bf16.msra.mxu0 %v1592
    %2150 = vmatpush.bf16.msra.mxu0 %v1588
    %2151 = vmatpush.bf16.msra.mxu0 %v1584
    %2152 = vmatpush.bf16.msra.mxu0 %v1580
    %2153 = vmatpush.bf16.msra.mxu0 %v1576
    %2154 = vmatpush.bf16.msra.mxu0 %v1572
    %2155 = vmatpush.bf16.msra.mxu0 %v1568
    %2156 = vmatpush.bf16.msra.mxu0 %v1564
    %2157 = vmatmul.bf16.gmra.mxu0 %v327
    %v2158 = vpop.f32.mrf.mxu0
    %v2159 = vadd.f32 %v2140, %v2158
    %v2160 = vpop.f32.mrf.mxu0
    %v2161 = vadd.f32 %v2142, %v2160
    %2162 = vmatmul.bf16.gmra.mxu0 %v335
    %v2163 = vpop.f32.mrf.mxu0
    %v2164 = vadd.f32 %v2145, %v2163
    %v2165 = vpop.f32.mrf.mxu0
    %v2166 = vadd.f32 %v2147, %v2165
    %2167 = vdwg.mxu0
    %2168 = vmatpush.bf16.msra.mxu0 %v1624
    %2169 = vmatpush.bf16.msra.mxu0 %v1620
    %2170 = vmatpush.bf16.msra.mxu0 %v1616
    %2171 = vmatpush.bf16.msra.mxu0 %v1612
    %2172 = vmatpush.bf16.msra.mxu0 %v1608
    %2173 = vmatpush.bf16.msra.mxu0 %v1604
    %2174 = vmatpush.bf16.msra.mxu0 %v1600
    %2175 = vmatpush.bf16.msra.mxu0 %v1596
    %2176 = vmatmul.bf16.gmra.mxu0 %v328
    %v2177 = vpop.f32.mrf.mxu0
    %v2178 = vadd.f32 %v2159, %v2177
    %v2179 = vpop.f32.mrf.mxu0
    %v2180 = vadd.f32 %v2161, %v2179
    %2181 = vmatmul.bf16.gmra.mxu0 %v336
    %v2182 = vpop.f32.mrf.mxu0
    %v2183 = vadd.f32 %v2164, %v2182
    %v2184 = vpop.f32.mrf.mxu0
    %v2185 = vadd.f32 %v2166, %v2184
    %2186 = vdwg.mxu0
    %2187 = vmatpush.bf16.msra.mxu0 %v1401
    %2188 = vmatpush.bf16.msra.mxu0 %v1397
    %2189 = vmatpush.bf16.msra.mxu0 %v1393
    %2190 = vmatpush.bf16.msra.mxu0 %v1389
    %2191 = vmatpush.bf16.msra.mxu0 %v1385
    %2192 = vmatpush.bf16.msra.mxu0 %v1381
    %2193 = vmatpush.bf16.msra.mxu0 %v1377
    %2194 = vmatpush.bf16.msra.mxu0 %v1373
    %2195 = vmatmul.bf16.gmra.mxu0 %v321
    %v2196 = vpop.f32.mrf.mxu0
    %v2197 = vadd.f32 %v597, %v2196
    %v2198 = vpop.f32.mrf.mxu0
    %v2199 = vadd.f32 %v597, %v2198
    %2200 = vmatmul.bf16.gmra.mxu0 %v329
    %v2201 = vpop.f32.mrf.mxu0
    %v2202 = vadd.f32 %v597, %v2201
    %v2203 = vpop.f32.mrf.mxu0
    %v2204 = vadd.f32 %v597, %v2203
    %2205 = vdwg.mxu0
    %2206 = vmatpush.bf16.msra.mxu0 %v1433
    %2207 = vmatpush.bf16.msra.mxu0 %v1429
    %2208 = vmatpush.bf16.msra.mxu0 %v1425
    %2209 = vmatpush.bf16.msra.mxu0 %v1421
    %2210 = vmatpush.bf16.msra.mxu0 %v1417
    %2211 = vmatpush.bf16.msra.mxu0 %v1413
    %2212 = vmatpush.bf16.msra.mxu0 %v1409
    %2213 = vmatpush.bf16.msra.mxu0 %v1405
    %2214 = vmatmul.bf16.gmra.mxu0 %v322
    %v2215 = vpop.f32.mrf.mxu0
    %v2216 = vadd.f32 %v2197, %v2215
    %v2217 = vpop.f32.mrf.mxu0
    %v2218 = vadd.f32 %v2199, %v2217
    %2219 = vmatmul.bf16.gmra.mxu0 %v330
    %v2220 = vpop.f32.mrf.mxu0
    %v2221 = vadd.f32 %v2202, %v2220
    %v2222 = vpop.f32.mrf.mxu0
    %v2223 = vadd.f32 %v2204, %v2222
    %2224 = vdwg.mxu0
    %2225 = vmatpush.bf16.msra.mxu0 %v1465
    %2226 = vmatpush.bf16.msra.mxu0 %v1461
    %2227 = vmatpush.bf16.msra.mxu0 %v1457
    %2228 = vmatpush.bf16.msra.mxu0 %v1453
    %2229 = vmatpush.bf16.msra.mxu0 %v1449
    %2230 = vmatpush.bf16.msra.mxu0 %v1445
    %2231 = vmatpush.bf16.msra.mxu0 %v1441
    %2232 = vmatpush.bf16.msra.mxu0 %v1437
    %2233 = vmatmul.bf16.gmra.mxu0 %v323
    %v2234 = vpop.f32.mrf.mxu0
    %v2235 = vadd.f32 %v2216, %v2234
    %v2236 = vpop.f32.mrf.mxu0
    %v2237 = vadd.f32 %v2218, %v2236
    %2238 = vmatmul.bf16.gmra.mxu0 %v331
    %v2239 = vpop.f32.mrf.mxu0
    %v2240 = vadd.f32 %v2221, %v2239
    %v2241 = vpop.f32.mrf.mxu0
    %v2242 = vadd.f32 %v2223, %v2241
    %2243 = vdwg.mxu0
    %2244 = vmatpush.bf16.msra.mxu0 %v1497
    %2245 = vmatpush.bf16.msra.mxu0 %v1493
    %2246 = vmatpush.bf16.msra.mxu0 %v1489
    %2247 = vmatpush.bf16.msra.mxu0 %v1485
    %2248 = vmatpush.bf16.msra.mxu0 %v1481
    %2249 = vmatpush.bf16.msra.mxu0 %v1477
    %2250 = vmatpush.bf16.msra.mxu0 %v1473
    %2251 = vmatpush.bf16.msra.mxu0 %v1469
    %2252 = vmatmul.bf16.gmra.mxu0 %v324
    %v2253 = vpop.f32.mrf.mxu0
    %v2254 = vadd.f32 %v2235, %v2253
    %v2255 = vpop.f32.mrf.mxu0
    %v2256 = vadd.f32 %v2237, %v2255
    %2257 = vmatmul.bf16.gmra.mxu0 %v332
    %v2258 = vpop.f32.mrf.mxu0
    %v2259 = vadd.f32 %v2240, %v2258
    %v2260 = vpop.f32.mrf.mxu0
    %v2261 = vadd.f32 %v2242, %v2260
    %2262 = vdwg.mxu0
    %2263 = vmatpush.bf16.msra.mxu0 %v1529
    %2264 = vmatpush.bf16.msra.mxu0 %v1525
    %2265 = vmatpush.bf16.msra.mxu0 %v1521
    %2266 = vmatpush.bf16.msra.mxu0 %v1517
    %2267 = vmatpush.bf16.msra.mxu0 %v1513
    %2268 = vmatpush.bf16.msra.mxu0 %v1509
    %2269 = vmatpush.bf16.msra.mxu0 %v1505
    %2270 = vmatpush.bf16.msra.mxu0 %v1501
    %2271 = vmatmul.bf16.gmra.mxu0 %v325
    %v2272 = vpop.f32.mrf.mxu0
    %v2273 = vadd.f32 %v2254, %v2272
    %v2274 = vpop.f32.mrf.mxu0
    %v2275 = vadd.f32 %v2256, %v2274
    %2276 = vmatmul.bf16.gmra.mxu0 %v333
    %v2277 = vpop.f32.mrf.mxu0
    %v2278 = vadd.f32 %v2259, %v2277
    %v2279 = vpop.f32.mrf.mxu0
    %v2280 = vadd.f32 %v2261, %v2279
    %2281 = vdwg.mxu0
    %2282 = vmatpush.bf16.msra.mxu0 %v1561
    %2283 = vmatpush.bf16.msra.mxu0 %v1557
    %2284 = vmatpush.bf16.msra.mxu0 %v1553
    %2285 = vmatpush.bf16.msra.mxu0 %v1549
    %2286 = vmatpush.bf16.msra.mxu0 %v1545
    %2287 = vmatpush.bf16.msra.mxu0 %v1541
    %2288 = vmatpush.bf16.msra.mxu0 %v1537
    %2289 = vmatpush.bf16.msra.mxu0 %v1533
    %2290 = vmatmul.bf16.gmra.mxu0 %v326
    %v2291 = vpop.f32.mrf.mxu0
    %v2292 = vadd.f32 %v2273, %v2291
    %v2293 = vpop.f32.mrf.mxu0
    %v2294 = vadd.f32 %v2275, %v2293
    %2295 = vmatmul.bf16.gmra.mxu0 %v334
    %v2296 = vpop.f32.mrf.mxu0
    %v2297 = vadd.f32 %v2278, %v2296
    %v2298 = vpop.f32.mrf.mxu0
    %v2299 = vadd.f32 %v2280, %v2298
    %2300 = vdwg.mxu0
    %2301 = vmatpush.bf16.msra.mxu0 %v1593
    %2302 = vmatpush.bf16.msra.mxu0 %v1589
    %2303 = vmatpush.bf16.msra.mxu0 %v1585
    %2304 = vmatpush.bf16.msra.mxu0 %v1581
    %2305 = vmatpush.bf16.msra.mxu0 %v1577
    %2306 = vmatpush.bf16.msra.mxu0 %v1573
    %2307 = vmatpush.bf16.msra.mxu0 %v1569
    %2308 = vmatpush.bf16.msra.mxu0 %v1565
    %2309 = vmatmul.bf16.gmra.mxu0 %v327
    %v2310 = vpop.f32.mrf.mxu0
    %v2311 = vadd.f32 %v2292, %v2310
    %v2312 = vpop.f32.mrf.mxu0
    %v2313 = vadd.f32 %v2294, %v2312
    %2314 = vmatmul.bf16.gmra.mxu0 %v335
    %v2315 = vpop.f32.mrf.mxu0
    %v2316 = vadd.f32 %v2297, %v2315
    %v2317 = vpop.f32.mrf.mxu0
    %v2318 = vadd.f32 %v2299, %v2317
    %2319 = vdwg.mxu0
    %2320 = vmatpush.bf16.msra.mxu0 %v1625
    %2321 = vmatpush.bf16.msra.mxu0 %v1621
    %2322 = vmatpush.bf16.msra.mxu0 %v1617
    %2323 = vmatpush.bf16.msra.mxu0 %v1613
    %2324 = vmatpush.bf16.msra.mxu0 %v1609
    %2325 = vmatpush.bf16.msra.mxu0 %v1605
    %2326 = vmatpush.bf16.msra.mxu0 %v1601
    %2327 = vmatpush.bf16.msra.mxu0 %v1597
    %2328 = vmatmul.bf16.gmra.mxu0 %v328
    %v2329 = vpop.f32.mrf.mxu0
    %v2330 = vadd.f32 %v2311, %v2329
    %v2331 = vpop.f32.mrf.mxu0
    %v2332 = vadd.f32 %v2313, %v2331
    %2333 = vmatmul.bf16.gmra.mxu0 %v336
    %v2334 = vpop.f32.mrf.mxu0
    %v2335 = vadd.f32 %v2316, %v2334
    %v2336 = vpop.f32.mrf.mxu0
    %v2337 = vadd.f32 %v2318, %v2336
    %2338 = vdwg.mxu0
    %2339 = vmatpush.bf16.msra.mxu0 %v1402
    %2340 = vmatpush.bf16.msra.mxu0 %v1398
    %2341 = vmatpush.bf16.msra.mxu0 %v1394
    %2342 = vmatpush.bf16.msra.mxu0 %v1390
    %2343 = vmatpush.bf16.msra.mxu0 %v1386
    %2344 = vmatpush.bf16.msra.mxu0 %v1382
    %2345 = vmatpush.bf16.msra.mxu0 %v1378
    %2346 = vmatpush.bf16.msra.mxu0 %v1374
    %2347 = vmatmul.bf16.gmra.mxu0 %v321
    %v2348 = vpop.f32.mrf.mxu0
    %v2349 = vadd.f32 %v598, %v2348
    %v2350 = vpop.f32.mrf.mxu0
    %v2351 = vadd.f32 %v598, %v2350
    %2352 = vmatmul.bf16.gmra.mxu0 %v329
    %v2353 = vpop.f32.mrf.mxu0
    %v2354 = vadd.f32 %v598, %v2353
    %v2355 = vpop.f32.mrf.mxu0
    %v2356 = vadd.f32 %v598, %v2355
    %2357 = vdwg.mxu0
    %2358 = vmatpush.bf16.msra.mxu0 %v1434
    %2359 = vmatpush.bf16.msra.mxu0 %v1430
    %2360 = vmatpush.bf16.msra.mxu0 %v1426
    %2361 = vmatpush.bf16.msra.mxu0 %v1422
    %2362 = vmatpush.bf16.msra.mxu0 %v1418
    %2363 = vmatpush.bf16.msra.mxu0 %v1414
    %2364 = vmatpush.bf16.msra.mxu0 %v1410
    %2365 = vmatpush.bf16.msra.mxu0 %v1406
    %2366 = vmatmul.bf16.gmra.mxu0 %v322
    %v2367 = vpop.f32.mrf.mxu0
    %v2368 = vadd.f32 %v2349, %v2367
    %v2369 = vpop.f32.mrf.mxu0
    %v2370 = vadd.f32 %v2351, %v2369
    %2371 = vmatmul.bf16.gmra.mxu0 %v330
    %v2372 = vpop.f32.mrf.mxu0
    %v2373 = vadd.f32 %v2354, %v2372
    %v2374 = vpop.f32.mrf.mxu0
    %v2375 = vadd.f32 %v2356, %v2374
    %2376 = vdwg.mxu0
    %2377 = vmatpush.bf16.msra.mxu0 %v1466
    %2378 = vmatpush.bf16.msra.mxu0 %v1462
    %2379 = vmatpush.bf16.msra.mxu0 %v1458
    %2380 = vmatpush.bf16.msra.mxu0 %v1454
    %2381 = vmatpush.bf16.msra.mxu0 %v1450
    %2382 = vmatpush.bf16.msra.mxu0 %v1446
    %2383 = vmatpush.bf16.msra.mxu0 %v1442
    %2384 = vmatpush.bf16.msra.mxu0 %v1438
    %2385 = vmatmul.bf16.gmra.mxu0 %v323
    %v2386 = vpop.f32.mrf.mxu0
    %v2387 = vadd.f32 %v2368, %v2386
    %v2388 = vpop.f32.mrf.mxu0
    %v2389 = vadd.f32 %v2370, %v2388
    %2390 = vmatmul.bf16.gmra.mxu0 %v331
    %v2391 = vpop.f32.mrf.mxu0
    %v2392 = vadd.f32 %v2373, %v2391
    %v2393 = vpop.f32.mrf.mxu0
    %v2394 = vadd.f32 %v2375, %v2393
    %2395 = vdwg.mxu0
    %2396 = vmatpush.bf16.msra.mxu0 %v1498
    %2397 = vmatpush.bf16.msra.mxu0 %v1494
    %2398 = vmatpush.bf16.msra.mxu0 %v1490
    %2399 = vmatpush.bf16.msra.mxu0 %v1486
    %2400 = vmatpush.bf16.msra.mxu0 %v1482
    %2401 = vmatpush.bf16.msra.mxu0 %v1478
    %2402 = vmatpush.bf16.msra.mxu0 %v1474
    %2403 = vmatpush.bf16.msra.mxu0 %v1470
    %2404 = vmatmul.bf16.gmra.mxu0 %v324
    %v2405 = vpop.f32.mrf.mxu0
    %v2406 = vadd.f32 %v2387, %v2405
    %v2407 = vpop.f32.mrf.mxu0
    %v2408 = vadd.f32 %v2389, %v2407
    %2409 = vmatmul.bf16.gmra.mxu0 %v332
    %v2410 = vpop.f32.mrf.mxu0
    %v2411 = vadd.f32 %v2392, %v2410
    %v2412 = vpop.f32.mrf.mxu0
    %v2413 = vadd.f32 %v2394, %v2412
    %2414 = vdwg.mxu0
    %2415 = vmatpush.bf16.msra.mxu0 %v1530
    %2416 = vmatpush.bf16.msra.mxu0 %v1526
    %2417 = vmatpush.bf16.msra.mxu0 %v1522
    %2418 = vmatpush.bf16.msra.mxu0 %v1518
    %2419 = vmatpush.bf16.msra.mxu0 %v1514
    %2420 = vmatpush.bf16.msra.mxu0 %v1510
    %2421 = vmatpush.bf16.msra.mxu0 %v1506
    %2422 = vmatpush.bf16.msra.mxu0 %v1502
    %2423 = vmatmul.bf16.gmra.mxu0 %v325
    %v2424 = vpop.f32.mrf.mxu0
    %v2425 = vadd.f32 %v2406, %v2424
    %v2426 = vpop.f32.mrf.mxu0
    %v2427 = vadd.f32 %v2408, %v2426
    %2428 = vmatmul.bf16.gmra.mxu0 %v333
    %v2429 = vpop.f32.mrf.mxu0
    %v2430 = vadd.f32 %v2411, %v2429
    %v2431 = vpop.f32.mrf.mxu0
    %v2432 = vadd.f32 %v2413, %v2431
    %2433 = vdwg.mxu0
    %2434 = vmatpush.bf16.msra.mxu0 %v1562
    %2435 = vmatpush.bf16.msra.mxu0 %v1558
    %2436 = vmatpush.bf16.msra.mxu0 %v1554
    %2437 = vmatpush.bf16.msra.mxu0 %v1550
    %2438 = vmatpush.bf16.msra.mxu0 %v1546
    %2439 = vmatpush.bf16.msra.mxu0 %v1542
    %2440 = vmatpush.bf16.msra.mxu0 %v1538
    %2441 = vmatpush.bf16.msra.mxu0 %v1534
    %2442 = vmatmul.bf16.gmra.mxu0 %v326
    %v2443 = vpop.f32.mrf.mxu0
    %v2444 = vadd.f32 %v2425, %v2443
    %v2445 = vpop.f32.mrf.mxu0
    %v2446 = vadd.f32 %v2427, %v2445
    %2447 = vmatmul.bf16.gmra.mxu0 %v334
    %v2448 = vpop.f32.mrf.mxu0
    %v2449 = vadd.f32 %v2430, %v2448
    %v2450 = vpop.f32.mrf.mxu0
    %v2451 = vadd.f32 %v2432, %v2450
    %2452 = vdwg.mxu0
    %2453 = vmatpush.bf16.msra.mxu0 %v1594
    %2454 = vmatpush.bf16.msra.mxu0 %v1590
    %2455 = vmatpush.bf16.msra.mxu0 %v1586
    %2456 = vmatpush.bf16.msra.mxu0 %v1582
    %2457 = vmatpush.bf16.msra.mxu0 %v1578
    %2458 = vmatpush.bf16.msra.mxu0 %v1574
    %2459 = vmatpush.bf16.msra.mxu0 %v1570
    %2460 = vmatpush.bf16.msra.mxu0 %v1566
    %2461 = vmatmul.bf16.gmra.mxu0 %v327
    %v2462 = vpop.f32.mrf.mxu0
    %v2463 = vadd.f32 %v2444, %v2462
    %v2464 = vpop.f32.mrf.mxu0
    %v2465 = vadd.f32 %v2446, %v2464
    %2466 = vmatmul.bf16.gmra.mxu0 %v335
    %v2467 = vpop.f32.mrf.mxu0
    %v2468 = vadd.f32 %v2449, %v2467
    %v2469 = vpop.f32.mrf.mxu0
    %v2470 = vadd.f32 %v2451, %v2469
    %2471 = vdwg.mxu0
    %2472 = vmatpush.bf16.msra.mxu0 %v1626
    %2473 = vmatpush.bf16.msra.mxu0 %v1622
    %2474 = vmatpush.bf16.msra.mxu0 %v1618
    %2475 = vmatpush.bf16.msra.mxu0 %v1614
    %2476 = vmatpush.bf16.msra.mxu0 %v1610
    %2477 = vmatpush.bf16.msra.mxu0 %v1606
    %2478 = vmatpush.bf16.msra.mxu0 %v1602
    %2479 = vmatpush.bf16.msra.mxu0 %v1598
    %2480 = vmatmul.bf16.gmra.mxu0 %v328
    %v2481 = vpop.f32.mrf.mxu0
    %v2482 = vadd.f32 %v2463, %v2481
    %v2483 = vpop.f32.mrf.mxu0
    %v2484 = vadd.f32 %v2465, %v2483
    %2485 = vmatmul.bf16.gmra.mxu0 %v336
    %v2486 = vpop.f32.mrf.mxu0
    %v2487 = vadd.f32 %v2468, %v2486
    %v2488 = vpop.f32.mrf.mxu0
    %v2489 = vadd.f32 %v2470, %v2488
    %2490 = vdwg.mxu0
    %v2491 = vmax.f32 %v2026, 0.0
    %v2492 = vmax.f32 %v2178, 0.0
    %v2493 = vmax.f32 %v2330, 0.0
    %v2494 = vmax.f32 %v2482, 0.0
    %v2495 = vmax.f32 %v2028, 0.0
    %v2496 = vmax.f32 %v2180, 0.0
    %v2497 = vmax.f32 %v2332, 0.0
    %v2498 = vmax.f32 %v2484, 0.0
    %v2499 = vmax.f32 %v2031, 0.0
    %v2500 = vmax.f32 %v2183, 0.0
    %v2501 = vmax.f32 %v2335, 0.0
    %v2502 = vmax.f32 %v2487, 0.0
    %v2503 = vmax.f32 %v2033, 0.0
    %v2504 = vmax.f32 %v2185, 0.0
    %v2505 = vmax.f32 %v2337, 0.0
    %v2506 = vmax.f32 %v2489, 0.0
    %v2507 = vpack.c.bf16 %v2495, %v2491
    %v2508 = vpack.c.bf16 %v2496, %v2492
    %v2509 = vpack.c.bf16 %v2497, %v2493
    %v2510 = vpack.c.bf16 %v2498, %v2494
    %v2511 = vpack.c.bf16 %v2503, %v2499
    %v2512 = vpack.c.bf16 %v2504, %v2500
    %v2513 = vpack.c.bf16 %v2505, %v2501
    %v2514 = vpack.c.bf16 %v2506, %v2502
    %v2515 = vld [vmem:[#allocation8] sm:$0xf]
    %v2516 = vld [vmem:[#allocation8 + $0x4] sm:$0xf]
    %v2517 = vld [vmem:[#allocation8 + $0x8] sm:$0xf]
    %v2518 = vld [vmem:[#allocation8 + $0xc] sm:$0xf]
    %v2519 = vld [vmem:[#allocation8 + $0x10] sm:$0xf]
    %v2520 = vld [vmem:[#allocation8 + $0x14] sm:$0xf]
    %v2521 = vld [vmem:[#allocation8 + $0x18] sm:$0xf]
    %v2522 = vld [vmem:[#allocation8 + $0x1c] sm:$0xf]
    %v2523 = vld [vmem:[#allocation8 + $0x20] sm:$0xf]
    %v2524 = vld [vmem:[#allocation8 + $0x24] sm:$0xf]
    %v2525 = vld [vmem:[#allocation8 + $0x28] sm:$0xf]
    %v2526 = vld [vmem:[#allocation8 + $0x2c] sm:$0xf]
    %v2527 = vld [vmem:[#allocation8 + $0x30] sm:$0xf]
    %v2528 = vld [vmem:[#allocation8 + $0x34] sm:$0xf]
    %v2529 = vld [vmem:[#allocation8 + $0x38] sm:$0xf]
    %v2530 = vld [vmem:[#allocation8 + $0x3c] sm:$0xf]
    %v2531 = vld [vmem:[#allocation8 + $0x40] sm:$0xf]
    %v2532 = vld [vmem:[#allocation8 + $0x44] sm:$0xf]
    %v2533 = vld [vmem:[#allocation8 + $0x48] sm:$0xf]
    %v2534 = vld [vmem:[#allocation8 + $0x4c] sm:$0xf]
    %v2535 = vld [vmem:[#allocation8 + $0x50] sm:$0xf]
    %v2536 = vld [vmem:[#allocation8 + $0x54] sm:$0xf]
    %v2537 = vld [vmem:[#allocation8 + $0x58] sm:$0xf]
    %v2538 = vld [vmem:[#allocation8 + $0x5c] sm:$0xf]
    %v2539 = vld [vmem:[#allocation8 + $0x60] sm:$0xf]
    %v2540 = vld [vmem:[#allocation8 + $0x64] sm:$0xf]
    %v2541 = vld [vmem:[#allocation8 + $0x68] sm:$0xf]
    %v2542 = vld [vmem:[#allocation8 + $0x6c] sm:$0xf]
    %v2543 = vld [vmem:[#allocation8 + $0x70] sm:$0xf]
    %v2544 = vld [vmem:[#allocation8 + $0x74] sm:$0xf]
    %v2545 = vld [vmem:[#allocation8 + $0x78] sm:$0xf]
    %v2546 = vld [vmem:[#allocation8 + $0x7c] sm:$0xf]
    %v2547 = vld [vmem:[#allocation8 + $0x80] sm:$0xf]
    %v2548 = vld [vmem:[#allocation8 + $0x84] sm:$0xf]
    %v2549 = vld [vmem:[#allocation8 + $0x88] sm:$0xf]
    %v2550 = vld [vmem:[#allocation8 + $0x8c] sm:$0xf]
    %v2551 = vld [vmem:[#allocation8 + $0x90] sm:$0xf]
    %v2552 = vld [vmem:[#allocation8 + $0x94] sm:$0xf]
    %v2553 = vld [vmem:[#allocation8 + $0x98] sm:$0xf]
    %v2554 = vld [vmem:[#allocation8 + $0x9c] sm:$0xf]
    %v2555 = vld [vmem:[#allocation8 + $0xa0] sm:$0xf]
    %v2556 = vld [vmem:[#allocation8 + $0xa4] sm:$0xf]
    %v2557 = vld [vmem:[#allocation8 + $0xa8] sm:$0xf]
    %v2558 = vld [vmem:[#allocation8 + $0xac] sm:$0xf]
    %v2559 = vld [vmem:[#allocation8 + $0xb0] sm:$0xf]
    %v2560 = vld [vmem:[#allocation8 + $0xb4] sm:$0xf]
    %v2561 = vld [vmem:[#allocation8 + $0xb8] sm:$0xf]
    %v2562 = vld [vmem:[#allocation8 + $0xbc] sm:$0xf]
    %v2563 = vld [vmem:[#allocation8 + $0xc0] sm:$0xf]
    %v2564 = vld [vmem:[#allocation8 + $0xc4] sm:$0xf]
    %v2565 = vld [vmem:[#allocation8 + $0xc8] sm:$0xf]
    %v2566 = vld [vmem:[#allocation8 + $0xcc] sm:$0xf]
    %v2567 = vld [vmem:[#allocation8 + $0xd0] sm:$0xf]
    %v2568 = vld [vmem:[#allocation8 + $0xd4] sm:$0xf]
    %v2569 = vld [vmem:[#allocation8 + $0xd8] sm:$0xf]
    %v2570 = vld [vmem:[#allocation8 + $0xdc] sm:$0xf]
    %v2571 = vld [vmem:[#allocation8 + $0xe0] sm:$0xf]
    %v2572 = vld [vmem:[#allocation8 + $0xe4] sm:$0xf]
    %v2573 = vld [vmem:[#allocation8 + $0xe8] sm:$0xf]
    %v2574 = vld [vmem:[#allocation8 + $0xec] sm:$0xf]
    %v2575 = vld [vmem:[#allocation8 + $0xf0] sm:$0xf]
    %v2576 = vld [vmem:[#allocation8 + $0xf4] sm:$0xf]
    %v2577 = vld [vmem:[#allocation8 + $0xf8] sm:$0xf]
    %v2578 = vld [vmem:[#allocation8 + $0xfc] sm:$0xf]
    %v2579 = vld [vmem:[%s4] sm:$0x1]
    %v2581 = vperm.slane %v2579, 0
    %v2647 = vunpack.c.l.b16 %v2515
    %v2648 = vunpack.c.l.b16 %v2516
    %v2649 = vunpack.c.l.b16 %v2517
    %v2650 = vunpack.c.l.b16 %v2518
    %v2651 = vunpack.c.l.b16 %v2519
    %v2652 = vunpack.c.l.b16 %v2520
    %v2653 = vunpack.c.l.b16 %v2521
    %v2654 = vunpack.c.l.b16 %v2522
    %v2655 = vunpack.c.l.b16 %v2523
    %v2656 = vunpack.c.l.b16 %v2524
    %v2657 = vunpack.c.l.b16 %v2525
    %v2658 = vunpack.c.l.b16 %v2526
    %v2659 = vunpack.c.l.b16 %v2527
    %v2660 = vunpack.c.l.b16 %v2528
    %v2661 = vunpack.c.l.b16 %v2529
    %v2662 = vunpack.c.l.b16 %v2530
    %v2663 = vunpack.c.l.b16 %v2531
    %v2664 = vunpack.c.l.b16 %v2532
    %v2665 = vunpack.c.l.b16 %v2533
    %v2666 = vunpack.c.l.b16 %v2534
    %v2667 = vunpack.c.l.b16 %v2535
    %v2668 = vunpack.c.l.b16 %v2536
    %v2669 = vunpack.c.l.b16 %v2537
    %v2670 = vunpack.c.l.b16 %v2538
    %v2671 = vunpack.c.l.b16 %v2539
    %v2672 = vunpack.c.l.b16 %v2540
    %v2673 = vunpack.c.l.b16 %v2541
    %v2674 = vunpack.c.l.b16 %v2542
    %v2675 = vunpack.c.l.b16 %v2543
    %v2676 = vunpack.c.l.b16 %v2544
    %v2677 = vunpack.c.l.b16 %v2545
    %v2678 = vunpack.c.l.b16 %v2546
    %v2679 = vunpack.c.l.b16 %v2547
    %v2680 = vunpack.c.l.b16 %v2548
    %v2681 = vunpack.c.l.b16 %v2549
    %v2682 = vunpack.c.l.b16 %v2550
    %v2683 = vunpack.c.l.b16 %v2551
    %v2684 = vunpack.c.l.b16 %v2552
    %v2685 = vunpack.c.l.b16 %v2553
    %v2686 = vunpack.c.l.b16 %v2554
    %v2687 = vunpack.c.l.b16 %v2555
    %v2688 = vunpack.c.l.b16 %v2556
    %v2689 = vunpack.c.l.b16 %v2557
    %v2690 = vunpack.c.l.b16 %v2558
    %v2691 = vunpack.c.l.b16 %v2559
    %v2692 = vunpack.c.l.b16 %v2560
    %v2693 = vunpack.c.l.b16 %v2561
    %v2694 = vunpack.c.l.b16 %v2562
    %v2695 = vunpack.c.l.b16 %v2563
    %v2696 = vunpack.c.l.b16 %v2564
    %v2697 = vunpack.c.l.b16 %v2565
    %v2698 = vunpack.c.l.b16 %v2566
    %v2699 = vunpack.c.l.b16 %v2567
    %v2700 = vunpack.c.l.b16 %v2568
    %v2701 = vunpack.c.l.b16 %v2569
    %v2702 = vunpack.c.l.b16 %v2570
    %v2703 = vunpack.c.l.b16 %v2571
    %v2704 = vunpack.c.l.b16 %v2572
    %v2705 = vunpack.c.l.b16 %v2573
    %v2706 = vunpack.c.l.b16 %v2574
    %v2707 = vunpack.c.l.b16 %v2575
    %v2708 = vunpack.c.l.b16 %v2576
    %v2709 = vunpack.c.l.b16 %v2577
    %v2710 = vunpack.c.l.b16 %v2578
    %v2711 = vpack.c.b16 %v2648, %v2647
    %v2712 = vpack.c.b16 %v2650, %v2649
    %v2713 = vpack.c.b16 %v2652, %v2651
    %v2714 = vpack.c.b16 %v2654, %v2653
    %v2715 = vpack.c.b16 %v2656, %v2655
    %v2716 = vpack.c.b16 %v2658, %v2657
    %v2717 = vpack.c.b16 %v2660, %v2659
    %v2718 = vpack.c.b16 %v2662, %v2661
    %v2719 = vpack.c.b16 %v2664, %v2663
    %v2720 = vpack.c.b16 %v2666, %v2665
    %v2721 = vpack.c.b16 %v2668, %v2667
    %v2722 = vpack.c.b16 %v2670, %v2669
    %v2723 = vpack.c.b16 %v2672, %v2671
    %v2724 = vpack.c.b16 %v2674, %v2673
    %v2725 = vpack.c.b16 %v2676, %v2675
    %v2726 = vpack.c.b16 %v2678, %v2677
    %v2727 = vpack.c.b16 %v2680, %v2679
    %v2728 = vpack.c.b16 %v2682, %v2681
    %v2729 = vpack.c.b16 %v2684, %v2683
    %v2730 = vpack.c.b16 %v2686, %v2685
    %v2731 = vpack.c.b16 %v2688, %v2687
    %v2732 = vpack.c.b16 %v2690, %v2689
    %v2733 = vpack.c.b16 %v2692, %v2691
    %v2734 = vpack.c.b16 %v2694, %v2693
    %v2735 = vpack.c.b16 %v2696, %v2695
    %v2736 = vpack.c.b16 %v2698, %v2697
    %v2737 = vpack.c.b16 %v2700, %v2699
    %v2738 = vpack.c.b16 %v2702, %v2701
    %v2739 = vpack.c.b16 %v2704, %v2703
    %v2740 = vpack.c.b16 %v2706, %v2705
    %v2741 = vpack.c.b16 %v2708, %v2707
    %v2742 = vpack.c.b16 %v2710, %v2709
    %2775 = vmatpush.bf16.msra.mxu0 %v2718
    %2776 = vmatpush.bf16.msra.mxu0 %v2717
    %2777 = vmatpush.bf16.msra.mxu0 %v2716
    %2778 = vmatpush.bf16.msra.mxu0 %v2715
    %2779 = vmatpush.bf16.msra.mxu0 %v2714
    %2780 = vmatpush.bf16.msra.mxu0 %v2713
    %2781 = vmatpush.bf16.msra.mxu0 %v2712
    %2782 = vmatpush.bf16.msra.mxu0 %v2711
    %2783 = vmatmul.bf16.gmra.mxu0 %v2507
    %v2784 = vpop.f32.mrf.mxu0
    %v2785 = vadd.f32 %v2581, %v2784
    %v2786 = vpop.f32.mrf.mxu0
    %v2787 = vadd.f32 %v2581, %v2786
    %2788 = vmatmul.bf16.gmra.mxu0 %v2511
    %v2789 = vpop.f32.mrf.mxu0
    %v2790 = vadd.f32 %v2581, %v2789
    %v2791 = vpop.f32.mrf.mxu0
    %v2792 = vadd.f32 %v2581, %v2791
    %2793 = vdwg.mxu0
    %2794 = vmatpush.bf16.msra.mxu0 %v2726
    %2795 = vmatpush.bf16.msra.mxu0 %v2725
    %2796 = vmatpush.bf16.msra.mxu0 %v2724
    %2797 = vmatpush.bf16.msra.mxu0 %v2723
    %2798 = vmatpush.bf16.msra.mxu0 %v2722
    %2799 = vmatpush.bf16.msra.mxu0 %v2721
    %2800 = vmatpush.bf16.msra.mxu0 %v2720
    %2801 = vmatpush.bf16.msra.mxu0 %v2719
    %2802 = vmatmul.bf16.gmra.mxu0 %v2508
    %v2803 = vpop.f32.mrf.mxu0
    %v2804 = vadd.f32 %v2785, %v2803
    %v2805 = vpop.f32.mrf.mxu0
    %v2806 = vadd.f32 %v2787, %v2805
    %2807 = vmatmul.bf16.gmra.mxu0 %v2512
    %v2808 = vpop.f32.mrf.mxu0
    %v2809 = vadd.f32 %v2790, %v2808
    %v2810 = vpop.f32.mrf.mxu0
    %v2811 = vadd.f32 %v2792, %v2810
    %2812 = vdwg.mxu0
    %2813 = vmatpush.bf16.msra.mxu0 %v2734
    %2814 = vmatpush.bf16.msra.mxu0 %v2733
    %2815 = vmatpush.bf16.msra.mxu0 %v2732
    %2816 = vmatpush.bf16.msra.mxu0 %v2731
    %2817 = vmatpush.bf16.msra.mxu0 %v2730
    %2818 = vmatpush.bf16.msra.mxu0 %v2729
    %2819 = vmatpush.bf16.msra.mxu0 %v2728
    %2820 = vmatpush.bf16.msra.mxu0 %v2727
    %2821 = vmatmul.bf16.gmra.mxu0 %v2509
    %v2822 = vpop.f32.mrf.mxu0
    %v2823 = vadd.f32 %v2804, %v2822
    %v2824 = vpop.f32.mrf.mxu0
    %v2825 = vadd.f32 %v2806, %v2824
    %2826 = vmatmul.bf16.gmra.mxu0 %v2513
    %v2827 = vpop.f32.mrf.mxu0
    %v2828 = vadd.f32 %v2809, %v2827
    %v2829 = vpop.f32.mrf.mxu0
    %v2830 = vadd.f32 %v2811, %v2829
    %2831 = vdwg.mxu0
    %2832 = vmatpush.bf16.msra.mxu0 %v2742
    %2833 = vmatpush.bf16.msra.mxu0 %v2741
    %2834 = vmatpush.bf16.msra.mxu0 %v2740
    %2835 = vmatpush.bf16.msra.mxu0 %v2739
    %2836 = vmatpush.bf16.msra.mxu0 %v2738
    %2837 = vmatpush.bf16.msra.mxu0 %v2737
    %2838 = vmatpush.bf16.msra.mxu0 %v2736
    %2839 = vmatpush.bf16.msra.mxu0 %v2735
    %2840 = vmatmul.bf16.gmra.mxu0 %v2510
    %v2841 = vpop.f32.mrf.mxu0
    %v2842 = vadd.f32 %v2823, %v2841
    %v2843 = vpop.f32.mrf.mxu0
    %v2844 = vadd.f32 %v2825, %v2843
    %2845 = vmatmul.bf16.gmra.mxu0 %v2514
    %v2846 = vpop.f32.mrf.mxu0
    %v2847 = vadd.f32 %v2828, %v2846
    %v2848 = vpop.f32.mrf.mxu0
    %v2849 = vadd.f32 %v2830, %v2848
    %2850 = vdwg.mxu0
    %2851 = vst [vmem:[#allocation10] sm:$0xff] %v2842
    %2852 = vst [vmem:[#allocation10 + $0x8] sm:$0xff] %v2844
    %2853 = vst [vmem:[#allocation10 + $0x10] sm:$0xff] %v2847
    %2854 = vst [vmem:[#allocation10 + $0x18] sm:$0xff] %v2849
    // Predicated region
    $region38: #{tpu_custom_call.1} parent=1 // pred_check
      _
    $region39: #{tpu_custom_call.1} parent=1 // pred_check_branch
      %2856 = sbr.rel (0) target = $region41
    $region40: #{tpu_custom_call.1} parent=1 // pred_region
      %2858 = vsyncadd [#allocation4], 480
      %s2859 = sshll.u32 [#allocation10], 4
      %s2860 = int_to_ptr.vmem [resolvable:$true] %s2859
      %s2861 = sshll.u32 %s5, 4
      %s2862 = int_to_ptr.hbm [resolvable:$true] %s2861
      %2867 = dma.vmem_to_hbm [thread:$0]  %s2860, 32, %s2862, [#allocation4], 32, 32, 2
    $region41: #{tpu_custom_call.1} parent=1 // pred_fallthru
      _
    // Predicated region
    $region42: #{tpu_custom_call.1} parent=1 // pred_check
      _
    $region43: #{tpu_custom_call.1} parent=1 // pred_check_branch
      %2869 = sbr.rel (0) target = $region45
    $region44: #{tpu_custom_call.1} parent=1 // pred_region
      %2871 = dma.done [#allocation4], 512
    $region45: #{tpu_custom_call.1} parent=1 // pred_fallthru
      _
    %2872 = vsyncpa [#allocation3], 1
    %2873 = vsyncpa [#allocation6], 1
    %2874 = vsyncpa [#allocation9], 1
    %2875 = vsyncpa [#allocation4], 1

// kernel: tpu_custom_call.1
$region0: #{tpu_custom_call.1}
  #allocation0 [shape = 'u32[]', space=smem, size = 0x4, offset = 0x4, fixed_abs, tag = 'smem constant byte address 0x4 - core index']
  #allocation1 [shape = 'u32[72,128]{1,0:T(1,128)}', space=vmem, size = 0x9000, scoped, tag = 'internal scratch']
  %s0 = inlined_call_operand.hbm [shape: u8[2,1024], index: 0, kind: input, shape index: {}]
  %s1 = inlined_call_operand.hbm [shape: bf16[1024,512], index: 1, kind: input, shape index: {}]
  %s2 = inlined_call_operand.hbm [shape: f32[1,512], index: 2, kind: input, shape index: {}]
  %s3 = inlined_call_operand.hbm [shape: bf16[512,128], index: 3, kind: input, shape index: {}]
  %s4 = inlined_call_operand.vmem [shape: f32[1,128], index: 4, kind: input, shape index: {}]
  %s5 = inlined_call_operand.hbm [shape: f32[2,128], index: 5, kind: output, shape index: {}]
  %s6 = sld [smem:[#allocation0]]
  $region46: #{tpu_custom_call.1} parent=0
    _
  %s8 = ssub.s32 1, %s6
  %s9 = scalar_select 0, %s8, %s6
  $region1: #{tpu_custom_call.1} parent=0
    #allocation2 [shape = 'u8[32768]{0}', space=vmem, size = 0x8000, scoped, tag = 'input window, operand 0, single buffered']
    #allocation3 [shape = 's32[1]{0}', space=sflag, size = 0x4, scoped, tag = 'scoped memory for tpu_custom_call.1']
    #allocation4 [shape = 's32[1]{0}', space=sflag, size = 0x4, scoped, tag = 'scoped memory for tpu_custom_call.1']
    #allocation5 [shape = 'u8[1048576]{0}', space=vmem, size = 0x100000, scoped, tag = 'input window, operand 1, single buffered']
    #allocation6 [shape = 's32[1]{0}', space=sflag, size = 0x4, scoped, tag = 'scoped memory for tpu_custom_call.1']
    #allocation7 [shape = 'u8[2048]{0}', space=vmem, size = 0x800, scoped, tag = 'input window, operand 2, single buffered']
    #allocation8 [shape = 'u8[131072]{0}', space=vmem, size = 0x20000, scoped, tag = 'input window, operand 3, single buffered']
    #allocation9 [shape = 's32[1]{0}', space=sflag, size = 0x4, scoped, tag = 'scoped memory for tpu_custom_call.1']
    #allocation10 [shape = 'u8[16384]{0}', space=vmem, size = 0x4000, scoped, tag = 'output window, operand 0, single buffered']
    %10 = vsyncpa [#allocation3], 0
    %11 = vsyncpa [#allocation6], 0
    %12 = vsyncpa [#allocation9], 0
    %13 = vsyncpa [#allocation4], 0
    // Predicated region
    $region2: #{tpu_custom_call.1} parent=1 // pred_check
      _
    $region3: #{tpu_custom_call.1} parent=1 // pred_check_branch
      %15 = sbr.rel (0) target = $region5
    $region4: #{tpu_custom_call.1} parent=1 // pred_region
      %17 = vsyncadd [#allocation3], 896
      %s18 = sshll.u32 %s0, 4
      %s19 = int_to_ptr.hbm [resolvable:$true] %s18
      %s20 = sshll.u32 [#allocation2], 4
      %s21 = int_to_ptr.vmem [resolvable:$true] %s20
      %26 = dma.hbm_to_vmem [thread:$0]  %s19, 128, %s21, [#allocation3], 128, 128, 8
    $region5: #{tpu_custom_call.1} parent=1 // pred_fallthru
      _
    // Predicated region
    $region6: #{tpu_custom_call.1} parent=1 // pred_check
      _
    $region7: #{tpu_custom_call.1} parent=1 // pred_check_branch
      %28 = sbr.rel (0) target = $region9
    $region8: #{tpu_custom_call.1} parent=1 // pred_region
      %30 = vsyncadd [#allocation6], 0
      %s31 = sshll.u32 %s1, 4
      %s32 = int_to_ptr.hbm [resolvable:$true] %s31
      %s33 = sshll.u32 [#allocation5], 4
      %s34 = int_to_ptr.vmem [resolvable:$true] %s33
      %39 = dma.hbm_to_vmem [thread:$0]  %s32, 32768, %s34, [#allocation6], 256, 256, 16
    $region9: #{tpu_custom_call.1} parent=1 // pred_fallthru
      _
    // Predicated region
    $region10: #{tpu_custom_call.1} parent=1 // pred_check
      _
    $region11: #{tpu_custom_call.1} parent=1 // pred_check_branch
      %41 = sbr.rel (0) target = $region13
    $region12: #{tpu_custom_call.1} parent=1 // pred_region
      %43 = vsyncadd [#allocation6], 0
      %s45 = sshll.u32 %s2, 4
      %s46 = int_to_ptr.hbm [resolvable:$true] %s45
      %s47 = sshll.u32 [#allocation7], 4
      %s48 = int_to_ptr.vmem [resolvable:$true] %s47
      %50 = dma.hbm_to_vmem [thread:$0]  %s46, 64, %s48, [#allocation6]
    $region13: #{tpu_custom_call.1} parent=1 // pred_fallthru
      _
    // Predicated region
    $region14: #{tpu_custom_call.1} parent=1 // pred_check
      _
    $region15: #{tpu_custom_call.1} parent=1 // pred_check_branch
      %52 = sbr.rel (0) target = $region17
    $region16: #{tpu_custom_call.1} parent=1 // pred_region
      %54 = vsyncadd [#allocation9], 0
      %s55 = sshll.u32 %s3, 4
      %s56 = int_to_ptr.hbm [resolvable:$true] %s55
      %s57 = sshll.u32 [#allocation8], 4
      %s58 = int_to_ptr.vmem [resolvable:$true] %s57
      %63 = dma.hbm_to_vmem [thread:$0]  %s56, 4096, %s58, [#allocation9], 64, 64, 4
    $region17: #{tpu_custom_call.1} parent=1 // pred_fallthru
      _
    // Predicated region
    $region18: #{tpu_custom_call.1} parent=1 // pred_check
      _
    $region19: #{tpu_custom_call.1} parent=1 // pred_check_branch
      %65 = sbr.rel (0) target = $region21
    $region20: #{tpu_custom_call.1} parent=1 // pred_region
      _
    $region21: #{tpu_custom_call.1} parent=1 // pred_fallthru
      _
    // Predicated region
    $region22: #{tpu_custom_call.1} parent=1 // pred_check
      _
    $region23: #{tpu_custom_call.1} parent=1 // pred_check_branch
      %67 = sbr.rel (0) target = $region25
    $region24: #{tpu_custom_call.1} parent=1 // pred_region
      %69 = dma.done [#allocation3], 1024
    $region25: #{tpu_custom_call.1} parent=1 // pred_fallthru
      _
    // Predicated region
    $region26: #{tpu_custom_call.1} parent=1 // pred_check
      _
    $region27: #{tpu_custom_call.1} parent=1 // pred_check_branch
      %71 = sbr.rel (0) target = $region29
    $region28: #{tpu_custom_call.1} parent=1 // pred_region
      %73 = dma.done [#allocation6], 32768
    $region29: #{tpu_custom_call.1} parent=1 // pred_fallthru
      _
    // Predicated region
    $region30: #{tpu_custom_call.1} parent=1 // pred_check
      _
    $region31: #{tpu_custom_call.1} parent=1 // pred_check_branch
      %75 = sbr.rel (0) target = $region33
    $region32: #{tpu_custom_call.1} parent=1 // pred_region
      %77 = dma.done [#allocation6], 64
    $region33: #{tpu_custom_call.1} parent=1 // pred_fallthru
      _
    // Predicated region
    $region34: #{tpu_custom_call.1} parent=1 // pred_check
      _
    $region35: #{tpu_custom_call.1} parent=1 // pred_check_branch
      %79 = sbr.rel (0) target = $region37
    $region36: #{tpu_custom_call.1} parent=1 // pred_region
      %81 = dma.done [#allocation9], 4096
    $region37: #{tpu_custom_call.1} parent=1 // pred_fallthru
      _
    %v82 = vld [vmem:[#allocation2] sm:$0xff]
    %v83 = vld [vmem:[#allocation2 + $0x8] sm:$0xff]
    %v84 = vld [vmem:[#allocation2 + $0x10] sm:$0xff]
    %v85 = vld [vmem:[#allocation2 + $0x18] sm:$0xff]
    %v86 = vld [vmem:[#allocation2 + $0x20] sm:$0xff]
    %v87 = vld [vmem:[#allocation2 + $0x28] sm:$0xff]
    %v88 = vld [vmem:[#allocation2 + $0x30] sm:$0xff]
    %v89 = vld [vmem:[#allocation2 + $0x38] sm:$0xff]
    %v90 = vunpack.c.0.s8 %v82
    %v91 = vunpack.c.1.s8 %v82
    %v92 = vunpack.c.2.s8 %v82
    %v93 = vunpack.c.3.s8 %v82
    %v94 = vunpack.c.0.s8 %v83
    %v95 = vunpack.c.1.s8 %v83
    %v96 = vunpack.c.2.s8 %v83
    %v97 = vunpack.c.3.s8 %v83
    %v98 = vunpack.c.0.s8 %v84
    %v99 = vunpack.c.1.s8 %v84
    %v100 = vunpack.c.2.s8 %v84
    %v101 = vunpack.c.3.s8 %v84
    %v102 = vunpack.c.0.s8 %v85
    %v103 = vunpack.c.1.s8 %v85
    %v104 = vunpack.c.2.s8 %v85
    %v105 = vunpack.c.3.s8 %v85
    %v106 = vunpack.c.0.s8 %v86
    %v107 = vunpack.c.1.s8 %v86
    %v108 = vunpack.c.2.s8 %v86
    %v109 = vunpack.c.3.s8 %v86
    %v110 = vunpack.c.0.s8 %v87
    %v111 = vunpack.c.1.s8 %v87
    %v112 = vunpack.c.2.s8 %v87
    %v113 = vunpack.c.3.s8 %v87
    %v114 = vunpack.c.0.s8 %v88
    %v115 = vunpack.c.1.s8 %v88
    %v116 = vunpack.c.2.s8 %v88
    %v117 = vunpack.c.3.s8 %v88
    %v118 = vunpack.c.0.s8 %v89
    %v119 = vunpack.c.1.s8 %v89
    %v120 = vunpack.c.2.s8 %v89
    %v121 = vunpack.c.3.s8 %v89
    %v122 = vand.u32 %v90, 255
    %v123 = vand.u32 %v91, 255
    %v124 = vand.u32 %v92, 255
    %v125 = vand.u32 %v93, 255
    %v126 = vand.u32 %v94, 255
    %v127 = vand.u32 %v95, 255
    %v128 = vand.u32 %v96, 255
    %v129 = vand.u32 %v97, 255
    %v130 = vand.u32 %v98, 255
    %v131 = vand.u32 %v99, 255
    %v132 = vand.u32 %v100, 255
    %v133 = vand.u32 %v101, 255
    %v134 = vand.u32 %v102, 255
    %v135 = vand.u32 %v103, 255
    %v136 = vand.u32 %v104, 255
    %v137 = vand.u32 %v105, 255
    %v138 = vand.u32 %v106, 255
    %v139 = vand.u32 %v107, 255
    %v140 = vand.u32 %v108, 255
    %v141 = vand.u32 %v109, 255
    %v142 = vand.u32 %v110, 255
    %v143 = vand.u32 %v111, 255
    %v144 = vand.u32 %v112, 255
    %v145 = vand.u32 %v113, 255
    %v146 = vand.u32 %v114, 255
    %v147 = vand.u32 %v115, 255
    %v148 = vand.u32 %v116, 255
    %v149 = vand.u32 %v117, 255
    %v150 = vand.u32 %v118, 255
    %v151 = vand.u32 %v119, 255
    %v152 = vand.u32 %v120, 255
    %v153 = vand.u32 %v121, 255
    %v154 = vcvt.s32.f32 %v122
    %v155 = vcvt.s32.f32 %v123
    %v156 = vcvt.s32.f32 %v124
    %v157 = vcvt.s32.f32 %v125
    %v158 = vcvt.s32.f32 %v126
    %v159 = vcvt.s32.f32 %v127
    %v160 = vcvt.s32.f32 %v128
    %v161 = vcvt.s32.f32 %v129
    %v162 = vcvt.s32.f32 %v130
    %v163 = vcvt.s32.f32 %v131
    %v164 = vcvt.s32.f32 %v132
    %v165 = vcvt.s32.f32 %v133
    %v166 = vcvt.s32.f32 %v134
    %v167 = vcvt.s32.f32 %v135
    %v168 = vcvt.s32.f32 %v136
    %v169 = vcvt.s32.f32 %v137
    %v170 = vcvt.s32.f32 %v138
    %v171 = vcvt.s32.f32 %v139
    %v172 = vcvt.s32.f32 %v140
    %v173 = vcvt.s32.f32 %v141
    %v174 = vcvt.s32.f32 %v142
    %v175 = vcvt.s32.f32 %v143
    %v176 = vcvt.s32.f32 %v144
    %v177 = vcvt.s32.f32 %v145
    %v178 = vcvt.s32.f32 %v146
    %v179 = vcvt.s32.f32 %v147
    %v180 = vcvt.s32.f32 %v148
    %v181 = vcvt.s32.f32 %v149
    %v182 = vcvt.s32.f32 %v150
    %v183 = vcvt.s32.f32 %v151
    %v184 = vcvt.s32.f32 %v152
    %v185 = vcvt.s32.f32 %v153
    %218 = vst [vmem:[#allocation1] ss:$2 sm:$0xff] %v154
    %s219 = scalar_lea.vmem [#allocation1], 1
    %220 = vst [vmem:[%s219] ss:$2 sm:$0xff] %v158
    %s221 = scalar_lea.vmem [#allocation1], 16
    %222 = vst [vmem:[%s221] ss:$2 sm:$0xff] %v155
    %s223 = scalar_lea.vmem [#allocation1], 17
    %224 = vst [vmem:[%s223] ss:$2 sm:$0xff] %v159
    %s225 = scalar_lea.vmem [#allocation1], 32
    %226 = vst [vmem:[%s225] ss:$2 sm:$0xff] %v156
    %s227 = scalar_lea.vmem [#allocation1], 33
    %228 = vst [vmem:[%s227] ss:$2 sm:$0xff] %v160
    %s229 = scalar_lea.vmem [#allocation1], 48
    %230 = vst [vmem:[%s229] ss:$2 sm:$0xff] %v157
    %s231 = scalar_lea.vmem [#allocation1], 49
    %232 = vst [vmem:[%s231] ss:$2 sm:$0xff] %v161
    %v233 = vld.sshfl [vmem:[#allocation1] sm:$0xff pattern:$0x75316420]
    %v234 = vld.sshfl [vmem:[#allocation1 + $0x8] sm:$0xff pattern:$0x75316420]
    %v235 = vld.sshfl [vmem:[#allocation1 + $0x10] sm:$0xff pattern:$0x75316420]
    %v236 = vld.sshfl [vmem:[#allocation1 + $0x18] sm:$0xff pattern:$0x75316420]
    %v237 = vld.sshfl [vmem:[#allocation1 + $0x20] sm:$0xff pattern:$0x75316420]
    %v238 = vld.sshfl [vmem:[#allocation1 + $0x28] sm:$0xff pattern:$0x75316420]
    %v239 = vld.sshfl [vmem:[#allocation1 + $0x30] sm:$0xff pattern:$0x75316420]
    %v240 = vld.sshfl [vmem:[#allocation1 + $0x38] sm:$0xff pattern:$0x75316420]
    %241 = vst [vmem:[#allocation1] ss:$2 sm:$0xff] %v162
    %242 = vst [vmem:[%s219] ss:$2 sm:$0xff] %v166
    %243 = vst [vmem:[%s221] ss:$2 sm:$0xff] %v163
    %244 = vst [vmem:[%s223] ss:$2 sm:$0xff] %v167
    %245 = vst [vmem:[%s225] ss:$2 sm:$0xff] %v164
    %246 = vst [vmem:[%s227] ss:$2 sm:$0xff] %v168
    %247 = vst [vmem:[%s229] ss:$2 sm:$0xff] %v165
    %248 = vst [vmem:[%s231] ss:$2 sm:$0xff] %v169
    %v249 = vld.sshfl [vmem:[#allocation1] sm:$0xff pattern:$0x75316420]
    %v250 = vld.sshfl [vmem:[#allocation1 + $0x8] sm:$0xff pattern:$0x75316420]
    %v251 = vld.sshfl [vmem:[#allocation1 + $0x10] sm:$0xff pattern:$0x75316420]
    %v252 = vld.sshfl [vmem:[#allocation1 + $0x18] sm:$0xff pattern:$0x75316420]
    %v253 = vld.sshfl [vmem:[#allocation1 + $0x20] sm:$0xff pattern:$0x75316420]
    %v254 = vld.sshfl [vmem:[#allocation1 + $0x28] sm:$0xff pattern:$0x75316420]
    %v255 = vld.sshfl [vmem:[#allocation1 + $0x30] sm:$0xff pattern:$0x75316420]
    %v256 = vld.sshfl [vmem:[#allocation1 + $0x38] sm:$0xff pattern:$0x75316420]
    %257 = vst [vmem:[#allocation1] ss:$2 sm:$0xff] %v170
    %258 = vst [vmem:[%s219] ss:$2 sm:$0xff] %v174
    %259 = vst [vmem:[%s221] ss:$2 sm:$0xff] %v171
    %260 = vst [vmem:[%s223] ss:$2 sm:$0xff] %v175
    %261 = vst [vmem:[%s225] ss:$2 sm:$0xff] %v172
    %262 = vst [vmem:[%s227] ss:$2 sm:$0xff] %v176
    %263 = vst [vmem:[%s229] ss:$2 sm:$0xff] %v173
    %264 = vst [vmem:[%s231] ss:$2 sm:$0xff] %v177
    %v265 = vld.sshfl [vmem:[#allocation1] sm:$0xff pattern:$0x75316420]
    %v266 = vld.sshfl [vmem:[#allocation1 + $0x8] sm:$0xff pattern:$0x75316420]
    %v267 = vld.sshfl [vmem:[#allocation1 + $0x10] sm:$0xff pattern:$0x75316420]
    %v268 = vld.sshfl [vmem:[#allocation1 + $0x18] sm:$0xff pattern:$0x75316420]
    %v269 = vld.sshfl [vmem:[#allocation1 + $0x20] sm:$0xff pattern:$0x75316420]
    %v270 = vld.sshfl [vmem:[#allocation1 + $0x28] sm:$0xff pattern:$0x75316420]
    %v271 = vld.sshfl [vmem:[#allocation1 + $0x30] sm:$0xff pattern:$0x75316420]
    %v272 = vld.sshfl [vmem:[#allocation1 + $0x38] sm:$0xff pattern:$0x75316420]
    %273 = vst [vmem:[#allocation1] ss:$2 sm:$0xff] %v178
    %274 = vst [vmem:[%s219] ss:$2 sm:$0xff] %v182
    %275 = vst [vmem:[%s221] ss:$2 sm:$0xff] %v179
    %276 = vst [vmem:[%s223] ss:$2 sm:$0xff] %v183
    %277 = vst [vmem:[%s225] ss:$2 sm:$0xff] %v180
    %278 = vst [vmem:[%s227] ss:$2 sm:$0xff] %v184
    %279 = vst [vmem:[%s229] ss:$2 sm:$0xff] %v181
    %280 = vst [vmem:[%s231] ss:$2 sm:$0xff] %v185
    %v281 = vld.sshfl [vmem:[#allocation1] sm:$0xff pattern:$0x75316420]
    %v282 = vld.sshfl [vmem:[#allocation1 + $0x8] sm:$0xff pattern:$0x75316420]
    %v283 = vld.sshfl [vmem:[#allocation1 + $0x10] sm:$0xff pattern:$0x75316420]
    %v284 = vld.sshfl [vmem:[#allocation1 + $0x18] sm:$0xff pattern:$0x75316420]
    %v285 = vld.sshfl [vmem:[#allocation1 + $0x20] sm:$0xff pattern:$0x75316420]
    %v286 = vld.sshfl [vmem:[#allocation1 + $0x28] sm:$0xff pattern:$0x75316420]
    %v287 = vld.sshfl [vmem:[#allocation1 + $0x30] sm:$0xff pattern:$0x75316420]
    %v288 = vld.sshfl [vmem:[#allocation1 + $0x38] sm:$0xff pattern:$0x75316420]
    %v321 = vpack.c.bf16 %v249, %v233
    %v322 = vpack.c.bf16 %v250, %v234
    %v323 = vpack.c.bf16 %v251, %v235
    %v324 = vpack.c.bf16 %v252, %v236
    %v325 = vpack.c.bf16 %v253, %v237
    %v326 = vpack.c.bf16 %v254, %v238
    %v327 = vpack.c.bf16 %v255, %v239
    %v328 = vpack.c.bf16 %v256, %v240
    %v329 = vpack.c.bf16 %v281, %v265
    %v330 = vpack.c.bf16 %v282, %v266
    %v331 = vpack.c.bf16 %v283, %v267
    %v332 = vpack.c.bf16 %v284, %v268
    %v333 = vpack.c.bf16 %v285, %v269
    %v334 = vpack.c.bf16 %v286, %v270
    %v335 = vpack.c.bf16 %v287, %v271
    %v336 = vpack.c.bf16 %v288, %v272
    %v337 = vld [vmem:[#allocation5] sm:$0xff]
    %v338 = vld [vmem:[#allocation5 + $0x8] sm:$0xff]
    %v339 = vld [vmem:[#allocation5 + $0x10] sm:$0xff]
    %v340 = vld [vmem:[#allocation5 + $0x18] sm:$0xff]
    %v341 = vld [vmem:[#allocation5 + $0x20] sm:$0xff]
    %v342 = vld [vmem:[#allocation5 + $0x28] sm:$0xff]
    %v343 = vld [vmem:[#allocation5 + $0x30] sm:$0xff]
    %v344 = vld [vmem:[#allocation5 + $0x38] sm:$0xff]
    %v345 = vld [vmem:[#allocation5 + $0x40] sm:$0xff]
    %v346 = vld [vmem:[#allocation5 + $0x48] sm:$0xff]
    %v347 = vld [vmem:[#allocation5 + $0x50] sm:$0xff]
    %v348 = vld [vmem:[#allocation5 + $0x58] sm:$0xff]
    %v349 = vld [vmem:[#allocation5 + $0x60] sm:$0xff]
    %v350 = vld [vmem:[#allocation5 + $0x68] sm:$0xff]
    %v351 = vld [vmem:[#allocation5 + $0x70] sm:$0xff]
    %v352 = vld [vmem:[#allocation5 + $0x78] sm:$0xff]
    %v353 = vld [vmem:[#allocation5 + $0x80] sm:$0xff]
    %v354 = vld [vmem:[#allocation5 + $0x88] sm:$0xff]
    %v355 = vld [vmem:[#allocation5 + $0x90] sm:$0xff]
    %v356 = vld [vmem:[#allocation5 + $0x98] sm:$0xff]
    %v357 = vld [vmem:[#allocation5 + $0xa0] sm:$0xff]
    %v358 = vld [vmem:[#allocation5 + $0xa8] sm:$0xff]
    %v359 = vld [vmem:[#allocation5 + $0xb0] sm:$0xff]
    %v360 = vld [vmem:[#allocation5 + $0xb8] sm:$0xff]
    %v361 = vld [vmem:[#allocation5 + $0xc0] sm:$0xff]
    %v362 = vld [vmem:[#allocation5 + $0xc8] sm:$0xff]
    %v363 = vld [vmem:[#allocation5 + $0xd0] sm:$0xff]
    %v364 = vld [vmem:[#allocation5 + $0xd8] sm:$0xff]
    %v365 = vld [vmem:[#allocation5 + $0xe0] sm:$0xff]
    %v366 = vld [vmem:[#allocation5 + $0xe8] sm:$0xff]
    %v367 = vld [vmem:[#allocation5 + $0xf0] sm:$0xff]
    %v368 = vld [vmem:[#allocation5 + $0xf8] sm:$0xff]
    %v369 = vld [vmem:[#allocation5 + $0x100] sm:$0xff]
    %v370 = vld [vmem:[#allocation5 + $0x108] sm:$0xff]
    %v371 = vld [vmem:[#allocation5 + $0x110] sm:$0xff]
    %v372 = vld [vmem:[#allocation5 + $0x118] sm:$0xff]
    %v373 = vld [vmem:[#allocation5 + $0x120] sm:$0xff]
    %v374 = vld [vmem:[#allocation5 + $0x128] sm:$0xff]
    %v375 = vld [vmem:[#allocation5 + $0x130] sm:$0xff]
    %v376 = vld [vmem:[#allocation5 + $0x138] sm:$0xff]
    %v377 = vld [vmem:[#allocation5 + $0x140] sm:$0xff]
    %v378 = vld [vmem:[#allocation5 + $0x148] sm:$0xff]
    %v379 = vld [vmem:[#allocation5 + $0x150] sm:$0xff]
    %v380 = vld [vmem:[#allocation5 + $0x158] sm:$0xff]
    %v381 = vld [vmem:[#allocation5 + $0x160] sm:$0xff]
    %v382 = vld [vmem:[#allocation5 + $0x168] sm:$0xff]
    %v383 = vld [vmem:[#allocation5 + $0x170] sm:$0xff]
    %v384 = vld [vmem:[#allocation5 + $0x178] sm:$0xff]
    %v385 = vld [vmem:[#allocation5 + $0x180] sm:$0xff]
    %v386 = vld [vmem:[#allocation5 + $0x188] sm:$0xff]
    %v387 = vld [vmem:[#allocation5 + $0x190] sm:$0xff]
    %v388 = vld [vmem:[#allocation5 + $0x198] sm:$0xff]
    %v389 = vld [vmem:[#allocation5 + $0x1a0] sm:$0xff]
    %v390 = vld [vmem:[#allocation5 + $0x1a8] sm:$0xff]
    %v391 = vld [vmem:[#allocation5 + $0x1b0] sm:$0xff]
    %v392 = vld [vmem:[#allocation5 + $0x1b8] sm:$0xff]
    %v393 = vld [vmem:[#allocation5 + $0x1c0] sm:$0xff]
    %v394 = vld [vmem:[#allocation5 + $0x1c8] sm:$0xff]
    %v395 = vld [vmem:[#allocation5 + $0x1d0] sm:$0xff]
    %v396 = vld [vmem:[#allocation5 + $0x1d8] sm:$0xff]
    %v397 = vld [vmem:[#allocation5 + $0x1e0] sm:$0xff]
    %v398 = vld [vmem:[#allocation5 + $0x1e8] sm:$0xff]
    %v399 = vld [vmem:[#allocation5 + $0x1f0] sm:$0xff]
    %v400 = vld [vmem:[#allocation5 + $0x1f8] sm:$0xff]
    %v401 = vld [vmem:[#allocation5 + $0x200] sm:$0xff]
    %v402 = vld [vmem:[#allocation5 + $0x208] sm:$0xff]
    %v403 = vld [vmem:[#allocation5 + $0x210] sm:$0xff]
    %v404 = vld [vmem:[#allocation5 + $0x218] sm:$0xff]
    %v405 = vld [vmem:[#allocation5 + $0x220] sm:$0xff]
    %v406 = vld [vmem:[#allocation5 + $0x228] sm:$0xff]
    %v407 = vld [vmem:[#allocation5 + $0x230] sm:$0xff]
    %v408 = vld [vmem:[#allocation5 + $0x238] sm:$0xff]
    %v409 = vld [vmem:[#allocation5 + $0x240] sm:$0xff]
    %v410 = vld [vmem:[#allocation5 + $0x248] sm:$0xff]
    %v411 = vld [vmem:[#allocation5 + $0x250] sm:$0xff]
    %v412 = vld [vmem:[#allocation5 + $0x258] sm:$0xff]
    %v413 = vld [vmem:[#allocation5 + $0x260] sm:$0xff]
    %v414 = vld [vmem:[#allocation5 + $0x268] sm:$0xff]
    %v415 = vld [vmem:[#allocation5 + $0x270] sm:$0xff]
    %v416 = vld [vmem:[#allocation5 + $0x278] sm:$0xff]
    %v417 = vld [vmem:[#allocation5 + $0x280] sm:$0xff]
    %v418 = vld [vmem:[#allocation5 + $0x288] sm:$0xff]
    %v419 = vld [vmem:[#allocation5 + $0x290] sm:$0xff]
    %v420 = vld [vmem:[#allocation5 + $0x298] sm:$0xff]
    %v421 = vld [vmem:[#allocation5 + $0x2a0] sm:$0xff]
    %v422 = vld [vmem:[#allocation5 + $0x2a8] sm:$0xff]
    %v423 = vld [vmem:[#allocation5 + $0x2b0] sm:$0xff]
    %v424 = vld [vmem:[#allocation5 + $0x2b8] sm:$0xff]
    %v425 = vld [vmem:[#allocation5 + $0x2c0] sm:$0xff]
    %v426 = vld [vmem:[#allocation5 + $0x2c8] sm:$0xff]
    %v427 = vld [vmem:[#allocation5 + $0x2d0] sm:$0xff]
    %v428 = vld [vmem:[#allocation5 + $0x2d8] sm:$0xff]
    %v429 = vld [vmem:[#allocation5 + $0x2e0] sm:$0xff]
    %v430 = vld [vmem:[#allocation5 + $0x2e8] sm:$0xff]
    %v431 = vld [vmem:[#allocation5 + $0x2f0] sm:$0xff]
    %v432 = vld [vmem:[#allocation5 + $0x2f8] sm:$0xff]
    %v433 = vld [vmem:[#allocation5 + $0x300] sm:$0xff]
    %v434 = vld [vmem:[#allocation5 + $0x308] sm:$0xff]
    %v435 = vld [vmem:[#allocation5 + $0x310] sm:$0xff]
    %v436 = vld [vmem:[#allocation5 + $0x318] sm:$0xff]
    %v437 = vld [vmem:[#allocation5 + $0x320] sm:$0xff]
    %v438 = vld [vmem:[#allocation5 + $0x328] sm:$0xff]
    %v439 = vld [vmem:[#allocation5 + $0x330] sm:$0xff]
    %v440 = vld [vmem:[#allocation5 + $0x338] sm:$0xff]
    %v441 = vld [vmem:[#allocation5 + $0x340] sm:$0xff]
    %v442 = vld [vmem:[#allocation5 + $0x348] sm:$0xff]
    %v443 = vld [vmem:[#allocation5 + $0x350] sm:$0xff]
    %v444 = vld [vmem:[#allocation5 + $0x358] sm:$0xff]
    %v445 = vld [vmem:[#allocation5 + $0x360] sm:$0xff]
    %v446 = vld [vmem:[#allocation5 + $0x368] sm:$0xff]
    %v447 = vld [vmem:[#allocation5 + $0x370] sm:$0xff]
    %v448 = vld [vmem:[#allocation5 + $0x378] sm:$0xff]
    %v449 = vld [vmem:[#allocation5 + $0x380] sm:$0xff]
    %v450 = vld [vmem:[#allocation5 + $0x388] sm:$0xff]
    %v451 = vld [vmem:[#allocation5 + $0x390] sm:$0xff]
    %v452 = vld [vmem:[#allocation5 + $0x398] sm:$0xff]
    %v453 = vld [vmem:[#allocation5 + $0x3a0] sm:$0xff]
    %v454 = vld [vmem:[#allocation5 + $0x3a8] sm:$0xff]
    %v455 = vld [vmem:[#allocation5 + $0x3b0] sm:$0xff]
    %v456 = vld [vmem:[#allocation5 + $0x3b8] sm:$0xff]
    %v457 = vld [vmem:[#allocation5 + $0x3c0] sm:$0xff]
    %v458 = vld [vmem:[#allocation5 + $0x3c8] sm:$0xff]
    %v459 = vld [vmem:[#allocation5 + $0x3d0] sm:$0xff]
    %v460 = vld [vmem:[#allocation5 + $0x3d8] sm:$0xff]
    %v461 = vld [vmem:[#allocation5 + $0x3e0] sm:$0xff]
    %v462 = vld [vmem:[#allocation5 + $0x3e8] sm:$0xff]
    %v463 = vld [vmem:[#allocation5 + $0x3f0] sm:$0xff]
    %v464 = vld [vmem:[#allocation5 + $0x3f8] sm:$0xff]
    %v465 = vld [vmem:[#allocation5 + $0x400] sm:$0xff]
    %v466 = vld [vmem:[#allocation5 + $0x408] sm:$0xff]
    %v467 = vld [vmem:[#allocation5 + $0x410] sm:$0xff]
    %v468 = vld [vmem:[#allocation5 + $0x418] sm:$0xff]
    %v469 = vld [vmem:[#allocation5 + $0x420] sm:$0xff]
    %v470 = vld [vmem:[#allocation5 + $0x428] sm:$0xff]
    %v471 = vld [vmem:[#allocation5 + $0x430] sm:$0xff]
    %v472 = vld [vmem:[#allocation5 + $0x438] sm:$0xff]
    %v473 = vld [vmem:[#allocation5 + $0x440] sm:$0xff]
    %v474 = vld [vmem:[#allocation5 + $0x448] sm:$0xff]
    %v475 = vld [vmem:[#allocation5 + $0x450] sm:$0xff]
    %v476 = vld [vmem:[#allocation5 + $0x458] sm:$0xff]
    %v477 = vld [vmem:[#allocation5 + $0x460] sm:$0xff]
    %v478 = vld [vmem:[#allocation5 + $0x468] sm:$0xff]
    %v479 = vld [vmem:[#allocation5 + $0x470] sm:$0xff]
    %v480 = vld [vmem:[#allocation5 + $0x478] sm:$0xff]
    %v481 = vld [vmem:[#allocation5 + $0x480] sm:$0xff]
    %v482 = vld [vmem:[#allocation5 + $0x488] sm:$0xff]
    %v483 = vld [vmem:[#allocation5 + $0x490] sm:$0xff]
    %v484 = vld [vmem:[#allocation5 + $0x498] sm:$0xff]
    %v485 = vld [vmem:[#allocation5 + $0x4a0] sm:$0xff]
    %v486 = vld [vmem:[#allocation5 + $0x4a8] sm:$0xff]
    %v487 = vld [vmem:[#allocation5 + $0x4b0] sm:$0xff]
    %v488 = vld [vmem:[#allocation5 + $0x4b8] sm:$0xff]
    %v489 = vld [vmem:[#allocation5 + $0x4c0] sm:$0xff]
    %v490 = vld [vmem:[#allocation5 + $0x4c8] sm:$0xff]
    %v491 = vld [vmem:[#allocation5 + $0x4d0] sm:$0xff]
    %v492 = vld [vmem:[#allocation5 + $0x4d8] sm:$0xff]
    %v493 = vld [vmem:[#allocation5 + $0x4e0] sm:$0xff]
    %v494 = vld [vmem:[#allocation5 + $0x4e8] sm:$0xff]
    %v495 = vld [vmem:[#allocation5 + $0x4f0] sm:$0xff]
    %v496 = vld [vmem:[#allocation5 + $0x4f8] sm:$0xff]
    %v497 = vld [vmem:[#allocation5 + $0x500] sm:$0xff]
    %v498 = vld [vmem:[#allocation5 + $0x508] sm:$0xff]
    %v499 = vld [vmem:[#allocation5 + $0x510] sm:$0xff]
    %v500 = vld [vmem:[#allocation5 + $0x518] sm:$0xff]
    %v501 = vld [vmem:[#allocation5 + $0x520] sm:$0xff]
    %v502 = vld [vmem:[#allocation5 + $0x528] sm:$0xff]
    %v503 = vld [vmem:[#allocation5 + $0x530] sm:$0xff]
    %v504 = vld [vmem:[#allocation5 + $0x538] sm:$0xff]
    %v505 = vld [vmem:[#allocation5 + $0x540] sm:$0xff]
    %v506 = vld [vmem:[#allocation5 + $0x548] sm:$0xff]
    %v507 = vld [vmem:[#allocation5 + $0x550] sm:$0xff]
    %v508 = vld [vmem:[#allocation5 + $0x558] sm:$0xff]
    %v509 = vld [vmem:[#allocation5 + $0x560] sm:$0xff]
    %v510 = vld [vmem:[#allocation5 + $0x568] sm:$0xff]
    %v511 = vld [vmem:[#allocation5 + $0x570] sm:$0xff]
    %v512 = vld [vmem:[#allocation5 + $0x578] sm:$0xff]
    %v513 = vld [vmem:[#allocation5 + $0x580] sm:$0xff]
    %v514 = vld [vmem:[#allocation5 + $0x588] sm:$0xff]
    %v515 = vld [vmem:[#allocation5 + $0x590] sm:$0xff]
    %v516 = vld [vmem:[#allocation5 + $0x598] sm:$0xff]
    %v517 = vld [vmem:[#allocation5 + $0x5a0] sm:$0xff]
    %v518 = vld [vmem:[#allocation5 + $0x5a8] sm:$0xff]
    %v519 = vld [vmem:[#allocation5 + $0x5b0] sm:$0xff]
    %v520 = vld [vmem:[#allocation5 + $0x5b8] sm:$0xff]
    %v521 = vld [vmem:[#allocation5 + $0x5c0] sm:$0xff]
    %v522 = vld [vmem:[#allocation5 + $0x5c8] sm:$0xff]
    %v523 = vld [vmem:[#allocation5 + $0x5d0] sm:$0xff]
    %v524 = vld [vmem:[#allocation5 + $0x5d8] sm:$0xff]
    %v525 = vld [vmem:[#allocation5 + $0x5e0] sm:$0xff]
    %v526 = vld [vmem:[#allocation5 + $0x5e8] sm:$0xff]
    %v527 = vld [vmem:[#allocation5 + $0x5f0] sm:$0xff]
    %v528 = vld [vmem:[#allocation5 + $0x5f8] sm:$0xff]
    %v529 = vld [vmem:[#allocation5 + $0x600] sm:$0xff]
    %v530 = vld [vmem:[#allocation5 + $0x608] sm:$0xff]
    %v531 = vld [vmem:[#allocation5 + $0x610] sm:$0xff]
    %v532 = vld [vmem:[#allocation5 + $0x618] sm:$0xff]
    %v533 = vld [vmem:[#allocation5 + $0x620] sm:$0xff]
    %v534 = vld [vmem:[#allocation5 + $0x628] sm:$0xff]
    %v535 = vld [vmem:[#allocation5 + $0x630] sm:$0xff]
    %v536 = vld [vmem:[#allocation5 + $0x638] sm:$0xff]
    %v537 = vld [vmem:[#allocation5 + $0x640] sm:$0xff]
    %v538 = vld [vmem:[#allocation5 + $0x648] sm:$0xff]
    %v539 = vld [vmem:[#allocation5 + $0x650] sm:$0xff]
    %v540 = vld [vmem:[#allocation5 + $0x658] sm:$0xff]
    %v541 = vld [vmem:[#allocation5 + $0x660] sm:$0xff]
    %v542 = vld [vmem:[#allocation5 + $0x668] sm:$0xff]
    %v543 = vld [vmem:[#allocation5 + $0x670] sm:$0xff]
    %v544 = vld [vmem:[#allocation5 + $0x678] sm:$0xff]
    %v545 = vld [vmem:[#allocation5 + $0x680] sm:$0xff]
    %v546 = vld [vmem:[#allocation5 + $0x688] sm:$0xff]
    %v547 = vld [vmem:[#allocation5 + $0x690] sm:$0xff]
    %v548 = vld [vmem:[#allocation5 + $0x698] sm:$0xff]
    %v549 = vld [vmem:[#allocation5 + $0x6a0] sm:$0xff]
    %v550 = vld [vmem:[#allocation5 + $0x6a8] sm:$0xff]
    %v551 = vld [vmem:[#allocation5 + $0x6b0] sm:$0xff]
    %v552 = vld [vmem:[#allocation5 + $0x6b8] sm:$0xff]
    %v553 = vld [vmem:[#allocation5 + $0x6c0] sm:$0xff]
    %v554 = vld [vmem:[#allocation5 + $0x6c8] sm:$0xff]
    %v555 = vld [vmem:[#allocation5 + $0x6d0] sm:$0xff]
    %v556 = vld [vmem:[#allocation5 + $0x6d8] sm:$0xff]
    %v557 = vld [vmem:[#allocation5 + $0x6e0] sm:$0xff]
    %v558 = vld [vmem:[#allocation5 + $0x6e8] sm:$0xff]
    %v559 = vld [vmem:[#allocation5 + $0x6f0] sm:$0xff]
    %v560 = vld [vmem:[#allocation5 + $0x6f8] sm:$0xff]
    %v561 = vld [vmem:[#allocation5 + $0x700] sm:$0xff]
    %v562 = vld [vmem:[#allocation5 + $0x708] sm:$0xff]
    %v563 = vld [vmem:[#allocation5 + $0x710] sm:$0xff]
    %v564 = vld [vmem:[#allocation5 + $0x718] sm:$0xff]
    %v565 = vld [vmem:[#allocation5 + $0x720] sm:$0xff]
    %v566 = vld [vmem:[#allocation5 + $0x728] sm:$0xff]
    %v567 = vld [vmem:[#allocation5 + $0x730] sm:$0xff]
    %v568 = vld [vmem:[#allocation5 + $0x738] sm:$0xff]
    %v569 = vld [vmem:[#allocation5 + $0x740] sm:$0xff]
    %v570 = vld [vmem:[#allocation5 + $0x748] sm:$0xff]
    %v571 = vld [vmem:[#allocation5 + $0x750] sm:$0xff]
    %v572 = vld [vmem:[#allocation5 + $0x758] sm:$0xff]
    %v573 = vld [vmem:[#allocation5 + $0x760] sm:$0xff]
    %v574 = vld [vmem:[#allocation5 + $0x768] sm:$0xff]
    %v575 = vld [vmem:[#allocation5 + $0x770] sm:$0xff]
    %v576 = vld [vmem:[#allocation5 + $0x778] sm:$0xff]
    %v577 = vld [vmem:[#allocation5 + $0x780] sm:$0xff]
    %v578 = vld [vmem:[#allocation5 + $0x788] sm:$0xff]
    %v579 = vld [vmem:[#allocation5 + $0x790] sm:$0xff]
    %v580 = vld [vmem:[#allocation5 + $0x798] sm:$0xff]
    %v581 = vld [vmem:[#allocation5 + $0x7a0] sm:$0xff]
    %v582 = vld [vmem:[#allocation5 + $0x7a8] sm:$0xff]
    %v583 = vld [vmem:[#allocation5 + $0x7b0] sm:$0xff]
    %v584 = vld [vmem:[#allocation5 + $0x7b8] sm:$0xff]
    %v585 = vld [vmem:[#allocation5 + $0x7c0] sm:$0xff]
    %v586 = vld [vmem:[#allocation5 + $0x7c8] sm:$0xff]
    %v587 = vld [vmem:[#allocation5 + $0x7d0] sm:$0xff]
    %v588 = vld [vmem:[#allocation5 + $0x7d8] sm:$0xff]
    %v589 = vld [vmem:[#allocation5 + $0x7e0] sm:$0xff]
    %v590 = vld [vmem:[#allocation5 + $0x7e8] sm:$0xff]
    %v591 = vld [vmem:[#allocation5 + $0x7f0] sm:$0xff]
    %v592 = vld [vmem:[#allocation5 + $0x7f8] sm:$0xff]
    %v593 = vld [vmem:[#allocation7] sm:$0xf]
    %v595 = vperm.slane %v593, 0
    %v596 = vperm.slane %v593, 1
    %v597 = vperm.slane %v593, 2
    %v598 = vperm.slane %v593, 3
    %v859 = vunpack.c.l.b16 %v337
    %v860 = vunpack.c.h.b16 %v337
    %v861 = vunpack.c.l.b16 %v338
    %v862 = vunpack.c.h.b16 %v338
    %v863 = vunpack.c.l.b16 %v339
    %v864 = vunpack.c.h.b16 %v339
    %v865 = vunpack.c.l.b16 %v340
    %v866 = vunpack.c.h.b16 %v340
    %v867 = vunpack.c.l.b16 %v341
    %v868 = vunpack.c.h.b16 %v341
    %v869 = vunpack.c.l.b16 %v342
    %v870 = vunpack.c.h.b16 %v342
    %v871 = vunpack.c.l.b16 %v343
    %v872 = vunpack.c.h.b16 %v343
    %v873 = vunpack.c.l.b16 %v344
    %v874 = vunpack.c.h.b16 %v344
    %v875 = vunpack.c.l.b16 %v345
    %v876 = vunpack.c.h.b16 %v345
    %v877 = vunpack.c.l.b16 %v346
    %v878 = vunpack.c.h.b16 %v346
    %v879 = vunpack.c.l.b16 %v347
    %v880 = vunpack.c.h.b16 %v347
    %v881 = vunpack.c.l.b16 %v348
    %v882 = vunpack.c.h.b16 %v348
    %v883 = vunpack.c.l.b16 %v349
    %v884 = vunpack.c.h.b16 %v349
    %v885 = vunpack.c.l.b16 %v350
    %v886 = vunpack.c.h.b16 %v350
    %v887 = vunpack.c.l.b16 %v351
    %v888 = vunpack.c.h.b16 %v351
    %v889 = vunpack.c.l.b16 %v352
    %v890 = vunpack.c.h.b16 %v352
    %v891 = vunpack.c.l.b16 %v353
    %v892 = vunpack.c.h.b16 %v353
    %v893 = vunpack.c.l.b16 %v354
    %v894 = vunpack.c.h.b16 %v354
    %v895 = vunpack.c.l.b16 %v355
    %v896 = vunpack.c.h.b16 %v355
    %v897 = vunpack.c.l.b16 %v356
    %v898 = vunpack.c.h.b16 %v356
    %v899 = vunpack.c.l.b16 %v357
    %v900 = vunpack.c.h.b16 %v357
    %v901 = vunpack.c.l.b16 %v358
    %v902 = vunpack.c.h.b16 %v358
    %v903 = vunpack.c.l.b16 %v359
    %v904 = vunpack.c.h.b16 %v359
    %v905 = vunpack.c.l.b16 %v360
    %v906 = vunpack.c.h.b16 %v360
    %v907 = vunpack.c.l.b16 %v361
    %v908 = vunpack.c.h.b16 %v361
    %v909 = vunpack.c.l.b16 %v362
    %v910 = vunpack.c.h.b16 %v362
    %v911 = vunpack.c.l.b16 %v363
    %v912 = vunpack.c.h.b16 %v363
    %v913 = vunpack.c.l.b16 %v364
    %v914 = vunpack.c.h.b16 %v364
    %v915 = vunpack.c.l.b16 %v365
    %v916 = vunpack.c.h.b16 %v365
    %v917 = vunpack.c.l.b16 %v366
    %v918 = vunpack.c.h.b16 %v366
    %v919 = vunpack.c.l.b16 %v367
    %v920 = vunpack.c.h.b16 %v367
    %v921 = vunpack.c.l.b16 %v368
    %v922 = vunpack.c.h.b16 %v368
    %v923 = vunpack.c.l.b16 %v369
    %v924 = vunpack.c.h.b16 %v369
    %v925 = vunpack.c.l.b16 %v370
    %v926 = vunpack.c.h.b16 %v370
    %v927 = vunpack.c.l.b16 %v371
    %v928 = vunpack.c.h.b16 %v371
    %v929 = vunpack.c.l.b16 %v372
    %v930 = vunpack.c.h.b16 %v372
    %v931 = vunpack.c.l.b16 %v373
    %v932 = vunpack.c.h.b16 %v373
    %v933 = vunpack.c.l.b16 %v374
    %v934 = vunpack.c.h.b16 %v374
    %v935 = vunpack.c.l.b16 %v375
    %v936 = vunpack.c.h.b16 %v375
    %v937 = vunpack.c.l.b16 %v376
    %v938 = vunpack.c.h.b16 %v376
    %v939 = vunpack.c.l.b16 %v377
    %v940 = vunpack.c.h.b16 %v377
    %v941 = vunpack.c.l.b16 %v378
    %v942 = vunpack.c.h.b16 %v378
    %v943 = vunpack.c.l.b16 %v379
    %v944 = vunpack.c.h.b16 %v379
    %v945 = vunpack.c.l.b16 %v380
    %v946 = vunpack.c.h.b16 %v380
    %v947 = vunpack.c.l.b16 %v381
    %v948 = vunpack.c.h.b16 %v381
    %v949 = vunpack.c.l.b16 %v382
    %v950 = vunpack.c.h.b16 %v382
    %v951 = vunpack.c.l.b16 %v383
    %v952 = vunpack.c.h.b16 %v383
    %v953 = vunpack.c.l.b16 %v384
    %v954 = vunpack.c.h.b16 %v384
    %v955 = vunpack.c.l.b16 %v385
    %v956 = vunpack.c.h.b16 %v385
    %v957 = vunpack.c.l.b16 %v386
    %v958 = vunpack.c.h.b16 %v386
    %v959 = vunpack.c.l.b16 %v387
    %v960 = vunpack.c.h.b16 %v387
    %v961 = vunpack.c.l.b16 %v388
    %v962 = vunpack.c.h.b16 %v388
    %v963 = vunpack.c.l.b16 %v389
    %v964 = vunpack.c.h.b16 %v389
    %v965 = vunpack.c.l.b16 %v390
    %v966 = vunpack.c.h.b16 %v390
    %v967 = vunpack.c.l.b16 %v391
    %v968 = vunpack.c.h.b16 %v391
    %v969 = vunpack.c.l.b16 %v392
    %v970 = vunpack.c.h.b16 %v392
    %v971 = vunpack.c.l.b16 %v393
    %v972 = vunpack.c.h.b16 %v393
    %v973 = vunpack.c.l.b16 %v394
    %v974 = vunpack.c.h.b16 %v394
    %v975 = vunpack.c.l.b16 %v395
    %v976 = vunpack.c.h.b16 %v395
    %v977 = vunpack.c.l.b16 %v396
    %v978 = vunpack.c.h.b16 %v396
    %v979 = vunpack.c.l.b16 %v397
    %v980 = vunpack.c.h.b16 %v397
    %v981 = vunpack.c.l.b16 %v398
    %v982 = vunpack.c.h.b16 %v398
    %v983 = vunpack.c.l.b16 %v399
    %v984 = vunpack.c.h.b16 %v399
    %v985 = vunpack.c.l.b16 %v400
    %v986 = vunpack.c.h.b16 %v400
    %v987 = vunpack.c.l.b16 %v401
    %v988 = vunpack.c.h.b16 %v401
    %v989 = vunpack.c.l.b16 %v402
    %v990 = vunpack.c.h.b16 %v402
    %v991 = vunpack.c.l.b16 %v403
    %v992 = vunpack.c.h.b16 %v403
    %v993 = vunpack.c.l.b16 %v404
    %v994 = vunpack.c.h.b16 %v404
    %v995 = vunpack.c.l.b16 %v405
    %v996 = vunpack.c.h.b16 %v405
    %v997 = vunpack.c.l.b16 %v406
    %v998 = vunpack.c.h.b16 %v406
    %v999 = vunpack.c.l.b16 %v407
    %v1000 = vunpack.c.h.b16 %v407
    %v1001 = vunpack.c.l.b16 %v408
    %v1002 = vunpack.c.h.b16 %v408
    %v1003 = vunpack.c.l.b16 %v409
    %v1004 = vunpack.c.h.b16 %v409
    %v1005 = vunpack.c.l.b16 %v410
    %v1006 = vunpack.c.h.b16 %v410
    %v1007 = vunpack.c.l.b16 %v411
    %v1008 = vunpack.c.h.b16 %v411
    %v1009 = vunpack.c.l.b16 %v412
    %v1010 = vunpack.c.h.b16 %v412
    %v1011 = vunpack.c.l.b16 %v413
    %v1012 = vunpack.c.h.b16 %v413
    %v1013 = vunpack.c.l.b16 %v414
    %v1014 = vunpack.c.h.b16 %v414
    %v1015 = vunpack.c.l.b16 %v415
    %v1016 = vunpack.c.h.b16 %v415
    %v1017 = vunpack.c.l.b16 %v416
    %v1018 = vunpack.c.h.b16 %v416
    %v1019 = vunpack.c.l.b16 %v417
    %v1020 = vunpack.c.h.b16 %v417
    %v1021 = vunpack.c.l.b16 %v418
    %v1022 = vunpack.c.h.b16 %v418
    %v1023 = vunpack.c.l.b16 %v419
    %v1024 = vunpack.c.h.b16 %v419
    %v1025 = vunpack.c.l.b16 %v420
    %v1026 = vunpack.c.h.b16 %v420
    %v1027 = vunpack.c.l.b16 %v421
    %v1028 = vunpack.c.h.b16 %v421
    %v1029 = vunpack.c.l.b16 %v422
    %v1030 = vunpack.c.h.b16 %v422
    %v1031 = vunpack.c.l.b16 %v423
    %v1032 = vunpack.c.h.b16 %v423
    %v1033 = vunpack.c.l.b16 %v424
    %v1034 = vunpack.c.h.b16 %v424
    %v1035 = vunpack.c.l.b16 %v425
    %v1036 = vunpack.c.h.b16 %v425
    %v1037 = vunpack.c.l.b16 %v426
    %v1038 = vunpack.c.h.b16 %v426
    %v1039 = vunpack.c.l.b16 %v427
    %v1040 = vunpack.c.h.b16 %v427
    %v1041 = vunpack.c.l.b16 %v428
    %v1042 = vunpack.c.h.b16 %v428
    %v1043 = vunpack.c.l.b16 %v429
    %v1044 = vunpack.c.h.b16 %v429
    %v1045 = vunpack.c.l.b16 %v430
    %v1046 = vunpack.c.h.b16 %v430
    %v1047 = vunpack.c.l.b16 %v431
    %v1048 = vunpack.c.h.b16 %v431
    %v1049 = vunpack.c.l.b16 %v432
    %v1050 = vunpack.c.h.b16 %v432
    %v1051 = vunpack.c.l.b16 %v433
    %v1052 = vunpack.c.h.b16 %v433
    %v1053 = vunpack.c.l.b16 %v434
    %v1054 = vunpack.c.h.b16 %v434
    %v1055 = vunpack.c.l.b16 %v435
    %v1056 = vunpack.c.h.b16 %v435
    %v1057 = vunpack.c.l.b16 %v436
    %v1058 = vunpack.c.h.b16 %v436
    %v1059 = vunpack.c.l.b16 %v437
    %v1060 = vunpack.c.h.b16 %v437
    %v1061 = vunpack.c.l.b16 %v438
    %v1062 = vunpack.c.h.b16 %v438
    %v1063 = vunpack.c.l.b16 %v439
    %v1064 = vunpack.c.h.b16 %v439
    %v1065 = vunpack.c.l.b16 %v440
    %v1066 = vunpack.c.h.b16 %v440
    %v1067 = vunpack.c.l.b16 %v441
    %v1068 = vunpack.c.h.b16 %v441
    %v1069 = vunpack.c.l.b16 %v442
    %v1070 = vunpack.c.h.b16 %v442
    %v1071 = vunpack.c.l.b16 %v443
    %v1072 = vunpack.c.h.b16 %v443
    %v1073 = vunpack.c.l.b16 %v444
    %v1074 = vunpack.c.h.b16 %v444
    %v1075 = vunpack.c.l.b16 %v445
    %v1076 = vunpack.c.h.b16 %v445
    %v1077 = vunpack.c.l.b16 %v446
    %v1078 = vunpack.c.h.b16 %v446
    %v1079 = vunpack.c.l.b16 %v447
    %v1080 = vunpack.c.h.b16 %v447
    %v1081 = vunpack.c.l.b16 %v448
    %v1082 = vunpack.c.h.b16 %v448
    %v1083 = vunpack.c.l.b16 %v449
    %v1084 = vunpack.c.h.b16 %v449
    %v1085 = vunpack.c.l.b16 %v450
    %v1086 = vunpack.c.h.b16 %v450
    %v1087 = vunpack.c.l.b16 %v451
    %v1088 = vunpack.c.h.b16 %v451
    %v1089 = vunpack.c.l.b16 %v452
    %v1090 = vunpack.c.h.b16 %v452
    %v1091 = vunpack.c.l.b16 %v453
    %v1092 = vunpack.c.h.b16 %v453
    %v1093 = vunpack.c.l.b16 %v454
    %v1094 = vunpack.c.h.b16 %v454
    %v1095 = vunpack.c.l.b16 %v455
    %v1096 = vunpack.c.h.b16 %v455
    %v1097 = vunpack.c.l.b16 %v456
    %v1098 = vunpack.c.h.b16 %v456
    %v1099 = vunpack.c.l.b16 %v457
    %v1100 = vunpack.c.h.b16 %v457
    %v1101 = vunpack.c.l.b16 %v458
    %v1102 = vunpack.c.h.b16 %v458
    %v1103 = vunpack.c.l.b16 %v459
    %v1104 = vunpack.c.h.b16 %v459
    %v1105 = vunpack.c.l.b16 %v460
    %v1106 = vunpack.c.h.b16 %v460
    %v1107 = vunpack.c.l.b16 %v461
    %v1108 = vunpack.c.h.b16 %v461
    %v1109 = vunpack.c.l.b16 %v462
    %v1110 = vunpack.c.h.b16 %v462
    %v1111 = vunpack.c.l.b16 %v463
    %v1112 = vunpack.c.h.b16 %v463
    %v1113 = vunpack.c.l.b16 %v464
    %v1114 = vunpack.c.h.b16 %v464
    %v1115 = vunpack.c.l.b16 %v465
    %v1116 = vunpack.c.h.b16 %v465
    %v1117 = vunpack.c.l.b16 %v466
    %v1118 = vunpack.c.h.b16 %v466
    %v1119 = vunpack.c.l.b16 %v467
    %v1120 = vunpack.c.h.b16 %v467
    %v1121 = vunpack.c.l.b16 %v468
    %v1122 = vunpack.c.h.b16 %v468
    %v1123 = vunpack.c.l.b16 %v469
    %v1124 = vunpack.c.h.b16 %v469
    %v1125 = vunpack.c.l.b16 %v470
    %v1126 = vunpack.c.h.b16 %v470
    %v1127 = vunpack.c.l.b16 %v471
    %v1128 = vunpack.c.h.b16 %v471
    %v1129 = vunpack.c.l.b16 %v472
    %v1130 = vunpack.c.h.b16 %v472
    %v1131 = vunpack.c.l.b16 %v473
    %v1132 = vunpack.c.h.b16 %v473
    %v1133 = vunpack.c.l.b16 %v474
    %v1134 = vunpack.c.h.b16 %v474
    %v1135 = vunpack.c.l.b16 %v475
    %v1136 = vunpack.c.h.b16 %v475
    %v1137 = vunpack.c.l.b16 %v476
    %v1138 = vunpack.c.h.b16 %v476
    %v1139 = vunpack.c.l.b16 %v477
    %v1140 = vunpack.c.h.b16 %v477
    %v1141 = vunpack.c.l.b16 %v478
    %v1142 = vunpack.c.h.b16 %v478
    %v1143 = vunpack.c.l.b16 %v479
    %v1144 = vunpack.c.h.b16 %v479
    %v1145 = vunpack.c.l.b16 %v480
    %v1146 = vunpack.c.h.b16 %v480
    %v1147 = vunpack.c.l.b16 %v481
    %v1148 = vunpack.c.h.b16 %v481
    %v1149 = vunpack.c.l.b16 %v482
    %v1150 = vunpack.c.h.b16 %v482
    %v1151 = vunpack.c.l.b16 %v483
    %v1152 = vunpack.c.h.b16 %v483
    %v1153 = vunpack.c.l.b16 %v484
    %v1154 = vunpack.c.h.b16 %v484
    %v1155 = vunpack.c.l.b16 %v485
    %v1156 = vunpack.c.h.b16 %v485
    %v1157 = vunpack.c.l.b16 %v486
    %v1158 = vunpack.c.h.b16 %v486
    %v1159 = vunpack.c.l.b16 %v487
    %v1160 = vunpack.c.h.b16 %v487
    %v1161 = vunpack.c.l.b16 %v488
    %v1162 = vunpack.c.h.b16 %v488
    %v1163 = vunpack.c.l.b16 %v489
    %v1164 = vunpack.c.h.b16 %v489
    %v1165 = vunpack.c.l.b16 %v490
    %v1166 = vunpack.c.h.b16 %v490
    %v1167 = vunpack.c.l.b16 %v491
    %v1168 = vunpack.c.h.b16 %v491
    %v1169 = vunpack.c.l.b16 %v492
    %v1170 = vunpack.c.h.b16 %v492
    %v1171 = vunpack.c.l.b16 %v493
    %v1172 = vunpack.c.h.b16 %v493
    %v1173 = vunpack.c.l.b16 %v494
    %v1174 = vunpack.c.h.b16 %v494
    %v1175 = vunpack.c.l.b16 %v495
    %v1176 = vunpack.c.h.b16 %v495
    %v1177 = vunpack.c.l.b16 %v496
    %v1178 = vunpack.c.h.b16 %v496
    %v1179 = vunpack.c.l.b16 %v497
    %v1180 = vunpack.c.h.b16 %v497
    %v1181 = vunpack.c.l.b16 %v498
    %v1182 = vunpack.c.h.b16 %v498
    %v1183 = vunpack.c.l.b16 %v499
    %v1184 = vunpack.c.h.b16 %v499
    %v1185 = vunpack.c.l.b16 %v500
    %v1186 = vunpack.c.h.b16 %v500
    %v1187 = vunpack.c.l.b16 %v501
    %v1188 = vunpack.c.h.b16 %v501
    %v1189 = vunpack.c.l.b16 %v502
    %v1190 = vunpack.c.h.b16 %v502
    %v1191 = vunpack.c.l.b16 %v503
    %v1192 = vunpack.c.h.b16 %v503
    %v1193 = vunpack.c.l.b16 %v504
    %v1194 = vunpack.c.h.b16 %v504
    %v1195 = vunpack.c.l.b16 %v505
    %v1196 = vunpack.c.h.b16 %v505
    %v1197 = vunpack.c.l.b16 %v506
    %v1198 = vunpack.c.h.b16 %v506
    %v1199 = vunpack.c.l.b16 %v507
    %v1200 = vunpack.c.h.b16 %v507
    %v1201 = vunpack.c.l.b16 %v508
    %v1202 = vunpack.c.h.b16 %v508
    %v1203 = vunpack.c.l.b16 %v509
    %v1204 = vunpack.c.h.b16 %v509
    %v1205 = vunpack.c.l.b16 %v510
    %v1206 = vunpack.c.h.b16 %v510
    %v1207 = vunpack.c.l.b16 %v511
    %v1208 = vunpack.c.h.b16 %v511
    %v1209 = vunpack.c.l.b16 %v512
    %v1210 = vunpack.c.h.b16 %v512
    %v1211 = vunpack.c.l.b16 %v513
    %v1212 = vunpack.c.h.b16 %v513
    %v1213 = vunpack.c.l.b16 %v514
    %v1214 = vunpack.c.h.b16 %v514
    %v1215 = vunpack.c.l.b16 %v515
    %v1216 = vunpack.c.h.b16 %v515
    %v1217 = vunpack.c.l.b16 %v516
    %v1218 = vunpack.c.h.b16 %v516
    %v1219 = vunpack.c.l.b16 %v517
    %v1220 = vunpack.c.h.b16 %v517
    %v1221 = vunpack.c.l.b16 %v518
    %v1222 = vunpack.c.h.b16 %v518
    %v1223 = vunpack.c.l.b16 %v519
    %v1224 = vunpack.c.h.b16 %v519
    %v1225 = vunpack.c.l.b16 %v520
    %v1226 = vunpack.c.h.b16 %v520
    %v1227 = vunpack.c.l.b16 %v521
    %v1228 = vunpack.c.h.b16 %v521
    %v1229 = vunpack.c.l.b16 %v522
    %v1230 = vunpack.c.h.b16 %v522
    %v1231 = vunpack.c.l.b16 %v523
    %v1232 = vunpack.c.h.b16 %v523
    %v1233 = vunpack.c.l.b16 %v524
    %v1234 = vunpack.c.h.b16 %v524
    %v1235 = vunpack.c.l.b16 %v525
    %v1236 = vunpack.c.h.b16 %v525
    %v1237 = vunpack.c.l.b16 %v526
    %v1238 = vunpack.c.h.b16 %v526
    %v1239 = vunpack.c.l.b16 %v527
    %v1240 = vunpack.c.h.b16 %v527
    %v1241 = vunpack.c.l.b16 %v528
    %v1242 = vunpack.c.h.b16 %v528
    %v1243 = vunpack.c.l.b16 %v529
    %v1244 = vunpack.c.h.b16 %v529
    %v1245 = vunpack.c.l.b16 %v530
    %v1246 = vunpack.c.h.b16 %v530
    %v1247 = vunpack.c.l.b16 %v531
    %v1248 = vunpack.c.h.b16 %v531
    %v1249 = vunpack.c.l.b16 %v532
    %v1250 = vunpack.c.h.b16 %v532
    %v1251 = vunpack.c.l.b16 %v533
    %v1252 = vunpack.c.h.b16 %v533
    %v1253 = vunpack.c.l.b16 %v534
    %v1254 = vunpack.c.h.b16 %v534
    %v1255 = vunpack.c.l.b16 %v535
    %v1256 = vunpack.c.h.b16 %v535
    %v1257 = vunpack.c.l.b16 %v536
    %v1258 = vunpack.c.h.b16 %v536
    %v1259 = vunpack.c.l.b16 %v537
    %v1260 = vunpack.c.h.b16 %v537
    %v1261 = vunpack.c.l.b16 %v538
    %v1262 = vunpack.c.h.b16 %v538
    %v1263 = vunpack.c.l.b16 %v539
    %v1264 = vunpack.c.h.b16 %v539
    %v1265 = vunpack.c.l.b16 %v540
    %v1266 = vunpack.c.h.b16 %v540
    %v1267 = vunpack.c.l.b16 %v541
    %v1268 = vunpack.c.h.b16 %v541
    %v1269 = vunpack.c.l.b16 %v542
    %v1270 = vunpack.c.h.b16 %v542
    %v1271 = vunpack.c.l.b16 %v543
    %v1272 = vunpack.c.h.b16 %v543
    %v1273 = vunpack.c.l.b16 %v544
    %v1274 = vunpack.c.h.b16 %v544
    %v1275 = vunpack.c.l.b16 %v545
    %v1276 = vunpack.c.h.b16 %v545
    %v1277 = vunpack.c.l.b16 %v546
    %v1278 = vunpack.c.h.b16 %v546
    %v1279 = vunpack.c.l.b16 %v547
    %v1280 = vunpack.c.h.b16 %v547
    %v1281 = vunpack.c.l.b16 %v548
    %v1282 = vunpack.c.h.b16 %v548
    %v1283 = vunpack.c.l.b16 %v549
    %v1284 = vunpack.c.h.b16 %v549
    %v1285 = vunpack.c.l.b16 %v550
    %v1286 = vunpack.c.h.b16 %v550
    %v1287 = vunpack.c.l.b16 %v551
    %v1288 = vunpack.c.h.b16 %v551
    %v1289 = vunpack.c.l.b16 %v552
    %v1290 = vunpack.c.h.b16 %v552
    %v1291 = vunpack.c.l.b16 %v553
    %v1292 = vunpack.c.h.b16 %v553
    %v1293 = vunpack.c.l.b16 %v554
    %v1294 = vunpack.c.h.b16 %v554
    %v1295 = vunpack.c.l.b16 %v555
    %v1296 = vunpack.c.h.b16 %v555
    %v1297 = vunpack.c.l.b16 %v556
    %v1298 = vunpack.c.h.b16 %v556
    %v1299 = vunpack.c.l.b16 %v557
    %v1300 = vunpack.c.h.b16 %v557
    %v1301 = vunpack.c.l.b16 %v558
    %v1302 = vunpack.c.h.b16 %v558
    %v1303 = vunpack.c.l.b16 %v559
    %v1304 = vunpack.c.h.b16 %v559
    %v1305 = vunpack.c.l.b16 %v560
    %v1306 = vunpack.c.h.b16 %v560
    %v1307 = vunpack.c.l.b16 %v561
    %v1308 = vunpack.c.h.b16 %v561
    %v1309 = vunpack.c.l.b16 %v562
    %v1310 = vunpack.c.h.b16 %v562
    %v1311 = vunpack.c.l.b16 %v563
    %v1312 = vunpack.c.h.b16 %v563
    %v1313 = vunpack.c.l.b16 %v564
    %v1314 = vunpack.c.h.b16 %v564
    %v1315 = vunpack.c.l.b16 %v565
    %v1316 = vunpack.c.h.b16 %v565
    %v1317 = vunpack.c.l.b16 %v566
    %v1318 = vunpack.c.h.b16 %v566
    %v1319 = vunpack.c.l.b16 %v567
    %v1320 = vunpack.c.h.b16 %v567
    %v1321 = vunpack.c.l.b16 %v568
    %v1322 = vunpack.c.h.b16 %v568
    %v1323 = vunpack.c.l.b16 %v569
    %v1324 = vunpack.c.h.b16 %v569
    %v1325 = vunpack.c.l.b16 %v570
    %v1326 = vunpack.c.h.b16 %v570
    %v1327 = vunpack.c.l.b16 %v571
    %v1328 = vunpack.c.h.b16 %v571
    %v1329 = vunpack.c.l.b16 %v572
    %v1330 = vunpack.c.h.b16 %v572
    %v1331 = vunpack.c.l.b16 %v573
    %v1332 = vunpack.c.h.b16 %v573
    %v1333 = vunpack.c.l.b16 %v574
    %v1334 = vunpack.c.h.b16 %v574
    %v1335 = vunpack.c.l.b16 %v575
    %v1336 = vunpack.c.h.b16 %v575
    %v1337 = vunpack.c.l.b16 %v576
    %v1338 = vunpack.c.h.b16 %v576
    %v1339 = vunpack.c.l.b16 %v577
    %v1340 = vunpack.c.h.b16 %v577
    %v1341 = vunpack.c.l.b16 %v578
    %v1342 = vunpack.c.h.b16 %v578
    %v1343 = vunpack.c.l.b16 %v579
    %v1344 = vunpack.c.h.b16 %v579
    %v1345 = vunpack.c.l.b16 %v580
    %v1346 = vunpack.c.h.b16 %v580
    %v1347 = vunpack.c.l.b16 %v581
    %v1348 = vunpack.c.h.b16 %v581
    %v1349 = vunpack.c.l.b16 %v582
    %v1350 = vunpack.c.h.b16 %v582
    %v1351 = vunpack.c.l.b16 %v583
    %v1352 = vunpack.c.h.b16 %v583
    %v1353 = vunpack.c.l.b16 %v584
    %v1354 = vunpack.c.h.b16 %v584
    %v1355 = vunpack.c.l.b16 %v585
    %v1356 = vunpack.c.h.b16 %v585
    %v1357 = vunpack.c.l.b16 %v586
    %v1358 = vunpack.c.h.b16 %v586
    %v1359 = vunpack.c.l.b16 %v587
    %v1360 = vunpack.c.h.b16 %v587
    %v1361 = vunpack.c.l.b16 %v588
    %v1362 = vunpack.c.h.b16 %v588
    %v1363 = vunpack.c.l.b16 %v589
    %v1364 = vunpack.c.h.b16 %v589
    %v1365 = vunpack.c.l.b16 %v590
    %v1366 = vunpack.c.h.b16 %v590
    %v1367 = vunpack.c.l.b16 %v591
    %v1368 = vunpack.c.h.b16 %v591
    %v1369 = vunpack.c.l.b16 %v592
    %v1370 = vunpack.c.h.b16 %v592
    %v1371 = vpack.c.b16 %v863, %v859
    %v1372 = vpack.c.b16 %v864, %v860
    %v1373 = vpack.c.b16 %v865, %v861
    %v1374 = vpack.c.b16 %v866, %v862
    %v1375 = vpack.c.b16 %v871, %v867
    %v1376 = vpack.c.b16 %v872, %v868
    %v1377 = vpack.c.b16 %v873, %v869
    %v1378 = vpack.c.b16 %v874, %v870
    %v1379 = vpack.c.b16 %v879, %v875
    %v1380 = vpack.c.b16 %v880, %v876
    %v1381 = vpack.c.b16 %v881, %v877
    %v1382 = vpack.c.b16 %v882, %v878
    %v1383 = vpack.c.b16 %v887, %v883
    %v1384 = vpack.c.b16 %v888, %v884
    %v1385 = vpack.c.b16 %v889, %v885
    %v1386 = vpack.c.b16 %v890, %v886
    %v1387 = vpack.c.b16 %v895, %v891
    %v1388 = vpack.c.b16 %v896, %v892
    %v1389 = vpack.c.b16 %v897, %v893
    %v1390 = vpack.c.b16 %v898, %v894
    %v1391 = vpack.c.b16 %v903, %v899
    %v1392 = vpack.c.b16 %v904, %v900
    %v1393 = vpack.c.b16 %v905, %v901
    %v1394 = vpack.c.b16 %v906, %v902
    %v1395 = vpack.c.b16 %v911, %v907
    %v1396 = vpack.c.b16 %v912, %v908
    %v1397 = vpack.c.b16 %v913, %v909
    %v1398 = vpack.c.b16 %v914, %v910
    %v1399 = vpack.c.b16 %v919, %v915
    %v1400 = vpack.c.b16 %v920, %v916
    %v1401 = vpack.c.b16 %v921, %v917
    %v1402 = vpack.c.b16 %v922, %v918
    %v1403 = vpack.c.b16 %v927, %v923
    %v1404 = vpack.c.b16 %v928, %v924
    %v1405 = vpack.c.b16 %v929, %v925
    %v1406 = vpack.c.b16 %v930, %v926
    %v1407 = vpack.c.b16 %v935, %v931
    %v1408 = vpack.c.b16 %v936, %v932
    %v1409 = vpack.c.b16 %v937, %v933
    %v1410 = vpack.c.b16 %v938, %v934
    %v1411 = vpack.c.b16 %v943, %v939
    %v1412 = vpack.c.b16 %v944, %v940
    %v1413 = vpack.c.b16 %v945, %v941
    %v1414 = vpack.c.b16 %v946, %v942
    %v1415 = vpack.c.b16 %v951, %v947
    %v1416 = vpack.c.b16 %v952, %v948
    %v1417 = vpack.c.b16 %v953, %v949
    %v1418 = vpack.c.b16 %v954, %v950
    %v1419 = vpack.c.b16 %v959, %v955
    %v1420 = vpack.c.b16 %v960, %v956
    %v1421 = vpack.c.b16 %v961, %v957
    %v1422 = vpack.c.b16 %v962, %v958
    %v1423 = vpack.c.b16 %v967, %v963
    %v1424 = vpack.c.b16 %v968, %v964
    %v1425 = vpack.c.b16 %v969, %v965
    %v1426 = vpack.c.b16 %v970, %v966
    %v1427 = vpack.c.b16 %v975, %v971
    %v1428 = vpack.c.b16 %v976, %v972
    %v1429 = vpack.c.b16 %v977, %v973
    %v1430 = vpack.c.b16 %v978, %v974
    %v1431 = vpack.c.b16 %v983, %v979
    %v1432 = vpack.c.b16 %v984, %v980
    %v1433 = vpack.c.b16 %v985, %v981
    %v1434 = vpack.c.b16 %v986, %v982
    %v1435 = vpack.c.b16 %v991, %v987
    %v1436 = vpack.c.b16 %v992, %v988
    %v1437 = vpack.c.b16 %v993, %v989
    %v1438 = vpack.c.b16 %v994, %v990
    %v1439 = vpack.c.b16 %v999, %v995
    %v1440 = vpack.c.b16 %v1000, %v996
    %v1441 = vpack.c.b16 %v1001, %v997
    %v1442 = vpack.c.b16 %v1002, %v998
    %v1443 = vpack.c.b16 %v1007, %v1003
    %v1444 = vpack.c.b16 %v1008, %v1004
    %v1445 = vpack.c.b16 %v1009, %v1005
    %v1446 = vpack.c.b16 %v1010, %v1006
    %v1447 = vpack.c.b16 %v1015, %v1011
    %v1448 = vpack.c.b16 %v1016, %v1012
    %v1449 = vpack.c.b16 %v1017, %v1013
    %v1450 = vpack.c.b16 %v1018, %v1014
    %v1451 = vpack.c.b16 %v1023, %v1019
    %v1452 = vpack.c.b16 %v1024, %v1020
    %v1453 = vpack.c.b16 %v1025, %v1021
    %v1454 = vpack.c.b16 %v1026, %v1022
    %v1455 = vpack.c.b16 %v1031, %v1027
    %v1456 = vpack.c.b16 %v1032, %v1028
    %v1457 = vpack.c.b16 %v1033, %v1029
    %v1458 = vpack.c.b16 %v1034, %v1030
    %v1459 = vpack.c.b16 %v1039, %v1035
    %v1460 = vpack.c.b16 %v1040, %v1036
    %v1461 = vpack.c.b16 %v1041, %v1037
    %v1462 = vpack.c.b16 %v1042, %v1038
    %v1463 = vpack.c.b16 %v1047, %v1043
    %v1464 = vpack.c.b16 %v1048, %v1044
    %v1465 = vpack.c.b16 %v1049, %v1045
    %v1466 = vpack.c.b16 %v1050, %v1046
    %v1467 = vpack.c.b16 %v1055, %v1051
    %v1468 = vpack.c.b16 %v1056, %v1052
    %v1469 = vpack.c.b16 %v1057, %v1053
    %v1470 = vpack.c.b16 %v1058, %v1054
    %v1471 = vpack.c.b16 %v1063, %v1059
    %v1472 = vpack.c.b16 %v1064, %v1060
    %v1473 = vpack.c.b16 %v1065, %v1061
    %v1474 = vpack.c.b16 %v1066, %v1062
    %v1475 = vpack.c.b16 %v1071, %v1067
    %v1476 = vpack.c.b16 %v1072, %v1068
    %v1477 = vpack.c.b16 %v1073, %v1069
    %v1478 = vpack.c.b16 %v1074, %v1070
    %v1479 = vpack.c.b16 %v1079, %v1075
    %v1480 = vpack.c.b16 %v1080, %v1076
    %v1481 = vpack.c.b16 %v1081, %v1077
    %v1482 = vpack.c.b16 %v1082, %v1078
    %v1483 = vpack.c.b16 %v1087, %v1083
    %v1484 = vpack.c.b16 %v1088, %v1084
    %v1485 = vpack.c.b16 %v1089, %v1085
    %v1486 = vpack.c.b16 %v1090, %v1086
    %v1487 = vpack.c.b16 %v1095, %v1091
    %v1488 = vpack.c.b16 %v1096, %v1092
    %v1489 = vpack.c.b16 %v1097, %v1093
    %v1490 = vpack.c.b16 %v1098, %v1094
    %v1491 = vpack.c.b16 %v1103, %v1099
    %v1492 = vpack.c.b16 %v1104, %v1100
    %v1493 = vpack.c.b16 %v1105, %v1101
    %v1494 = vpack.c.b16 %v1106, %v1102
    %v1495 = vpack.c.b16 %v1111, %v1107
    %v1496 = vpack.c.b16 %v1112, %v1108
    %v1497 = vpack.c.b16 %v1113, %v1109
    %v1498 = vpack.c.b16 %v1114, %v1110
    %v1499 = vpack.c.b16 %v1119, %v1115
    %v1500 = vpack.c.b16 %v1120, %v1116
    %v1501 = vpack.c.b16 %v1121, %v1117
    %v1502 = vpack.c.b16 %v1122, %v1118
    %v1503 = vpack.c.b16 %v1127, %v1123
    %v1504 = vpack.c.b16 %v1128, %v1124
    %v1505 = vpack.c.b16 %v1129, %v1125
    %v1506 = vpack.c.b16 %v1130, %v1126
    %v1507 = vpack.c.b16 %v1135, %v1131
    %v1508 = vpack.c.b16 %v1136, %v1132
    %v1509 = vpack.c.b16 %v1137, %v1133
    %v1510 = vpack.c.b16 %v1138, %v1134
    %v1511 = vpack.c.b16 %v1143, %v1139
    %v1512 = vpack.c.b16 %v1144, %v1140
    %v1513 = vpack.c.b16 %v1145, %v1141
    %v1514 = vpack.c.b16 %v1146, %v1142
    %v1515 = vpack.c.b16 %v1151, %v1147
    %v1516 = vpack.c.b16 %v1152, %v1148
    %v1517 = vpack.c.b16 %v1153, %v1149
    %v1518 = vpack.c.b16 %v1154, %v1150
    %v1519 = vpack.c.b16 %v1159, %v1155
    %v1520 = vpack.c.b16 %v1160, %v1156
    %v1521 = vpack.c.b16 %v1161, %v1157
    %v1522 = vpack.c.b16 %v1162, %v1158
    %v1523 = vpack.c.b16 %v1167, %v1163
    %v1524 = vpack.c.b16 %v1168, %v1164
    %v1525 = vpack.c.b16 %v1169, %v1165
    %v1526 = vpack.c.b16 %v1170, %v1166
    %v1527 = vpack.c.b16 %v1175, %v1171
    %v1528 = vpack.c.b16 %v1176, %v1172
    %v1529 = vpack.c.b16 %v1177, %v1173
    %v1530 = vpack.c.b16 %v1178, %v1174
    %v1531 = vpack.c.b16 %v1183, %v1179
    %v1532 = vpack.c.b16 %v1184, %v1180
    %v1533 = vpack.c.b16 %v1185, %v1181
    %v1534 = vpack.c.b16 %v1186, %v1182
    %v1535 = vpack.c.b16 %v1191, %v1187
    %v1536 = vpack.c.b16 %v1192, %v1188
    %v1537 = vpack.c.b16 %v1193, %v1189
    %v1538 = vpack.c.b16 %v1194, %v1190
    %v1539 = vpack.c.b16 %v1199, %v1195
    %v1540 = vpack.c.b16 %v1200, %v1196
    %v1541 = vpack.c.b16 %v1201, %v1197
    %v1542 = vpack.c.b16 %v1202, %v1198
    %v1543 = vpack.c.b16 %v1207, %v1203
    %v1544 = vpack.c.b16 %v1208, %v1204
    %v1545 = vpack.c.b16 %v1209, %v1205
    %v1546 = vpack.c.b16 %v1210, %v1206
    %v1547 = vpack.c.b16 %v1215, %v1211
    %v1548 = vpack.c.b16 %v1216, %v1212
    %v1549 = vpack.c.b16 %v1217, %v1213
    %v1550 = vpack.c.b16 %v1218, %v1214
    %v1551 = vpack.c.b16 %v1223, %v1219
    %v1552 = vpack.c.b16 %v1224, %v1220
    %v1553 = vpack.c.b16 %v1225, %v1221
    %v1554 = vpack.c.b16 %v1226, %v1222
    %v1555 = vpack.c.b16 %v1231, %v1227
    %v1556 = vpack.c.b16 %v1232, %v1228
    %v1557 = vpack.c.b16 %v1233, %v1229
    %v1558 = vpack.c.b16 %v1234, %v1230
    %v1559 = vpack.c.b16 %v1239, %v1235
    %v1560 = vpack.c.b16 %v1240, %v1236
    %v1561 = vpack.c.b16 %v1241, %v1237
    %v1562 = vpack.c.b16 %v1242, %v1238
    %v1563 = vpack.c.b16 %v1247, %v1243
    %v1564 = vpack.c.b16 %v1248, %v1244
    %v1565 = vpack.c.b16 %v1249, %v1245
    %v1566 = vpack.c.b16 %v1250, %v1246
    %v1567 = vpack.c.b16 %v1255, %v1251
    %v1568 = vpack.c.b16 %v1256, %v1252
    %v1569 = vpack.c.b16 %v1257, %v1253
    %v1570 = vpack.c.b16 %v1258, %v1254
    %v1571 = vpack.c.b16 %v1263, %v1259
    %v1572 = vpack.c.b16 %v1264, %v1260
    %v1573 = vpack.c.b16 %v1265, %v1261
    %v1574 = vpack.c.b16 %v1266, %v1262
    %v1575 = vpack.c.b16 %v1271, %v1267
    %v1576 = vpack.c.b16 %v1272, %v1268
    %v1577 = vpack.c.b16 %v1273, %v1269
    %v1578 = vpack.c.b16 %v1274, %v1270
    %v1579 = vpack.c.b16 %v1279, %v1275
    %v1580 = vpack.c.b16 %v1280, %v1276
    %v1581 = vpack.c.b16 %v1281, %v1277
    %v1582 = vpack.c.b16 %v1282, %v1278
    %v1583 = vpack.c.b16 %v1287, %v1283
    %v1584 = vpack.c.b16 %v1288, %v1284
    %v1585 = vpack.c.b16 %v1289, %v1285
    %v1586 = vpack.c.b16 %v1290, %v1286
    %v1587 = vpack.c.b16 %v1295, %v1291
    %v1588 = vpack.c.b16 %v1296, %v1292
    %v1589 = vpack.c.b16 %v1297, %v1293
    %v1590 = vpack.c.b16 %v1298, %v1294
    %v1591 = vpack.c.b16 %v1303, %v1299
    %v1592 = vpack.c.b16 %v1304, %v1300
    %v1593 = vpack.c.b16 %v1305, %v1301
    %v1594 = vpack.c.b16 %v1306, %v1302
    %v1595 = vpack.c.b16 %v1311, %v1307
    %v1596 = vpack.c.b16 %v1312, %v1308
    %v1597 = vpack.c.b16 %v1313, %v1309
    %v1598 = vpack.c.b16 %v1314, %v1310
    %v1599 = vpack.c.b16 %v1319, %v1315
    %v1600 = vpack.c.b16 %v1320, %v1316
    %v1601 = vpack.c.b16 %v1321, %v1317
    %v1602 = vpack.c.b16 %v1322, %v1318
    %v1603 = vpack.c.b16 %v1327, %v1323
    %v1604 = vpack.c.b16 %v1328, %v1324
    %v1605 = vpack.c.b16 %v1329, %v1325
    %v1606 = vpack.c.b16 %v1330, %v1326
    %v1607 = vpack.c.b16 %v1335, %v1331
    %v1608 = vpack.c.b16 %v1336, %v1332
    %v1609 = vpack.c.b16 %v1337, %v1333
    %v1610 = vpack.c.b16 %v1338, %v1334
    %v1611 = vpack.c.b16 %v1343, %v1339
    %v1612 = vpack.c.b16 %v1344, %v1340
    %v1613 = vpack.c.b16 %v1345, %v1341
    %v1614 = vpack.c.b16 %v1346, %v1342
    %v1615 = vpack.c.b16 %v1351, %v1347
    %v1616 = vpack.c.b16 %v1352, %v1348
    %v1617 = vpack.c.b16 %v1353, %v1349
    %v1618 = vpack.c.b16 %v1354, %v1350
    %v1619 = vpack.c.b16 %v1359, %v1355
    %v1620 = vpack.c.b16 %v1360, %v1356
    %v1621 = vpack.c.b16 %v1361, %v1357
    %v1622 = vpack.c.b16 %v1362, %v1358
    %v1623 = vpack.c.b16 %v1367, %v1363
    %v1624 = vpack.c.b16 %v1368, %v1364
    %v1625 = vpack.c.b16 %v1369, %v1365
    %v1626 = vpack.c.b16 %v1370, %v1366
    %1883 = vmatpush.bf16.msra.mxu0 %v1399
    %1884 = vmatpush.bf16.msra.mxu0 %v1395
    %1885 = vmatpush.bf16.msra.mxu0 %v1391
    %1886 = vmatpush.bf16.msra.mxu0 %v1387
    %1887 = vmatpush.bf16.msra.mxu0 %v1383
    %1888 = vmatpush.bf16.msra.mxu0 %v1379
    %1889 = vmatpush.bf16.msra.mxu0 %v1375
    %1890 = vmatpush.bf16.msra.mxu0 %v1371
    %1891 = vmatmul.bf16.gmra.mxu0 %v321
    %v1892 = vpop.f32.mrf.mxu0
    %v1893 = vadd.f32 %v595, %v1892
    %v1894 = vpop.f32.mrf.mxu0
    %v1895 = vadd.f32 %v595, %v1894
    %1896 = vmatmul.bf16.gmra.mxu0 %v329
    %v1897 = vpop.f32.mrf.mxu0
    %v1898 = vadd.f32 %v595, %v1897
    %v1899 = vpop.f32.mrf.mxu0
    %v1900 = vadd.f32 %v595, %v1899
    %1901 = vdwg.mxu0
    %1902 = vmatpush.bf16.msra.mxu0 %v1431
    %1903 = vmatpush.bf16.msra.mxu0 %v1427
    %1904 = vmatpush.bf16.msra.mxu0 %v1423
    %1905 = vmatpush.bf16.msra.mxu0 %v1419
    %1906 = vmatpush.bf16.msra.mxu0 %v1415
    %1907 = vmatpush.bf16.msra.mxu0 %v1411
    %1908 = vmatpush.bf16.msra.mxu0 %v1407
    %1909 = vmatpush.bf16.msra.mxu0 %v1403
    %1910 = vmatmul.bf16.gmra.mxu0 %v322
    %v1911 = vpop.f32.mrf.mxu0
    %v1912 = vadd.f32 %v1893, %v1911
    %v1913 = vpop.f32.mrf.mxu0
    %v1914 = vadd.f32 %v1895, %v1913
    %1915 = vmatmul.bf16.gmra.mxu0 %v330
    %v1916 = vpop.f32.mrf.mxu0
    %v1917 = vadd.f32 %v1898, %v1916
    %v1918 = vpop.f32.mrf.mxu0
    %v1919 = vadd.f32 %v1900, %v1918
    %1920 = vdwg.mxu0
    %1921 = vmatpush.bf16.msra.mxu0 %v1463
    %1922 = vmatpush.bf16.msra.mxu0 %v1459
    %1923 = vmatpush.bf16.msra.mxu0 %v1455
    %1924 = vmatpush.bf16.msra.mxu0 %v1451
    %1925 = vmatpush.bf16.msra.mxu0 %v1447
    %1926 = vmatpush.bf16.msra.mxu0 %v1443
    %1927 = vmatpush.bf16.msra.mxu0 %v1439
    %1928 = vmatpush.bf16.msra.mxu0 %v1435
    %1929 = vmatmul.bf16.gmra.mxu0 %v323
    %v1930 = vpop.f32.mrf.mxu0
    %v1931 = vadd.f32 %v1912, %v1930
    %v1932 = vpop.f32.mrf.mxu0
    %v1933 = vadd.f32 %v1914, %v1932
    %1934 = vmatmul.bf16.gmra.mxu0 %v331
    %v1935 = vpop.f32.mrf.mxu0
    %v1936 = vadd.f32 %v1917, %v1935
    %v1937 = vpop.f32.mrf.mxu0
    %v1938 = vadd.f32 %v1919, %v1937
    %1939 = vdwg.mxu0
    %1940 = vmatpush.bf16.msra.mxu0 %v1495
    %1941 = vmatpush.bf16.msra.mxu0 %v1491
    %1942 = vmatpush.bf16.msra.mxu0 %v1487
    %1943 = vmatpush.bf16.msra.mxu0 %v1483
    %1944 = vmatpush.bf16.msra.mxu0 %v1479
    %1945 = vmatpush.bf16.msra.mxu0 %v1475
    %1946 = vmatpush.bf16.msra.mxu0 %v1471
    %1947 = vmatpush.bf16.msra.mxu0 %v1467
    %1948 = vmatmul.bf16.gmra.mxu0 %v324
    %v1949 = vpop.f32.mrf.mxu0
    %v1950 = vadd.f32 %v1931, %v1949
    %v1951 = vpop.f32.mrf.mxu0
    %v1952 = vadd.f32 %v1933, %v1951
    %1953 = vmatmul.bf16.gmra.mxu0 %v332
    %v1954 = vpop.f32.mrf.mxu0
    %v1955 = vadd.f32 %v1936, %v1954
    %v1956 = vpop.f32.mrf.mxu0
    %v1957 = vadd.f32 %v1938, %v1956
    %1958 = vdwg.mxu0
    %1959 = vmatpush.bf16.msra.mxu0 %v1527
    %1960 = vmatpush.bf16.msra.mxu0 %v1523
    %1961 = vmatpush.bf16.msra.mxu0 %v1519
    %1962 = vmatpush.bf16.msra.mxu0 %v1515
    %1963 = vmatpush.bf16.msra.mxu0 %v1511
    %1964 = vmatpush.bf16.msra.mxu0 %v1507
    %1965 = vmatpush.bf16.msra.mxu0 %v1503
    %1966 = vmatpush.bf16.msra.mxu0 %v1499
    %1967 = vmatmul.bf16.gmra.mxu0 %v325
    %v1968 = vpop.f32.mrf.mxu0
    %v1969 = vadd.f32 %v1950, %v1968
    %v1970 = vpop.f32.mrf.mxu0
    %v1971 = vadd.f32 %v1952, %v1970
    %1972 = vmatmul.bf16.gmra.mxu0 %v333
    %v1973 = vpop.f32.mrf.mxu0
    %v1974 = vadd.f32 %v1955, %v1973
    %v1975 = vpop.f32.mrf.mxu0
    %v1976 = vadd.f32 %v1957, %v1975
    %1977 = vdwg.mxu0
    %1978 = vmatpush.bf16.msra.mxu0 %v1559
    %1979 = vmatpush.bf16.msra.mxu0 %v1555
    %1980 = vmatpush.bf16.msra.mxu0 %v1551
    %1981 = vmatpush.bf16.msra.mxu0 %v1547
    %1982 = vmatpush.bf16.msra.mxu0 %v1543
    %1983 = vmatpush.bf16.msra.mxu0 %v1539
    %1984 = vmatpush.bf16.msra.mxu0 %v1535
    %1985 = vmatpush.bf16.msra.mxu0 %v1531
    %1986 = vmatmul.bf16.gmra.mxu0 %v326
    %v1987 = vpop.f32.mrf.mxu0
    %v1988 = vadd.f32 %v1969, %v1987
    %v1989 = vpop.f32.mrf.mxu0
    %v1990 = vadd.f32 %v1971, %v1989
    %1991 = vmatmul.bf16.gmra.mxu0 %v334
    %v1992 = vpop.f32.mrf.mxu0
    %v1993 = vadd.f32 %v1974, %v1992
    %v1994 = vpop.f32.mrf.mxu0
    %v1995 = vadd.f32 %v1976, %v1994
    %1996 = vdwg.mxu0
    %1997 = vmatpush.bf16.msra.mxu0 %v1591
    %1998 = vmatpush.bf16.msra.mxu0 %v1587
    %1999 = vmatpush.bf16.msra.mxu0 %v1583
    %2000 = vmatpush.bf16.msra.mxu0 %v1579
    %2001 = vmatpush.bf16.msra.mxu0 %v1575
    %2002 = vmatpush.bf16.msra.mxu0 %v1571
    %2003 = vmatpush.bf16.msra.mxu0 %v1567
    %2004 = vmatpush.bf16.msra.mxu0 %v1563
    %2005 = vmatmul.bf16.gmra.mxu0 %v327
    %v2006 = vpop.f32.mrf.mxu0
    %v2007 = vadd.f32 %v1988, %v2006
    %v2008 = vpop.f32.mrf.mxu0
    %v2009 = vadd.f32 %v1990, %v2008
    %2010 = vmatmul.bf16.gmra.mxu0 %v335
    %v2011 = vpop.f32.mrf.mxu0
    %v2012 = vadd.f32 %v1993, %v2011
    %v2013 = vpop.f32.mrf.mxu0
    %v2014 = vadd.f32 %v1995, %v2013
    %2015 = vdwg.mxu0
    %2016 = vmatpush.bf16.msra.mxu0 %v1623
    %2017 = vmatpush.bf16.msra.mxu0 %v1619
    %2018 = vmatpush.bf16.msra.mxu0 %v1615
    %2019 = vmatpush.bf16.msra.mxu0 %v1611
    %2020 = vmatpush.bf16.msra.mxu0 %v1607
    %2021 = vmatpush.bf16.msra.mxu0 %v1603
    %2022 = vmatpush.bf16.msra.mxu0 %v1599
    %2023 = vmatpush.bf16.msra.mxu0 %v1595
    %2024 = vmatmul.bf16.gmra.mxu0 %v328
    %v2025 = vpop.f32.mrf.mxu0
    %v2026 = vadd.f32 %v2007, %v2025
    %v2027 = vpop.f32.mrf.mxu0
    %v2028 = vadd.f32 %v2009, %v2027
    %2029 = vmatmul.bf16.gmra.mxu0 %v336
    %v2030 = vpop.f32.mrf.mxu0
    %v2031 = vadd.f32 %v2012, %v2030
    %v2032 = vpop.f32.mrf.mxu0
    %v2033 = vadd.f32 %v2014, %v2032
    %2034 = vdwg.mxu0
    %2035 = vmatpush.bf16.msra.mxu0 %v1400
    %2036 = vmatpush.bf16.msra.mxu0 %v1396
    %2037 = vmatpush.bf16.msra.mxu0 %v1392
    %2038 = vmatpush.bf16.msra.mxu0 %v1388
    %2039 = vmatpush.bf16.msra.mxu0 %v1384
    %2040 = vmatpush.bf16.msra.mxu0 %v1380
    %2041 = vmatpush.bf16.msra.mxu0 %v1376
    %2042 = vmatpush.bf16.msra.mxu0 %v1372
    %2043 = vmatmul.bf16.gmra.mxu0 %v321
    %v2044 = vpop.f32.mrf.mxu0
    %v2045 = vadd.f32 %v596, %v2044
    %v2046 = vpop.f32.mrf.mxu0
    %v2047 = vadd.f32 %v596, %v2046
    %2048 = vmatmul.bf16.gmra.mxu0 %v329
    %v2049 = vpop.f32.mrf.mxu0
    %v2050 = vadd.f32 %v596, %v2049
    %v2051 = vpop.f32.mrf.mxu0
    %v2052 = vadd.f32 %v596, %v2051
    %2053 = vdwg.mxu0
    %2054 = vmatpush.bf16.msra.mxu0 %v1432
    %2055 = vmatpush.bf16.msra.mxu0 %v1428
    %2056 = vmatpush.bf16.msra.mxu0 %v1424
    %2057 = vmatpush.bf16.msra.mxu0 %v1420
    %2058 = vmatpush.bf16.msra.mxu0 %v1416
    %2059 = vmatpush.bf16.msra.mxu0 %v1412
    %2060 = vmatpush.bf16.msra.mxu0 %v1408
    %2061 = vmatpush.bf16.msra.mxu0 %v1404
    %2062 = vmatmul.bf16.gmra.mxu0 %v322
    %v2063 = vpop.f32.mrf.mxu0
    %v2064 = vadd.f32 %v2045, %v2063
    %v2065 = vpop.f32.mrf.mxu0
    %v2066 = vadd.f32 %v2047, %v2065
    %2067 = vmatmul.bf16.gmra.mxu0 %v330
    %v2068 = vpop.f32.mrf.mxu0
    %v2069 = vadd.f32 %v2050, %v2068
    %v2070 = vpop.f32.mrf.mxu0
    %v2071 = vadd.f32 %v2052, %v2070
    %2072 = vdwg.mxu0
    %2073 = vmatpush.bf16.msra.mxu0 %v1464
    %2074 = vmatpush.bf16.msra.mxu0 %v1460
    %2075 = vmatpush.bf16.msra.mxu0 %v1456
    %2076 = vmatpush.bf16.msra.mxu0 %v1452
    %2077 = vmatpush.bf16.msra.mxu0 %v1448
    %2078 = vmatpush.bf16.msra.mxu0 %v1444
    %2079 = vmatpush.bf16.msra.mxu0 %v1440
    %2080 = vmatpush.bf16.msra.mxu0 %v1436
    %2081 = vmatmul.bf16.gmra.mxu0 %v323
    %v2082 = vpop.f32.mrf.mxu0
    %v2083 = vadd.f32 %v2064, %v2082
    %v2084 = vpop.f32.mrf.mxu0
    %v2085 = vadd.f32 %v2066, %v2084
    %2086 = vmatmul.bf16.gmra.mxu0 %v331
    %v2087 = vpop.f32.mrf.mxu0
    %v2088 = vadd.f32 %v2069, %v2087
    %v2089 = vpop.f32.mrf.mxu0
    %v2090 = vadd.f32 %v2071, %v2089
    %2091 = vdwg.mxu0
    %2092 = vmatpush.bf16.msra.mxu0 %v1496
    %2093 = vmatpush.bf16.msra.mxu0 %v1492
    %2094 = vmatpush.bf16.msra.mxu0 %v1488
    %2095 = vmatpush.bf16.msra.mxu0 %v1484
    %2096 = vmatpush.bf16.msra.mxu0 %v1480
    %2097 = vmatpush.bf16.msra.mxu0 %v1476
    %2098 = vmatpush.bf16.msra.mxu0 %v1472
    %2099 = vmatpush.bf16.msra.mxu0 %v1468
    %2100 = vmatmul.bf16.gmra.mxu0 %v324
    %v2101 = vpop.f32.mrf.mxu0
    %v2102 = vadd.f32 %v2083, %v2101
    %v2103 = vpop.f32.mrf.mxu0
    %v2104 = vadd.f32 %v2085, %v2103
    %2105 = vmatmul.bf16.gmra.mxu0 %v332
    %v2106 = vpop.f32.mrf.mxu0
    %v2107 = vadd.f32 %v2088, %v2106
    %v2108 = vpop.f32.mrf.mxu0
    %v2109 = vadd.f32 %v2090, %v2108
    %2110 = vdwg.mxu0
    %2111 = vmatpush.bf16.msra.mxu0 %v1528
    %2112 = vmatpush.bf16.msra.mxu0 %v1524
    %2113 = vmatpush.bf16.msra.mxu0 %v1520
    %2114 = vmatpush.bf16.msra.mxu0 %v1516
    %2115 = vmatpush.bf16.msra.mxu0 %v1512
    %2116 = vmatpush.bf16.msra.mxu0 %v1508
    %2117 = vmatpush.bf16.msra.mxu0 %v1504
    %2118 = vmatpush.bf16.msra.mxu0 %v1500
    %2119 = vmatmul.bf16.gmra.mxu0 %v325
    %v2120 = vpop.f32.mrf.mxu0
    %v2121 = vadd.f32 %v2102, %v2120
    %v2122 = vpop.f32.mrf.mxu0
    %v2123 = vadd.f32 %v2104, %v2122
    %2124 = vmatmul.bf16.gmra.mxu0 %v333
    %v2125 = vpop.f32.mrf.mxu0
    %v2126 = vadd.f32 %v2107, %v2125
    %v2127 = vpop.f32.mrf.mxu0
    %v2128 = vadd.f32 %v2109, %v2127
    %2129 = vdwg.mxu0
    %2130 = vmatpush.bf16.msra.mxu0 %v1560
    %2131 = vmatpush.bf16.msra.mxu0 %v1556
    %2132 = vmatpush.bf16.msra.mxu0 %v1552
    %2133 = vmatpush.bf16.msra.mxu0 %v1548
    %2134 = vmatpush.bf16.msra.mxu0 %v1544
    %2135 = vmatpush.bf16.msra.mxu0 %v1540
    %2136 = vmatpush.bf16.msra.mxu0 %v1536
    %2137 = vmatpush.bf16.msra.mxu0 %v1532
    %2138 = vmatmul.bf16.gmra.mxu0 %v326
    %v2139 = vpop.f32.mrf.mxu0
    %v2140 = vadd.f32 %v2121, %v2139
    %v2141 = vpop.f32.mrf.mxu0
    %v2142 = vadd.f32 %v2123, %v2141
    %2143 = vmatmul.bf16.gmra.mxu0 %v334
    %v2144 = vpop.f32.mrf.mxu0
    %v2145 = vadd.f32 %v2126, %v2144
    %v2146 = vpop.f32.mrf.mxu0
    %v2147 = vadd.f32 %v2128, %v2146
    %2148 = vdwg.mxu0
    %2149 = vmatpush.bf16.msra.mxu0 %v1592
    %2150 = vmatpush.bf16.msra.mxu0 %v1588
    %2151 = vmatpush.bf16.msra.mxu0 %v1584
    %2152 = vmatpush.bf16.msra.mxu0 %v1580
    %2153 = vmatpush.bf16.msra.mxu0 %v1576
    %2154 = vmatpush.bf16.msra.mxu0 %v1572
    %2155 = vmatpush.bf16.msra.mxu0 %v1568
    %2156 = vmatpush.bf16.msra.mxu0 %v1564
    %2157 = vmatmul.bf16.gmra.mxu0 %v327
    %v2158 = vpop.f32.mrf.mxu0
    %v2159 = vadd.f32 %v2140, %v2158
    %v2160 = vpop.f32.mrf.mxu0
    %v2161 = vadd.f32 %v2142, %v2160
    %2162 = vmatmul.bf16.gmra.mxu0 %v335
    %v2163 = vpop.f32.mrf.mxu0
    %v2164 = vadd.f32 %v2145, %v2163
    %v2165 = vpop.f32.mrf.mxu0
    %v2166 = vadd.f32 %v2147, %v2165
    %2167 = vdwg.mxu0
    %2168 = vmatpush.bf16.msra.mxu0 %v1624
    %2169 = vmatpush.bf16.msra.mxu0 %v1620
    %2170 = vmatpush.bf16.msra.mxu0 %v1616
    %2171 = vmatpush.bf16.msra.mxu0 %v1612
    %2172 = vmatpush.bf16.msra.mxu0 %v1608
    %2173 = vmatpush.bf16.msra.mxu0 %v1604
    %2174 = vmatpush.bf16.msra.mxu0 %v1600
    %2175 = vmatpush.bf16.msra.mxu0 %v1596
    %2176 = vmatmul.bf16.gmra.mxu0 %v328
    %v2177 = vpop.f32.mrf.mxu0
    %v2178 = vadd.f32 %v2159, %v2177
    %v2179 = vpop.f32.mrf.mxu0
    %v2180 = vadd.f32 %v2161, %v2179
    %2181 = vmatmul.bf16.gmra.mxu0 %v336
    %v2182 = vpop.f32.mrf.mxu0
    %v2183 = vadd.f32 %v2164, %v2182
    %v2184 = vpop.f32.mrf.mxu0
    %v2185 = vadd.f32 %v2166, %v2184
    %2186 = vdwg.mxu0
    %2187 = vmatpush.bf16.msra.mxu0 %v1401
    %2188 = vmatpush.bf16.msra.mxu0 %v1397
    %2189 = vmatpush.bf16.msra.mxu0 %v1393
    %2190 = vmatpush.bf16.msra.mxu0 %v1389
    %2191 = vmatpush.bf16.msra.mxu0 %v1385
    %2192 = vmatpush.bf16.msra.mxu0 %v1381
    %2193 = vmatpush.bf16.msra.mxu0 %v1377
    %2194 = vmatpush.bf16.msra.mxu0 %v1373
    %2195 = vmatmul.bf16.gmra.mxu0 %v321
    %v2196 = vpop.f32.mrf.mxu0
    %v2197 = vadd.f32 %v597, %v2196
    %v2198 = vpop.f32.mrf.mxu0
    %v2199 = vadd.f32 %v597, %v2198
    %2200 = vmatmul.bf16.gmra.mxu0 %v329
    %v2201 = vpop.f32.mrf.mxu0
    %v2202 = vadd.f32 %v597, %v2201
    %v2203 = vpop.f32.mrf.mxu0
    %v2204 = vadd.f32 %v597, %v2203
    %2205 = vdwg.mxu0
    %2206 = vmatpush.bf16.msra.mxu0 %v1433
    %2207 = vmatpush.bf16.msra.mxu0 %v1429
    %2208 = vmatpush.bf16.msra.mxu0 %v1425
    %2209 = vmatpush.bf16.msra.mxu0 %v1421
    %2210 = vmatpush.bf16.msra.mxu0 %v1417
    %2211 = vmatpush.bf16.msra.mxu0 %v1413
    %2212 = vmatpush.bf16.msra.mxu0 %v1409
    %2213 = vmatpush.bf16.msra.mxu0 %v1405
    %2214 = vmatmul.bf16.gmra.mxu0 %v322
    %v2215 = vpop.f32.mrf.mxu0
    %v2216 = vadd.f32 %v2197, %v2215
    %v2217 = vpop.f32.mrf.mxu0
    %v2218 = vadd.f32 %v2199, %v2217
    %2219 = vmatmul.bf16.gmra.mxu0 %v330
    %v2220 = vpop.f32.mrf.mxu0
    %v2221 = vadd.f32 %v2202, %v2220
    %v2222 = vpop.f32.mrf.mxu0
    %v2223 = vadd.f32 %v2204, %v2222
    %2224 = vdwg.mxu0
    %2225 = vmatpush.bf16.msra.mxu0 %v1465
    %2226 = vmatpush.bf16.msra.mxu0 %v1461
    %2227 = vmatpush.bf16.msra.mxu0 %v1457
    %2228 = vmatpush.bf16.msra.mxu0 %v1453
    %2229 = vmatpush.bf16.msra.mxu0 %v1449
    %2230 = vmatpush.bf16.msra.mxu0 %v1445
    %2231 = vmatpush.bf16.msra.mxu0 %v1441
    %2232 = vmatpush.bf16.msra.mxu0 %v1437
    %2233 = vmatmul.bf16.gmra.mxu0 %v323
    %v2234 = vpop.f32.mrf.mxu0
    %v2235 = vadd.f32 %v2216, %v2234
    %v2236 = vpop.f32.mrf.mxu0
    %v2237 = vadd.f32 %v2218, %v2236
    %2238 = vmatmul.bf16.gmra.mxu0 %v331
    %v2239 = vpop.f32.mrf.mxu0
    %v2240 = vadd.f32 %v2221, %v2239
    %v2241 = vpop.f32.mrf.mxu0
    %v2242 = vadd.f32 %v2223, %v2241
    %2243 = vdwg.mxu0
    %2244 = vmatpush.bf16.msra.mxu0 %v1497
    %2245 = vmatpush.bf16.msra.mxu0 %v1493
    %2246 = vmatpush.bf16.msra.mxu0 %v1489
    %2247 = vmatpush.bf16.msra.mxu0 %v1485
    %2248 = vmatpush.bf16.msra.mxu0 %v1481
    %2249 = vmatpush.bf16.msra.mxu0 %v1477
    %2250 = vmatpush.bf16.msra.mxu0 %v1473
    %2251 = vmatpush.bf16.msra.mxu0 %v1469
    %2252 = vmatmul.bf16.gmra.mxu0 %v324
    %v2253 = vpop.f32.mrf.mxu0
    %v2254 = vadd.f32 %v2235, %v2253
    %v2255 = vpop.f32.mrf.mxu0
    %v2256 = vadd.f32 %v2237, %v2255
    %2257 = vmatmul.bf16.gmra.mxu0 %v332
    %v2258 = vpop.f32.mrf.mxu0
    %v2259 = vadd.f32 %v2240, %v2258
    %v2260 = vpop.f32.mrf.mxu0
    %v2261 = vadd.f32 %v2242, %v2260
    %2262 = vdwg.mxu0
    %2263 = vmatpush.bf16.msra.mxu0 %v1529
    %2264 = vmatpush.bf16.msra.mxu0 %v1525
    %2265 = vmatpush.bf16.msra.mxu0 %v1521
    %2266 = vmatpush.bf16.msra.mxu0 %v1517
    %2267 = vmatpush.bf16.msra.mxu0 %v1513
    %2268 = vmatpush.bf16.msra.mxu0 %v1509
    %2269 = vmatpush.bf16.msra.mxu0 %v1505
    %2270 = vmatpush.bf16.msra.mxu0 %v1501
    %2271 = vmatmul.bf16.gmra.mxu0 %v325
    %v2272 = vpop.f32.mrf.mxu0
    %v2273 = vadd.f32 %v2254, %v2272
    %v2274 = vpop.f32.mrf.mxu0
    %v2275 = vadd.f32 %v2256, %v2274
    %2276 = vmatmul.bf16.gmra.mxu0 %v333
    %v2277 = vpop.f32.mrf.mxu0
    %v2278 = vadd.f32 %v2259, %v2277
    %v2279 = vpop.f32.mrf.mxu0
    %v2280 = vadd.f32 %v2261, %v2279
    %2281 = vdwg.mxu0
    %2282 = vmatpush.bf16.msra.mxu0 %v1561
    %2283 = vmatpush.bf16.msra.mxu0 %v1557
    %2284 = vmatpush.bf16.msra.mxu0 %v1553
    %2285 = vmatpush.bf16.msra.mxu0 %v1549
    %2286 = vmatpush.bf16.msra.mxu0 %v1545
    %2287 = vmatpush.bf16.msra.mxu0 %v1541
    %2288 = vmatpush.bf16.msra.mxu0 %v1537
    %2289 = vmatpush.bf16.msra.mxu0 %v1533
    %2290 = vmatmul.bf16.gmra.mxu0 %v326
    %v2291 = vpop.f32.mrf.mxu0
    %v2292 = vadd.f32 %v2273, %v2291
    %v2293 = vpop.f32.mrf.mxu0
    %v2294 = vadd.f32 %v2275, %v2293
    %2295 = vmatmul.bf16.gmra.mxu0 %v334
    %v2296 = vpop.f32.mrf.mxu0
    %v2297 = vadd.f32 %v2278, %v2296
    %v2298 = vpop.f32.mrf.mxu0
    %v2299 = vadd.f32 %v2280, %v2298
    %2300 = vdwg.mxu0
    %2301 = vmatpush.bf16.msra.mxu0 %v1593
    %2302 = vmatpush.bf16.msra.mxu0 %v1589
    %2303 = vmatpush.bf16.msra.mxu0 %v1585
    %2304 = vmatpush.bf16.msra.mxu0 %v1581
    %2305 = vmatpush.bf16.msra.mxu0 %v1577
    %2306 = vmatpush.bf16.msra.mxu0 %v1573
    %2307 = vmatpush.bf16.msra.mxu0 %v1569
    %2308 = vmatpush.bf16.msra.mxu0 %v1565
    %2309 = vmatmul.bf16.gmra.mxu0 %v327
    %v2310 = vpop.f32.mrf.mxu0
    %v2311 = vadd.f32 %v2292, %v2310
    %v2312 = vpop.f32.mrf.mxu0
    %v2313 = vadd.f32 %v2294, %v2312
    %2314 = vmatmul.bf16.gmra.mxu0 %v335
    %v2315 = vpop.f32.mrf.mxu0
    %v2316 = vadd.f32 %v2297, %v2315
    %v2317 = vpop.f32.mrf.mxu0
    %v2318 = vadd.f32 %v2299, %v2317
    %2319 = vdwg.mxu0
    %2320 = vmatpush.bf16.msra.mxu0 %v1625
    %2321 = vmatpush.bf16.msra.mxu0 %v1621
    %2322 = vmatpush.bf16.msra.mxu0 %v1617
    %2323 = vmatpush.bf16.msra.mxu0 %v1613
    %2324 = vmatpush.bf16.msra.mxu0 %v1609
    %2325 = vmatpush.bf16.msra.mxu0 %v1605
    %2326 = vmatpush.bf16.msra.mxu0 %v1601
    %2327 = vmatpush.bf16.msra.mxu0 %v1597
    %2328 = vmatmul.bf16.gmra.mxu0 %v328
    %v2329 = vpop.f32.mrf.mxu0
    %v2330 = vadd.f32 %v2311, %v2329
    %v2331 = vpop.f32.mrf.mxu0
    %v2332 = vadd.f32 %v2313, %v2331
    %2333 = vmatmul.bf16.gmra.mxu0 %v336
    %v2334 = vpop.f32.mrf.mxu0
    %v2335 = vadd.f32 %v2316, %v2334
    %v2336 = vpop.f32.mrf.mxu0
    %v2337 = vadd.f32 %v2318, %v2336
    %2338 = vdwg.mxu0
    %2339 = vmatpush.bf16.msra.mxu0 %v1402
    %2340 = vmatpush.bf16.msra.mxu0 %v1398
    %2341 = vmatpush.bf16.msra.mxu0 %v1394
    %2342 = vmatpush.bf16.msra.mxu0 %v1390
    %2343 = vmatpush.bf16.msra.mxu0 %v1386
    %2344 = vmatpush.bf16.msra.mxu0 %v1382
    %2345 = vmatpush.bf16.msra.mxu0 %v1378
    %2346 = vmatpush.bf16.msra.mxu0 %v1374
    %2347 = vmatmul.bf16.gmra.mxu0 %v321
    %v2348 = vpop.f32.mrf.mxu0
    %v2349 = vadd.f32 %v598, %v2348
    %v2350 = vpop.f32.mrf.mxu0
    %v2351 = vadd.f32 %v598, %v2350
    %2352 = vmatmul.bf16.gmra.mxu0 %v329
    %v2353 = vpop.f32.mrf.mxu0
    %v2354 = vadd.f32 %v598, %v2353
    %v2355 = vpop.f32.mrf.mxu0
    %v2356 = vadd.f32 %v598, %v2355
    %2357 = vdwg.mxu0
    %2358 = vmatpush.bf16.msra.mxu0 %v1434
    %2359 = vmatpush.bf16.msra.mxu0 %v1430
    %2360 = vmatpush.bf16.msra.mxu0 %v1426
    %2361 = vmatpush.bf16.msra.mxu0 %v1422
    %2362 = vmatpush.bf16.msra.mxu0 %v1418
    %2363 = vmatpush.bf16.msra.mxu0 %v1414
    %2364 = vmatpush.bf16.msra.mxu0 %v1410
    %2365 = vmatpush.bf16.msra.mxu0 %v1406
    %2366 = vmatmul.bf16.gmra.mxu0 %v322
    %v2367 = vpop.f32.mrf.mxu0
    %v2368 = vadd.f32 %v2349, %v2367
    %v2369 = vpop.f32.mrf.mxu0
    %v2370 = vadd.f32 %v2351, %v2369
    %2371 = vmatmul.bf16.gmra.mxu0 %v330
    %v2372 = vpop.f32.mrf.mxu0
    %v2373 = vadd.f32 %v2354, %v2372
    %v2374 = vpop.f32.mrf.mxu0
    %v2375 = vadd.f32 %v2356, %v2374
    %2376 = vdwg.mxu0
    %2377 = vmatpush.bf16.msra.mxu0 %v1466
    %2378 = vmatpush.bf16.msra.mxu0 %v1462
    %2379 = vmatpush.bf16.msra.mxu0 %v1458
    %2380 = vmatpush.bf16.msra.mxu0 %v1454
    %2381 = vmatpush.bf16.msra.mxu0 %v1450
    %2382 = vmatpush.bf16.msra.mxu0 %v1446
    %2383 = vmatpush.bf16.msra.mxu0 %v1442
    %2384 = vmatpush.bf16.msra.mxu0 %v1438
    %2385 = vmatmul.bf16.gmra.mxu0 %v323
    %v2386 = vpop.f32.mrf.mxu0
    %v2387 = vadd.f32 %v2368, %v2386
    %v2388 = vpop.f32.mrf.mxu0
    %v2389 = vadd.f32 %v2370, %v2388
    %2390 = vmatmul.bf16.gmra.mxu0 %v331
    %v2391 = vpop.f32.mrf.mxu0
    %v2392 = vadd.f32 %v2373, %v2391
    %v2393 = vpop.f32.mrf.mxu0
    %v2394 = vadd.f32 %v2375, %v2393
    %2395 = vdwg.mxu0
    %2396 = vmatpush.bf16.msra.mxu0 %v1498
    %2397 = vmatpush.bf16.msra.mxu0 %v1494
    %2398 = vmatpush.bf16.msra.mxu0 %v1490
    %2399 = vmatpush.bf16.msra.mxu0 %v1486
    %2400 = vmatpush.bf16.msra.mxu0 %v1482
    %2401 = vmatpush.bf16.msra.mxu0 %v1478
    %2402 = vmatpush.bf16.msra.mxu0 %v1474
    %2403 = vmatpush.bf16.msra.mxu0 %v1470
    %2404 = vmatmul.bf16.gmra.mxu0 %v324
    %v2405 = vpop.f32.mrf.mxu0
    %v2406 = vadd.f32 %v2387, %v2405
    %v2407 = vpop.f32.mrf.mxu0
    %v2408 = vadd.f32 %v2389, %v2407
    %2409 = vmatmul.bf16.gmra.mxu0 %v332
    %v2410 = vpop.f32.mrf.mxu0
    %v2411 = vadd.f32 %v2392, %v2410
    %v2412 = vpop.f32.mrf.mxu0
    %v2413 = vadd.f32 %v2394, %v2412
    %2414 = vdwg.mxu0
    %2415 = vmatpush.bf16.msra.mxu0 %v1530
    %2416 = vmatpush.bf16.msra.mxu0 %v1526
    %2417 = vmatpush.bf16.msra.mxu0 %v1522
    %2418 = vmatpush.bf16.msra.mxu0 %v1518
    %2419 = vmatpush.bf16.msra.mxu0 %v1514
    %2420 = vmatpush.bf16.msra.mxu0 %v1510
    %2421 = vmatpush.bf16.msra.mxu0 %v1506
    %2422 = vmatpush.bf16.msra.mxu0 %v1502
    %2423 = vmatmul.bf16.gmra.mxu0 %v325
    %v2424 = vpop.f32.mrf.mxu0
    %v2425 = vadd.f32 %v2406, %v2424
    %v2426 = vpop.f32.mrf.mxu0
    %v2427 = vadd.f32 %v2408, %v2426
    %2428 = vmatmul.bf16.gmra.mxu0 %v333
    %v2429 = vpop.f32.mrf.mxu0
    %v2430 = vadd.f32 %v2411, %v2429
    %v2431 = vpop.f32.mrf.mxu0
    %v2432 = vadd.f32 %v2413, %v2431
    %2433 = vdwg.mxu0
    %2434 = vmatpush.bf16.msra.mxu0 %v1562
    %2435 = vmatpush.bf16.msra.mxu0 %v1558
    %2436 = vmatpush.bf16.msra.mxu0 %v1554
    %2437 = vmatpush.bf16.msra.mxu0 %v1550
    %2438 = vmatpush.bf16.msra.mxu0 %v1546
    %2439 = vmatpush.bf16.msra.mxu0 %v1542
    %2440 = vmatpush.bf16.msra.mxu0 %v1538
    %2441 = vmatpush.bf16.msra.mxu0 %v1534
    %2442 = vmatmul.bf16.gmra.mxu0 %v326
    %v2443 = vpop.f32.mrf.mxu0
    %v2444 = vadd.f32 %v2425, %v2443
    %v2445 = vpop.f32.mrf.mxu0
    %v2446 = vadd.f32 %v2427, %v2445
    %2447 = vmatmul.bf16.gmra.mxu0 %v334
    %v2448 = vpop.f32.mrf.mxu0
    %v2449 = vadd.f32 %v2430, %v2448
    %v2450 = vpop.f32.mrf.mxu0
    %v2451 = vadd.f32 %v2432, %v2450
    %2452 = vdwg.mxu0
    %2453 = vmatpush.bf16.msra.mxu0 %v1594
    %2454 = vmatpush.bf16.msra.mxu0 %v1590
    %2455 = vmatpush.bf16.msra.mxu0 %v1586
    %2456 = vmatpush.bf16.msra.mxu0 %v1582
    %2457 = vmatpush.bf16.msra.mxu0 %v1578
    %2458 = vmatpush.bf16.msra.mxu0 %v1574
    %2459 = vmatpush.bf16.msra.mxu0 %v1570
    %2460 = vmatpush.bf16.msra.mxu0 %v1566
    %2461 = vmatmul.bf16.gmra.mxu0 %v327
    %v2462 = vpop.f32.mrf.mxu0
    %v2463 = vadd.f32 %v2444, %v2462
    %v2464 = vpop.f32.mrf.mxu0
    %v2465 = vadd.f32 %v2446, %v2464
    %2466 = vmatmul.bf16.gmra.mxu0 %v335
    %v2467 = vpop.f32.mrf.mxu0
    %v2468 = vadd.f32 %v2449, %v2467
    %v2469 = vpop.f32.mrf.mxu0
    %v2470 = vadd.f32 %v2451, %v2469
    %2471 = vdwg.mxu0
    %2472 = vmatpush.bf16.msra.mxu0 %v1626
    %2473 = vmatpush.bf16.msra.mxu0 %v1622
    %2474 = vmatpush.bf16.msra.mxu0 %v1618
    %2475 = vmatpush.bf16.msra.mxu0 %v1614
    %2476 = vmatpush.bf16.msra.mxu0 %v1610
    %2477 = vmatpush.bf16.msra.mxu0 %v1606
    %2478 = vmatpush.bf16.msra.mxu0 %v1602
    %2479 = vmatpush.bf16.msra.mxu0 %v1598
    %2480 = vmatmul.bf16.gmra.mxu0 %v328
    %v2481 = vpop.f32.mrf.mxu0
    %v2482 = vadd.f32 %v2463, %v2481
    %v2483 = vpop.f32.mrf.mxu0
    %v2484 = vadd.f32 %v2465, %v2483
    %2485 = vmatmul.bf16.gmra.mxu0 %v336
    %v2486 = vpop.f32.mrf.mxu0
    %v2487 = vadd.f32 %v2468, %v2486
    %v2488 = vpop.f32.mrf.mxu0
    %v2489 = vadd.f32 %v2470, %v2488
    %2490 = vdwg.mxu0
    %v2491 = vmax.f32 %v2026, 0.0
    %v2492 = vmax.f32 %v2178, 0.0
    %v2493 = vmax.f32 %v2330, 0.0
    %v2494 = vmax.f32 %v2482, 0.0
    %v2495 = vmax.f32 %v2028, 0.0
    %v2496 = vmax.f32 %v2180, 0.0
    %v2497 = vmax.f32 %v2332, 0.0
    %v2498 = vmax.f32 %v2484, 0.0
    %v2499 = vmax.f32 %v2031, 0.0
    %v2500 = vmax.f32 %v2183, 0.0
    %v2501 = vmax.f32 %v2335, 0.0
    %v2502 = vmax.f32 %v2487, 0.0
    %v2503 = vmax.f32 %v2033, 0.0
    %v2504 = vmax.f32 %v2185, 0.0
    %v2505 = vmax.f32 %v2337, 0.0
    %v2506 = vmax.f32 %v2489, 0.0
    %v2507 = vpack.c.bf16 %v2495, %v2491
    %v2508 = vpack.c.bf16 %v2496, %v2492
    %v2509 = vpack.c.bf16 %v2497, %v2493
    %v2510 = vpack.c.bf16 %v2498, %v2494
    %v2511 = vpack.c.bf16 %v2503, %v2499
    %v2512 = vpack.c.bf16 %v2504, %v2500
    %v2513 = vpack.c.bf16 %v2505, %v2501
    %v2514 = vpack.c.bf16 %v2506, %v2502
    %v2515 = vld [vmem:[#allocation8] sm:$0xf]
    %v2516 = vld [vmem:[#allocation8 + $0x4] sm:$0xf]
    %v2517 = vld [vmem:[#allocation8 + $0x8] sm:$0xf]
    %v2518 = vld [vmem:[#allocation8 + $0xc] sm:$0xf]
    %v2519 = vld [vmem:[#allocation8 + $0x10] sm:$0xf]
    %v2520 = vld [vmem:[#allocation8 + $0x14] sm:$0xf]
    %v2521 = vld [vmem:[#allocation8 + $0x18] sm:$0xf]
    %v2522 = vld [vmem:[#allocation8 + $0x1c] sm:$0xf]
    %v2523 = vld [vmem:[#allocation8 + $0x20] sm:$0xf]
    %v2524 = vld [vmem:[#allocation8 + $0x24] sm:$0xf]
    %v2525 = vld [vmem:[#allocation8 + $0x28] sm:$0xf]
    %v2526 = vld [vmem:[#allocation8 + $0x2c] sm:$0xf]
    %v2527 = vld [vmem:[#allocation8 + $0x30] sm:$0xf]
    %v2528 = vld [vmem:[#allocation8 + $0x34] sm:$0xf]
    %v2529 = vld [vmem:[#allocation8 + $0x38] sm:$0xf]
    %v2530 = vld [vmem:[#allocation8 + $0x3c] sm:$0xf]
    %v2531 = vld [vmem:[#allocation8 + $0x40] sm:$0xf]
    %v2532 = vld [vmem:[#allocation8 + $0x44] sm:$0xf]
    %v2533 = vld [vmem:[#allocation8 + $0x48] sm:$0xf]
    %v2534 = vld [vmem:[#allocation8 + $0x4c] sm:$0xf]
    %v2535 = vld [vmem:[#allocation8 + $0x50] sm:$0xf]
    %v2536 = vld [vmem:[#allocation8 + $0x54] sm:$0xf]
    %v2537 = vld [vmem:[#allocation8 + $0x58] sm:$0xf]
    %v2538 = vld [vmem:[#allocation8 + $0x5c] sm:$0xf]
    %v2539 = vld [vmem:[#allocation8 + $0x60] sm:$0xf]
    %v2540 = vld [vmem:[#allocation8 + $0x64] sm:$0xf]
    %v2541 = vld [vmem:[#allocation8 + $0x68] sm:$0xf]
    %v2542 = vld [vmem:[#allocation8 + $0x6c] sm:$0xf]
    %v2543 = vld [vmem:[#allocation8 + $0x70] sm:$0xf]
    %v2544 = vld [vmem:[#allocation8 + $0x74] sm:$0xf]
    %v2545 = vld [vmem:[#allocation8 + $0x78] sm:$0xf]
    %v2546 = vld [vmem:[#allocation8 + $0x7c] sm:$0xf]
    %v2547 = vld [vmem:[#allocation8 + $0x80] sm:$0xf]
    %v2548 = vld [vmem:[#allocation8 + $0x84] sm:$0xf]
    %v2549 = vld [vmem:[#allocation8 + $0x88] sm:$0xf]
    %v2550 = vld [vmem:[#allocation8 + $0x8c] sm:$0xf]
    %v2551 = vld [vmem:[#allocation8 + $0x90] sm:$0xf]
    %v2552 = vld [vmem:[#allocation8 + $0x94] sm:$0xf]
    %v2553 = vld [vmem:[#allocation8 + $0x98] sm:$0xf]
    %v2554 = vld [vmem:[#allocation8 + $0x9c] sm:$0xf]
    %v2555 = vld [vmem:[#allocation8 + $0xa0] sm:$0xf]
    %v2556 = vld [vmem:[#allocation8 + $0xa4] sm:$0xf]
    %v2557 = vld [vmem:[#allocation8 + $0xa8] sm:$0xf]
    %v2558 = vld [vmem:[#allocation8 + $0xac] sm:$0xf]
    %v2559 = vld [vmem:[#allocation8 + $0xb0] sm:$0xf]
    %v2560 = vld [vmem:[#allocation8 + $0xb4] sm:$0xf]
    %v2561 = vld [vmem:[#allocation8 + $0xb8] sm:$0xf]
    %v2562 = vld [vmem:[#allocation8 + $0xbc] sm:$0xf]
    %v2563 = vld [vmem:[#allocation8 + $0xc0] sm:$0xf]
    %v2564 = vld [vmem:[#allocation8 + $0xc4] sm:$0xf]
    %v2565 = vld [vmem:[#allocation8 + $0xc8] sm:$0xf]
    %v2566 = vld [vmem:[#allocation8 + $0xcc] sm:$0xf]
    %v2567 = vld [vmem:[#allocation8 + $0xd0] sm:$0xf]
    %v2568 = vld [vmem:[#allocation8 + $0xd4] sm:$0xf]
    %v2569 = vld [vmem:[#allocation8 + $0xd8] sm:$0xf]
    %v2570 = vld [vmem:[#allocation8 + $0xdc] sm:$0xf]
    %v2571 = vld [vmem:[#allocation8 + $0xe0] sm:$0xf]
    %v2572 = vld [vmem:[#allocation8 + $0xe4] sm:$0xf]
    %v2573 = vld [vmem:[#allocation8 + $0xe8] sm:$0xf]
    %v2574 = vld [vmem:[#allocation8 + $0xec] sm:$0xf]
    %v2575 = vld [vmem:[#allocation8 + $0xf0] sm:$0xf]
    %v2576 = vld [vmem:[#allocation8 + $0xf4] sm:$0xf]
    %v2577 = vld [vmem:[#allocation8 + $0xf8] sm:$0xf]
    %v2578 = vld [vmem:[#allocation8 + $0xfc] sm:$0xf]
    %v2579 = vld [vmem:[%s4] sm:$0x1]
    %v2581 = vperm.slane %v2579, 0
    %v2647 = vunpack.c.l.b16 %v2515
    %v2648 = vunpack.c.l.b16 %v2516
    %v2649 = vunpack.c.l.b16 %v2517
    %v2650 = vunpack.c.l.b16 %v2518
    %v2651 = vunpack.c.l.b16 %v2519
    %v2652 = vunpack.c.l.b16 %v2520
    %v2653 = vunpack.c.l.b16 %v2521
    %v2654 = vunpack.c.l.b16 %v2522
    %v2655 = vunpack.c.l.b16 %v2523
    %v2656 = vunpack.c.l.b16 %v2524
    %v2657 = vunpack.c.l.b16 %v2525
    %v2658 = vunpack.c.l.b16 %v2526
    %v2659 = vunpack.c.l.b16 %v2527
    %v2660 = vunpack.c.l.b16 %v2528
    %v2661 = vunpack.c.l.b16 %v2529
    %v2662 = vunpack.c.l.b16 %v2530
    %v2663 = vunpack.c.l.b16 %v2531
    %v2664 = vunpack.c.l.b16 %v2532
    %v2665 = vunpack.c.l.b16 %v2533
    %v2666 = vunpack.c.l.b16 %v2534
    %v2667 = vunpack.c.l.b16 %v2535
    %v2668 = vunpack.c.l.b16 %v2536
    %v2669 = vunpack.c.l.b16 %v2537
    %v2670 = vunpack.c.l.b16 %v2538
    %v2671 = vunpack.c.l.b16 %v2539
    %v2672 = vunpack.c.l.b16 %v2540
    %v2673 = vunpack.c.l.b16 %v2541
    %v2674 = vunpack.c.l.b16 %v2542
    %v2675 = vunpack.c.l.b16 %v2543
    %v2676 = vunpack.c.l.b16 %v2544
    %v2677 = vunpack.c.l.b16 %v2545
    %v2678 = vunpack.c.l.b16 %v2546
    %v2679 = vunpack.c.l.b16 %v2547
    %v2680 = vunpack.c.l.b16 %v2548
    %v2681 = vunpack.c.l.b16 %v2549
    %v2682 = vunpack.c.l.b16 %v2550
    %v2683 = vunpack.c.l.b16 %v2551
    %v2684 = vunpack.c.l.b16 %v2552
    %v2685 = vunpack.c.l.b16 %v2553
    %v2686 = vunpack.c.l.b16 %v2554
    %v2687 = vunpack.c.l.b16 %v2555
    %v2688 = vunpack.c.l.b16 %v2556
    %v2689 = vunpack.c.l.b16 %v2557
    %v2690 = vunpack.c.l.b16 %v2558
    %v2691 = vunpack.c.l.b16 %v2559
    %v2692 = vunpack.c.l.b16 %v2560
    %v2693 = vunpack.c.l.b16 %v2561
    %v2694 = vunpack.c.l.b16 %v2562
    %v2695 = vunpack.c.l.b16 %v2563
    %v2696 = vunpack.c.l.b16 %v2564
    %v2697 = vunpack.c.l.b16 %v2565
    %v2698 = vunpack.c.l.b16 %v2566
    %v2699 = vunpack.c.l.b16 %v2567
    %v2700 = vunpack.c.l.b16 %v2568
    %v2701 = vunpack.c.l.b16 %v2569
    %v2702 = vunpack.c.l.b16 %v2570
    %v2703 = vunpack.c.l.b16 %v2571
    %v2704 = vunpack.c.l.b16 %v2572
    %v2705 = vunpack.c.l.b16 %v2573
    %v2706 = vunpack.c.l.b16 %v2574
    %v2707 = vunpack.c.l.b16 %v2575
    %v2708 = vunpack.c.l.b16 %v2576
    %v2709 = vunpack.c.l.b16 %v2577
    %v2710 = vunpack.c.l.b16 %v2578
    %v2711 = vpack.c.b16 %v2648, %v2647
    %v2712 = vpack.c.b16 %v2650, %v2649
    %v2713 = vpack.c.b16 %v2652, %v2651
    %v2714 = vpack.c.b16 %v2654, %v2653
    %v2715 = vpack.c.b16 %v2656, %v2655
    %v2716 = vpack.c.b16 %v2658, %v2657
    %v2717 = vpack.c.b16 %v2660, %v2659
    %v2718 = vpack.c.b16 %v2662, %v2661
    %v2719 = vpack.c.b16 %v2664, %v2663
    %v2720 = vpack.c.b16 %v2666, %v2665
    %v2721 = vpack.c.b16 %v2668, %v2667
    %v2722 = vpack.c.b16 %v2670, %v2669
    %v2723 = vpack.c.b16 %v2672, %v2671
    %v2724 = vpack.c.b16 %v2674, %v2673
    %v2725 = vpack.c.b16 %v2676, %v2675
    %v2726 = vpack.c.b16 %v2678, %v2677
    %v2727 = vpack.c.b16 %v2680, %v2679
    %v2728 = vpack.c.b16 %v2682, %v2681
    %v2729 = vpack.c.b16 %v2684, %v2683
    %v2730 = vpack.c.b16 %v2686, %v2685
    %v2731 = vpack.c.b16 %v2688, %v2687
    %v2732 = vpack.c.b16 %v2690, %v2689
    %v2733 = vpack.c.b16 %v2692, %v2691
    %v2734 = vpack.c.b16 %v2694, %v2693
    %v2735 = vpack.c.b16 %v2696, %v2695
    %v2736 = vpack.c.b16 %v2698, %v2697
    %v2737 = vpack.c.b16 %v2700, %v2699
    %v2738 = vpack.c.b16 %v2702, %v2701
    %v2739 = vpack.c.b16 %v2704, %v2703
    %v2740 = vpack.c.b16 %v2706, %v2705
    %v2741 = vpack.c.b16 %v2708, %v2707
    %v2742 = vpack.c.b16 %v2710, %v2709
    %2775 = vmatpush.bf16.msra.mxu0 %v2718
    %2776 = vmatpush.bf16.msra.mxu0 %v2717
    %2777 = vmatpush.bf16.msra.mxu0 %v2716
    %2778 = vmatpush.bf16.msra.mxu0 %v2715
    %2779 = vmatpush.bf16.msra.mxu0 %v2714
    %2780 = vmatpush.bf16.msra.mxu0 %v2713
    %2781 = vmatpush.bf16.msra.mxu0 %v2712
    %2782 = vmatpush.bf16.msra.mxu0 %v2711
    %2783 = vmatmul.bf16.gmra.mxu0 %v2507
    %v2784 = vpop.f32.mrf.mxu0
    %v2785 = vadd.f32 %v2581, %v2784
    %v2786 = vpop.f32.mrf.mxu0
    %v2787 = vadd.f32 %v2581, %v2786
    %2788 = vmatmul.bf16.gmra.mxu0 %v2511
    %v2789 = vpop.f32.mrf.mxu0
    %v2790 = vadd.f32 %v2581, %v2789
    %v2791 = vpop.f32.mrf.mxu0
    %v2792 = vadd.f32 %v2581, %v2791
    %2793 = vdwg.mxu0
    %2794 = vmatpush.bf16.msra.mxu0 %v2726
    %2795 = vmatpush.bf16.msra.mxu0 %v2725
    %2796 = vmatpush.bf16.msra.mxu0 %v2724
    %2797 = vmatpush.bf16.msra.mxu0 %v2723
    %2798 = vmatpush.bf16.msra.mxu0 %v2722
    %2799 = vmatpush.bf16.msra.mxu0 %v2721
    %2800 = vmatpush.bf16.msra.mxu0 %v2720
    %2801 = vmatpush.bf16.msra.mxu0 %v2719
    %2802 = vmatmul.bf16.gmra.mxu0 %v2508
    %v2803 = vpop.f32.mrf.mxu0
    %v2804 = vadd.f32 %v2785, %v2803
    %v2805 = vpop.f32.mrf.mxu0
    %v2806 = vadd.f32 %v2787, %v2805
    %2807 = vmatmul.bf16.gmra.mxu0 %v2512
    %v2808 = vpop.f32.mrf.mxu0
    %v2809 = vadd.f32 %v2790, %v2808
    %v2810 = vpop.f32.mrf.mxu0
    %v2811 = vadd.f32 %v2792, %v2810
    %2812 = vdwg.mxu0
    %2813 = vmatpush.bf16.msra.mxu0 %v2734
    %2814 = vmatpush.bf16.msra.mxu0 %v2733
    %2815 = vmatpush.bf16.msra.mxu0 %v2732
    %2816 = vmatpush.bf16.msra.mxu0 %v2731
    %2817 = vmatpush.bf16.msra.mxu0 %v2730
    %2818 = vmatpush.bf16.msra.mxu0 %v2729
    %2819 = vmatpush.bf16.msra.mxu0 %v2728
    %2820 = vmatpush.bf16.msra.mxu0 %v2727
    %2821 = vmatmul.bf16.gmra.mxu0 %v2509
    %v2822 = vpop.f32.mrf.mxu0
    %v2823 = vadd.f32 %v2804, %v2822
    %v2824 = vpop.f32.mrf.mxu0
    %v2825 = vadd.f32 %v2806, %v2824
    %2826 = vmatmul.bf16.gmra.mxu0 %v2513
    %v2827 = vpop.f32.mrf.mxu0
    %v2828 = vadd.f32 %v2809, %v2827
    %v2829 = vpop.f32.mrf.mxu0
    %v2830 = vadd.f32 %v2811, %v2829
    %2831 = vdwg.mxu0
    %2832 = vmatpush.bf16.msra.mxu0 %v2742
    %2833 = vmatpush.bf16.msra.mxu0 %v2741
    %2834 = vmatpush.bf16.msra.mxu0 %v2740
    %2835 = vmatpush.bf16.msra.mxu0 %v2739
    %2836 = vmatpush.bf16.msra.mxu0 %v2738
    %2837 = vmatpush.bf16.msra.mxu0 %v2737
    %2838 = vmatpush.bf16.msra.mxu0 %v2736
    %2839 = vmatpush.bf16.msra.mxu0 %v2735
    %2840 = vmatmul.bf16.gmra.mxu0 %v2510
    %v2841 = vpop.f32.mrf.mxu0
    %v2842 = vadd.f32 %v2823, %v2841
    %v2843 = vpop.f32.mrf.mxu0
    %v2844 = vadd.f32 %v2825, %v2843
    %2845 = vmatmul.bf16.gmra.mxu0 %v2514
    %v2846 = vpop.f32.mrf.mxu0
    %v2847 = vadd.f32 %v2828, %v2846
    %v2848 = vpop.f32.mrf.mxu0
    %v2849 = vadd.f32 %v2830, %v2848
    %2850 = vdwg.mxu0
    %2851 = vst [vmem:[#allocation10] sm:$0xff] %v2842
    %2852 = vst [vmem:[#allocation10 + $0x8] sm:$0xff] %v2844
    %2853 = vst [vmem:[#allocation10 + $0x10] sm:$0xff] %v2847
    %2854 = vst [vmem:[#allocation10 + $0x18] sm:$0xff] %v2849
    // Predicated region
    $region38: #{tpu_custom_call.1} parent=1 // pred_check
      _
    $region39: #{tpu_custom_call.1} parent=1 // pred_check_branch
      %2856 = sbr.rel (0) target = $region41
    $region40: #{tpu_custom_call.1} parent=1 // pred_region
      %2858 = vsyncadd [#allocation4], 480
      %s2859 = sshll.u32 [#allocation10], 4
      %s2860 = int_to_ptr.vmem [resolvable:$true] %s2859
      %s2861 = sshll.u32 %s5, 4
      %s2862 = int_to_ptr.hbm [resolvable:$true] %s2861
      %2867 = dma.vmem_to_hbm [thread:$0]  %s2860, 32, %s2862, [#allocation4], 32, 32, 2
    $region41: #{tpu_custom_call.1} parent=1 // pred_fallthru
      _
    // Predicated region
    $region42: #{tpu_custom_call.1} parent=1 // pred_check
      _
    $region43: #{tpu_custom_call.1} parent=1 // pred_check_branch
      %2869 = sbr.rel (0) target = $region45
    $region44: #{tpu_custom_call.1} parent=1 // pred_region
      %2871 = dma.done [#allocation4], 512
    $region45: #{tpu_custom_call.1} parent=1 // pred_fallthru
      _
    %2872 = vsyncpa [#allocation3], 1
    %2873 = vsyncpa [#allocation6], 1
    %2874 = vsyncpa [#allocation9], 1
    %2875 = vsyncpa [#allocation4], 1

</llo_original>
